<compile_context>
chip_gen: v6e
topology: v6e:2x2x1
jax: 0.10.0
libtpu: 0.0.40
codegen_flags: <defaults>
</compile_context>

<pallas_src>
import jax
import jax.numpy as jnp
from jax.experimental import pallas as pl
from jax.experimental.pallas import tpu as pltpu


def _linear_kernel(x_ref, w_ref, b_ref, o_ref):
    # x_ref: (M, K)     f32  -- cast to bf16 on the VPU here (hidden, ~free)
    # w_ref: (K, N_out) bf16 -- pre-transposed weight
    # b_ref: (1, N_out) f32
    # o_ref: (M, N_out) f32  -- lane-dense (384-wide) unmasked store
    x_bf16 = x_ref[...].astype(jnp.bfloat16)
    acc = jnp.dot(x_bf16, w_ref[...], preferred_element_type=jnp.float32)
    o_ref[...] = (acc + b_ref[...]).astype(o_ref.dtype)


def prepare_linear_params(weight, bias):
    """One-time parameter prep (init time, NOT the per-call hot path).

    weight: (N_out, K) f32 in PyTorch layout.
    Returns (w_t: (K, N_out) bf16, b2d: (1, N_out) f32).
    """
    w_t = jnp.asarray(weight.T, dtype=jnp.bfloat16)
    b2d = jnp.asarray(bias, dtype=jnp.float32).reshape(1, -1)
    return w_t, b2d


@jax.jit
def linear_pallas(x, w_t, b2d):
    """x: [..., K] f32; w_t: (K, N_out) bf16 (pre-transposed); b2d: (1, N_out) f32."""
    orig_shape = x.shape
    K = orig_shape[-1]
    N_out = w_t.shape[1]
    M = 1
    for d in orig_shape[:-1]:
        M *= d

    # No wrapper-side dtype cast: the kernel reads f32 x directly and converts
    # on the VPU, avoiding an extra HBM read/write pass.
    x2d = x.reshape(M, K)

    cost = pl.CostEstimate(
        flops=2 * M * K * N_out,
        transcendentals=0,
        # f32 x in, bf16 w in, f32 bias in, f32 out.
        bytes_accessed=M * K * 4 + K * N_out * 2 + N_out * 4 + M * N_out * 4,
    )

    out2d = pl.pallas_call(
        _linear_kernel,
        out_shape=jax.ShapeDtypeStruct((M, N_out), jnp.float32),
        grid_spec=pltpu.PrefetchScalarGridSpec(
            num_scalar_prefetch=0,
            grid=(1,),  # single full block: no per-step overhead, full-width MXU passes
            in_specs=[
                pl.BlockSpec((M, K), lambda i: (0, 0)),       # x (f32, full)
                pl.BlockSpec((K, N_out), lambda i: (0, 0)),   # weight (bf16, full)
                pl.BlockSpec((1, N_out), lambda i: (0, 0)),   # bias
            ],
            out_specs=pl.BlockSpec((M, N_out), lambda i: (0, 0)),
        ),
        compiler_params=pltpu.CompilerParams(
            dimension_semantics=("arbitrary",),
        ),
        cost_estimate=cost,
    )(x2d, w_t, b2d)

    return out2d.reshape(*orig_shape[:-1], N_out)

# TODO(synk): the real win beyond this is fusing the producer (previous
# activation / layernorm) into this pallas_call so x never round-trips HBM.


if __name__ == "__main__":
    # Module shapes: Linear(1536 -> 384), input [1, 14, 14, 1536]
    IN_FEATURES = 1536
    OUT_FEATURES = 384
    x_shape = (1, 14, 14, IN_FEATURES)

    key = jax.random.PRNGKey(0)
    k_x, k_w, k_b = jax.random.split(key, 3)

    x = jax.random.normal(k_x, x_shape, dtype=jnp.float32)

    # Deterministic init matching PyTorch Linear default: U(-1/sqrt(K), 1/sqrt(K))
    bound = 1.0 / (IN_FEATURES ** 0.5)
    weight = jax.random.uniform(
        k_w, (OUT_FEATURES, IN_FEATURES), dtype=jnp.float32,
        minval=-bound, maxval=bound)
    bias = jax.random.uniform(
        k_b, (OUT_FEATURES,), dtype=jnp.float32, minval=-bound, maxval=bound)

    # One-time parameter prep (transpose + bf16 cast outside the hot path).
    w_t, b2d = prepare_linear_params(weight, bias)

    out = linear_pallas(x, w_t, b2d)
    jax.block_until_ready(out)
    assert out.shape == (1, 14, 14, OUT_FEATURES), out.shape
    assert out.dtype == jnp.float32, out.dtype

    hi = jax.lax.Precision.HIGHEST

    # Tight check against a reference with the same bf16 operand rounding.
    xb = x.astype(jnp.bfloat16).astype(jnp.float32)
    wb = weight.astype(jnp.bfloat16).astype(jnp.float32)
    ref_bf16 = jnp.matmul(xb, wb.T, precision=hi) + bias
    err_b = float(jnp.max(jnp.abs(out - ref_bf16)))
    assert jnp.allclose(out, ref_bf16, atol=2e-3, rtol=2e-3), err_b

    # Loose check against the exact-f32 PyTorch-semantics reference
    # (difference is purely the bf16 rounding of the matmul operands).
    ref = jnp.matmul(x, weight.T, precision=hi) + bias
    err = float(jnp.max(jnp.abs(out - ref)))
    assert jnp.allclose(out, ref, atol=5e-2, rtol=5e-2), err

    print("KERNEL_OK")
</pallas_src>

<mosaic_0001>
module attributes {stable_mosaic.version = 11 : i64} {
  func.func @_linear_kernel(%arg0: i32, %arg1: memref<196x1536xf32, #tpu.memory_space<vmem>>, %arg2: memref<1536x384xbf16, #tpu.memory_space<vmem>>, %arg3: memref<1x384xf32, #tpu.memory_space<vmem>>, %arg4: memref<196x384xf32, #tpu.memory_space<vmem>>) attributes {dimension_semantics = [#tpu.dimension_semantics<arbitrary>], iteration_bounds = array<i64: 1>, scalar_prefetch = 0 : i64, scratch_operands = 0 : i64, tpu.core_type = #tpu.core_type<tc>, window_params = [{pipeline_mode = #tpu.pipeline_mode<synchronous>, transform_indices = @transform_0, window_bounds = array<i64: 196, 1536>}, {pipeline_mode = #tpu.pipeline_mode<synchronous>, transform_indices = @transform_1, window_bounds = array<i64: 1536, 384>}, {pipeline_mode = #tpu.pipeline_mode<synchronous>, transform_indices = @transform_2, window_bounds = array<i64: 1, 384>}, {pipeline_mode = #tpu.pipeline_mode<synchronous>, transform_indices = @transform_3, window_bounds = array<i64: 196, 384>}]} {
    %c0 = arith.constant 0 : index
    %c0_0 = arith.constant 0 : index
    %0 = vector.load %arg1[%c0, %c0_0] : memref<196x1536xf32, #tpu.memory_space<vmem>>, vector<196x1536xf32>
    %1 = arith.truncf %0 : vector<196x1536xf32> to vector<196x1536xbf16>
    %c0_1 = arith.constant 0 : index
    %c0_2 = arith.constant 0 : index
    %2 = vector.load %arg2[%c0_1, %c0_2] : memref<1536x384xbf16, #tpu.memory_space<vmem>>, vector<1536x384xbf16>
    %cst = arith.constant dense<0.000000e+00> : vector<196x384xf32>
    %3 = tpu.matmul %1, %2, %cst {dimension_numbers = #tpu.dot_dimension_numbers<[1], [0], [0], [1], [0, 0, 1, 1], [], []>} : vector<196x1536xbf16>, vector<1536x384xbf16>, vector<196x384xf32> -> vector<196x384xf32>
    %c0_3 = arith.constant 0 : index
    %c0_4 = arith.constant 0 : index
    %4 = vector.load %arg3[%c0_3, %c0_4] : memref<1x384xf32, #tpu.memory_space<vmem>>, vector<1x384xf32>
    %5 = vector.broadcast %4 : vector<1x384xf32> to vector<196x384xf32>
    %6 = arith.addf %3, %5 : vector<196x384xf32>
    %c0_5 = arith.constant 0 : index
    %c0_6 = arith.constant 0 : index
    %7 = vector.load %arg4[%c0_5, %c0_6] : memref<196x384xf32, #tpu.memory_space<vmem>>, vector<196x384xf32>
    tpu.vector_store %arg4[%c0_5, %c0_6], %6 {strides = array<i32>} : memref<196x384xf32, #tpu.memory_space<vmem>>, vector<196x384xf32>,
    return
  }
  func.func @transform_0(%arg0: i32) -> (i32, i32) {
    %c0_i32 = arith.constant 0 : i32
    %c0_i32_0 = arith.constant 0 : i32
    %c0_i32_1 = arith.constant 0 : i32
    return %c0_i32, %c0_i32_0 : i32, i32
  }
  func.func @transform_1(%arg0: i32) -> (i32, i32) {
    %c0_i32 = arith.constant 0 : i32
    %c0_i32_0 = arith.constant 0 : i32
    %c0_i32_1 = arith.constant 0 : i32
    return %c0_i32, %c0_i32_0 : i32, i32
  }
  func.func @transform_2(%arg0: i32) -> (i32, i32) {
    %c0_i32 = arith.constant 0 : i32
    %c0_i32_0 = arith.constant 0 : i32
    %c0_i32_1 = arith.constant 0 : i32
    return %c0_i32, %c0_i32_0 : i32, i32
  }
  func.func @transform_3(%arg0: i32) -> (i32, i32) {
    %c0_i32 = arith.constant 0 : i32
    %c0_i32_0 = arith.constant 0 : i32
    %c0_i32_1 = arith.constant 0 : i32
    return %c0_i32, %c0_i32_0 : i32, i32
  }
}

</mosaic_0001>

<llo_original>
// kernel: linear_pallas.1
$region0: #{linear_pallas.1}
  #allocation0 [shape = 'u32[]', space=smem, size = 0x4, offset = 0x4, fixed_abs, tag = 'smem constant byte address 0x4 - core index']
  #allocation1 [shape = 'u32[144,128]{1,0:T(1,128)}', space=vmem, size = 0x12000, scoped, tag = 'internal scratch']
  %s0 = inlined_call_operand.vmem [shape: f32[196,1536], index: 0, kind: input, shape index: {}]
  %s1 = inlined_call_operand.vmem [shape: bf16[1536,384], index: 1, kind: input, shape index: {}]
  %s2 = inlined_call_operand.vmem [shape: f32[1,384], index: 2, kind: input, shape index: {}]
  %s3 = inlined_call_operand.vmem [shape: f32[196,384], index: 3, kind: output, shape index: {}]
  %s4 = sld [smem:[#allocation0]]
  $region22: #{linear_pallas.1} parent=0
    _
  %s6 = ssub.s32 1, %s4
  %s7 = scalar_select 0, %s6, %s4
  // Predicated region
  $region2: #{linear_pallas.1} parent=0 // pred_check
    _
  $region3: #{linear_pallas.1} parent=0 // pred_check_branch
    %9 = sbr.rel (0) target = $region5
  $region4: #{linear_pallas.1} parent=0 // pred_region
    _
  $region5: #{linear_pallas.1} parent=0 // pred_fallthru
    _
  // Predicated region
  $region6: #{linear_pallas.1} parent=0 // pred_check
    _
  $region7: #{linear_pallas.1} parent=0 // pred_check_branch
    %11 = sbr.rel (0) target = $region9
  $region8: #{linear_pallas.1} parent=0 // pred_region
    _
  $region9: #{linear_pallas.1} parent=0 // pred_fallthru
    _
  // Predicated region
  $region10: #{linear_pallas.1} parent=0 // pred_check
    _
  $region11: #{linear_pallas.1} parent=0 // pred_check_branch
    %13 = sbr.rel (0) target = $region13
  $region12: #{linear_pallas.1} parent=0 // pred_region
    _
  $region13: #{linear_pallas.1} parent=0 // pred_fallthru
    _
  %v15 = vld [vmem:[%s0] sm:$0xff]
  %v16 = vld [vmem:[%s0 + $0x8] sm:$0xff]
  %v17 = vld [vmem:[%s0 + $0x10] sm:$0xff]
  %v18 = vld [vmem:[%s0 + $0x18] sm:$0xff]
  %v19 = vld [vmem:[%s0 + $0x20] sm:$0xff]
  %v20 = vld [vmem:[%s0 + $0x28] sm:$0xff]
  %v21 = vld [vmem:[%s0 + $0x30] sm:$0xff]
  %v22 = vld [vmem:[%s0 + $0x38] sm:$0xff]
  %v23 = vld [vmem:[%s0 + $0x40] sm:$0xff]
  %v24 = vld [vmem:[%s0 + $0x48] sm:$0xff]
  %v25 = vld [vmem:[%s0 + $0x50] sm:$0xff]
  %v26 = vld [vmem:[%s0 + $0x58] sm:$0xff]
  %v27 = vld [vmem:[%s0 + $0x60] sm:$0xff]
  %v28 = vld [vmem:[%s0 + $0x68] sm:$0xff]
  %v29 = vld [vmem:[%s0 + $0x70] sm:$0xff]
  %v30 = vld [vmem:[%s0 + $0x78] sm:$0xff]
  %v31 = vld [vmem:[%s0 + $0x80] sm:$0xff]
  %v32 = vld [vmem:[%s0 + $0x88] sm:$0xff]
  %v33 = vld [vmem:[%s0 + $0x90] sm:$0xff]
  %v34 = vld [vmem:[%s0 + $0x98] sm:$0xff]
  %v35 = vld [vmem:[%s0 + $0xa0] sm:$0xff]
  %v36 = vld [vmem:[%s0 + $0xa8] sm:$0xff]
  %v37 = vld [vmem:[%s0 + $0xb0] sm:$0xff]
  %v38 = vld [vmem:[%s0 + $0xb8] sm:$0xff]
  %v39 = vld [vmem:[%s0 + $0xc0] sm:$0xff]
  %v40 = vld [vmem:[%s0 + $0xc8] sm:$0xff]
  %v41 = vld [vmem:[%s0 + $0xd0] sm:$0xff]
  %v42 = vld [vmem:[%s0 + $0xd8] sm:$0xff]
  %v43 = vld [vmem:[%s0 + $0xe0] sm:$0xff]
  %v44 = vld [vmem:[%s0 + $0xe8] sm:$0xff]
  %v45 = vld [vmem:[%s0 + $0xf0] sm:$0xff]
  %v46 = vld [vmem:[%s0 + $0xf8] sm:$0xff]
  %v47 = vld [vmem:[%s0 + $0x100] sm:$0xff]
  %v48 = vld [vmem:[%s0 + $0x108] sm:$0xff]
  %v49 = vld [vmem:[%s0 + $0x110] sm:$0xff]
  %v50 = vld [vmem:[%s0 + $0x118] sm:$0xff]
  %v51 = vld [vmem:[%s0 + $0x120] sm:$0xff]
  %v52 = vld [vmem:[%s0 + $0x128] sm:$0xff]
  %v53 = vld [vmem:[%s0 + $0x130] sm:$0xff]
  %v54 = vld [vmem:[%s0 + $0x138] sm:$0xff]
  %v55 = vld [vmem:[%s0 + $0x140] sm:$0xff]
  %v56 = vld [vmem:[%s0 + $0x148] sm:$0xff]
  %v57 = vld [vmem:[%s0 + $0x150] sm:$0xff]
  %v58 = vld [vmem:[%s0 + $0x158] sm:$0xff]
  %v59 = vld [vmem:[%s0 + $0x160] sm:$0xff]
  %v60 = vld [vmem:[%s0 + $0x168] sm:$0xff]
  %v61 = vld [vmem:[%s0 + $0x170] sm:$0xff]
  %v62 = vld [vmem:[%s0 + $0x178] sm:$0xff]
  %v63 = vld [vmem:[%s0 + $0x180] sm:$0xff]
  %v64 = vld [vmem:[%s0 + $0x188] sm:$0xff]
  %v65 = vld [vmem:[%s0 + $0x190] sm:$0xff]
  %v66 = vld [vmem:[%s0 + $0x198] sm:$0xff]
  %v67 = vld [vmem:[%s0 + $0x1a0] sm:$0xff]
  %v68 = vld [vmem:[%s0 + $0x1a8] sm:$0xff]
  %v69 = vld [vmem:[%s0 + $0x1b0] sm:$0xff]
  %v70 = vld [vmem:[%s0 + $0x1b8] sm:$0xff]
  %v71 = vld [vmem:[%s0 + $0x1c0] sm:$0xff]
  %v72 = vld [vmem:[%s0 + $0x1c8] sm:$0xff]
  %v73 = vld [vmem:[%s0 + $0x1d0] sm:$0xff]
  %v74 = vld [vmem:[%s0 + $0x1d8] sm:$0xff]
  %v75 = vld [vmem:[%s0 + $0x1e0] sm:$0xff]
  %v76 = vld [vmem:[%s0 + $0x1e8] sm:$0xff]
  %v77 = vld [vmem:[%s0 + $0x1f0] sm:$0xff]
  %v78 = vld [vmem:[%s0 + $0x1f8] sm:$0xff]
  %v79 = vld [vmem:[%s0 + $0x200] sm:$0xff]
  %v80 = vld [vmem:[%s0 + $0x208] sm:$0xff]
  %v81 = vld [vmem:[%s0 + $0x210] sm:$0xff]
  %v82 = vld [vmem:[%s0 + $0x218] sm:$0xff]
  %v83 = vld [vmem:[%s0 + $0x220] sm:$0xff]
  %v84 = vld [vmem:[%s0 + $0x228] sm:$0xff]
  %v85 = vld [vmem:[%s0 + $0x230] sm:$0xff]
  %v86 = vld [vmem:[%s0 + $0x238] sm:$0xff]
  %v87 = vld [vmem:[%s0 + $0x240] sm:$0xff]
  %v88 = vld [vmem:[%s0 + $0x248] sm:$0xff]
  %v89 = vld [vmem:[%s0 + $0x250] sm:$0xff]
  %v90 = vld [vmem:[%s0 + $0x258] sm:$0xff]
  %v91 = vld [vmem:[%s0 + $0x260] sm:$0xff]
  %v92 = vld [vmem:[%s0 + $0x268] sm:$0xff]
  %v93 = vld [vmem:[%s0 + $0x270] sm:$0xff]
  %v94 = vld [vmem:[%s0 + $0x278] sm:$0xff]
  %v95 = vld [vmem:[%s0 + $0x280] sm:$0xff]
  %v96 = vld [vmem:[%s0 + $0x288] sm:$0xff]
  %v97 = vld [vmem:[%s0 + $0x290] sm:$0xff]
  %v98 = vld [vmem:[%s0 + $0x298] sm:$0xff]
  %v99 = vld [vmem:[%s0 + $0x2a0] sm:$0xff]
  %v100 = vld [vmem:[%s0 + $0x2a8] sm:$0xff]
  %v101 = vld [vmem:[%s0 + $0x2b0] sm:$0xff]
  %v102 = vld [vmem:[%s0 + $0x2b8] sm:$0xff]
  %v103 = vld [vmem:[%s0 + $0x2c0] sm:$0xff]
  %v104 = vld [vmem:[%s0 + $0x2c8] sm:$0xff]
  %v105 = vld [vmem:[%s0 + $0x2d0] sm:$0xff]
  %v106 = vld [vmem:[%s0 + $0x2d8] sm:$0xff]
  %v107 = vld [vmem:[%s0 + $0x2e0] sm:$0xff]
  %v108 = vld [vmem:[%s0 + $0x2e8] sm:$0xff]
  %v109 = vld [vmem:[%s0 + $0x2f0] sm:$0xff]
  %v110 = vld [vmem:[%s0 + $0x2f8] sm:$0xff]
  %v111 = vld [vmem:[%s0 + $0x300] sm:$0xff]
  %v112 = vld [vmem:[%s0 + $0x308] sm:$0xff]
  %v113 = vld [vmem:[%s0 + $0x310] sm:$0xff]
  %v114 = vld [vmem:[%s0 + $0x318] sm:$0xff]
  %v115 = vld [vmem:[%s0 + $0x320] sm:$0xff]
  %v116 = vld [vmem:[%s0 + $0x328] sm:$0xff]
  %v117 = vld [vmem:[%s0 + $0x330] sm:$0xff]
  %v118 = vld [vmem:[%s0 + $0x338] sm:$0xff]
  %v119 = vld [vmem:[%s0 + $0x340] sm:$0xff]
  %v120 = vld [vmem:[%s0 + $0x348] sm:$0xff]
  %v121 = vld [vmem:[%s0 + $0x350] sm:$0xff]
  %v122 = vld [vmem:[%s0 + $0x358] sm:$0xff]
  %v123 = vld [vmem:[%s0 + $0x360] sm:$0xff]
  %v124 = vld [vmem:[%s0 + $0x368] sm:$0xff]
  %v125 = vld [vmem:[%s0 + $0x370] sm:$0xff]
  %v126 = vld [vmem:[%s0 + $0x378] sm:$0xff]
  %v127 = vld [vmem:[%s0 + $0x380] sm:$0xff]
  %v128 = vld [vmem:[%s0 + $0x388] sm:$0xff]
  %v129 = vld [vmem:[%s0 + $0x390] sm:$0xff]
  %v130 = vld [vmem:[%s0 + $0x398] sm:$0xff]
  %v131 = vld [vmem:[%s0 + $0x3a0] sm:$0xff]
  %v132 = vld [vmem:[%s0 + $0x3a8] sm:$0xff]
  %v133 = vld [vmem:[%s0 + $0x3b0] sm:$0xff]
  %v134 = vld [vmem:[%s0 + $0x3b8] sm:$0xff]
  %v135 = vld [vmem:[%s0 + $0x3c0] sm:$0xff]
  %v136 = vld [vmem:[%s0 + $0x3c8] sm:$0xff]
  %v137 = vld [vmem:[%s0 + $0x3d0] sm:$0xff]
  %v138 = vld [vmem:[%s0 + $0x3d8] sm:$0xff]
  %v139 = vld [vmem:[%s0 + $0x3e0] sm:$0xff]
  %v140 = vld [vmem:[%s0 + $0x3e8] sm:$0xff]
  %v141 = vld [vmem:[%s0 + $0x3f0] sm:$0xff]
  %v142 = vld [vmem:[%s0 + $0x3f8] sm:$0xff]
  %v143 = vld [vmem:[%s0 + $0x400] sm:$0xff]
  %v144 = vld [vmem:[%s0 + $0x408] sm:$0xff]
  %v145 = vld [vmem:[%s0 + $0x410] sm:$0xff]
  %v146 = vld [vmem:[%s0 + $0x418] sm:$0xff]
  %v147 = vld [vmem:[%s0 + $0x420] sm:$0xff]
  %v148 = vld [vmem:[%s0 + $0x428] sm:$0xff]
  %v149 = vld [vmem:[%s0 + $0x430] sm:$0xff]
  %v150 = vld [vmem:[%s0 + $0x438] sm:$0xff]
  %v151 = vld [vmem:[%s0 + $0x440] sm:$0xff]
  %v152 = vld [vmem:[%s0 + $0x448] sm:$0xff]
  %v153 = vld [vmem:[%s0 + $0x450] sm:$0xff]
  %v154 = vld [vmem:[%s0 + $0x458] sm:$0xff]
  %v155 = vld [vmem:[%s0 + $0x460] sm:$0xff]
  %v156 = vld [vmem:[%s0 + $0x468] sm:$0xff]
  %v157 = vld [vmem:[%s0 + $0x470] sm:$0xff]
  %v158 = vld [vmem:[%s0 + $0x478] sm:$0xff]
  %v159 = vld [vmem:[%s0 + $0x480] sm:$0xff]
  %v160 = vld [vmem:[%s0 + $0x488] sm:$0xff]
  %v161 = vld [vmem:[%s0 + $0x490] sm:$0xff]
  %v162 = vld [vmem:[%s0 + $0x498] sm:$0xff]
  %v163 = vld [vmem:[%s0 + $0x4a0] sm:$0xff]
  %v164 = vld [vmem:[%s0 + $0x4a8] sm:$0xff]
  %v165 = vld [vmem:[%s0 + $0x4b0] sm:$0xff]
  %v166 = vld [vmem:[%s0 + $0x4b8] sm:$0xff]
  %v167 = vld [vmem:[%s0 + $0x4c0] sm:$0xff]
  %v168 = vld [vmem:[%s0 + $0x4c8] sm:$0xff]
  %v169 = vld [vmem:[%s0 + $0x4d0] sm:$0xff]
  %v170 = vld [vmem:[%s0 + $0x4d8] sm:$0xff]
  %v171 = vld [vmem:[%s0 + $0x4e0] sm:$0xff]
  %v172 = vld [vmem:[%s0 + $0x4e8] sm:$0xff]
  %v173 = vld [vmem:[%s0 + $0x4f0] sm:$0xff]
  %v174 = vld [vmem:[%s0 + $0x4f8] sm:$0xff]
  %v175 = vld [vmem:[%s0 + $0x500] sm:$0xff]
  %v176 = vld [vmem:[%s0 + $0x508] sm:$0xff]
  %v177 = vld [vmem:[%s0 + $0x510] sm:$0xff]
  %v178 = vld [vmem:[%s0 + $0x518] sm:$0xff]
  %v179 = vld [vmem:[%s0 + $0x520] sm:$0xff]
  %v180 = vld [vmem:[%s0 + $0x528] sm:$0xff]
  %v181 = vld [vmem:[%s0 + $0x530] sm:$0xff]
  %v182 = vld [vmem:[%s0 + $0x538] sm:$0xff]
  %v183 = vld [vmem:[%s0 + $0x540] sm:$0xff]
  %v184 = vld [vmem:[%s0 + $0x548] sm:$0xff]
  %v185 = vld [vmem:[%s0 + $0x550] sm:$0xff]
  %v186 = vld [vmem:[%s0 + $0x558] sm:$0xff]
  %v187 = vld [vmem:[%s0 + $0x560] sm:$0xff]
  %v188 = vld [vmem:[%s0 + $0x568] sm:$0xff]
  %v189 = vld [vmem:[%s0 + $0x570] sm:$0xff]
  %v190 = vld [vmem:[%s0 + $0x578] sm:$0xff]
  %v191 = vld [vmem:[%s0 + $0x580] sm:$0xff]
  %v192 = vld [vmem:[%s0 + $0x588] sm:$0xff]
  %v193 = vld [vmem:[%s0 + $0x590] sm:$0xff]
  %v194 = vld [vmem:[%s0 + $0x598] sm:$0xff]
  %v195 = vld [vmem:[%s0 + $0x5a0] sm:$0xff]
  %v196 = vld [vmem:[%s0 + $0x5a8] sm:$0xff]
  %v197 = vld [vmem:[%s0 + $0x5b0] sm:$0xff]
  %v198 = vld [vmem:[%s0 + $0x5b8] sm:$0xff]
  %v199 = vld [vmem:[%s0 + $0x5c0] sm:$0xff]
  %v200 = vld [vmem:[%s0 + $0x5c8] sm:$0xff]
  %v201 = vld [vmem:[%s0 + $0x5d0] sm:$0xff]
  %v202 = vld [vmem:[%s0 + $0x5d8] sm:$0xff]
  %v203 = vld [vmem:[%s0 + $0x5e0] sm:$0xff]
  %v204 = vld [vmem:[%s0 + $0x5e8] sm:$0xff]
  %v205 = vld [vmem:[%s0 + $0x5f0] sm:$0xff]
  %v206 = vld [vmem:[%s0 + $0x5f8] sm:$0xff]
  %v207 = vld [vmem:[%s0 + $0x600] sm:$0xff]
  %v208 = vld [vmem:[%s0 + $0x608] sm:$0xff]
  %v209 = vld [vmem:[%s0 + $0x610] sm:$0xff]
  %v210 = vld [vmem:[%s0 + $0x618] sm:$0xff]
  %v211 = vld [vmem:[%s0 + $0x620] sm:$0xff]
  %v212 = vld [vmem:[%s0 + $0x628] sm:$0xff]
  %v213 = vld [vmem:[%s0 + $0x630] sm:$0xff]
  %v214 = vld [vmem:[%s0 + $0x638] sm:$0xff]
  %v215 = vld [vmem:[%s0 + $0x640] sm:$0xff]
  %v216 = vld [vmem:[%s0 + $0x648] sm:$0xff]
  %v217 = vld [vmem:[%s0 + $0x650] sm:$0xff]
  %v218 = vld [vmem:[%s0 + $0x658] sm:$0xff]
  %v219 = vld [vmem:[%s0 + $0x660] sm:$0xff]
  %v220 = vld [vmem:[%s0 + $0x668] sm:$0xff]
  %v221 = vld [vmem:[%s0 + $0x670] sm:$0xff]
  %v222 = vld [vmem:[%s0 + $0x678] sm:$0xff]
  %v223 = vld [vmem:[%s0 + $0x680] sm:$0xff]
  %v224 = vld [vmem:[%s0 + $0x688] sm:$0xff]
  %v225 = vld [vmem:[%s0 + $0x690] sm:$0xff]
  %v226 = vld [vmem:[%s0 + $0x698] sm:$0xff]
  %v227 = vld [vmem:[%s0 + $0x6a0] sm:$0xff]
  %v228 = vld [vmem:[%s0 + $0x6a8] sm:$0xff]
  %v229 = vld [vmem:[%s0 + $0x6b0] sm:$0xff]
  %v230 = vld [vmem:[%s0 + $0x6b8] sm:$0xff]
  %v231 = vld [vmem:[%s0 + $0x6c0] sm:$0xff]
  %v232 = vld [vmem:[%s0 + $0x6c8] sm:$0xff]
  %v233 = vld [vmem:[%s0 + $0x6d0] sm:$0xff]
  %v234 = vld [vmem:[%s0 + $0x6d8] sm:$0xff]
  %v235 = vld [vmem:[%s0 + $0x6e0] sm:$0xff]
  %v236 = vld [vmem:[%s0 + $0x6e8] sm:$0xff]
  %v237 = vld [vmem:[%s0 + $0x6f0] sm:$0xff]
  %v238 = vld [vmem:[%s0 + $0x6f8] sm:$0xff]
  %v239 = vld [vmem:[%s0 + $0x700] sm:$0xff]
  %v240 = vld [vmem:[%s0 + $0x708] sm:$0xff]
  %v241 = vld [vmem:[%s0 + $0x710] sm:$0xff]
  %v242 = vld [vmem:[%s0 + $0x718] sm:$0xff]
  %v243 = vld [vmem:[%s0 + $0x720] sm:$0xff]
  %v244 = vld [vmem:[%s0 + $0x728] sm:$0xff]
  %v245 = vld [vmem:[%s0 + $0x730] sm:$0xff]
  %v246 = vld [vmem:[%s0 + $0x738] sm:$0xff]
  %v247 = vld [vmem:[%s0 + $0x740] sm:$0xff]
  %v248 = vld [vmem:[%s0 + $0x748] sm:$0xff]
  %v249 = vld [vmem:[%s0 + $0x750] sm:$0xff]
  %v250 = vld [vmem:[%s0 + $0x758] sm:$0xff]
  %v251 = vld [vmem:[%s0 + $0x760] sm:$0xff]
  %v252 = vld [vmem:[%s0 + $0x768] sm:$0xff]
  %v253 = vld [vmem:[%s0 + $0x770] sm:$0xff]
  %v254 = vld [vmem:[%s0 + $0x778] sm:$0xff]
  %v255 = vld [vmem:[%s0 + $0x780] sm:$0xff]
  %v256 = vld [vmem:[%s0 + $0x788] sm:$0xff]
  %v257 = vld [vmem:[%s0 + $0x790] sm:$0xff]
  %v258 = vld [vmem:[%s0 + $0x798] sm:$0xff]
  %v259 = vld [vmem:[%s0 + $0x7a0] sm:$0xff]
  %v260 = vld [vmem:[%s0 + $0x7a8] sm:$0xff]
  %v261 = vld [vmem:[%s0 + $0x7b0] sm:$0xff]
  %v262 = vld [vmem:[%s0 + $0x7b8] sm:$0xff]
  %v263 = vld [vmem:[%s0 + $0x7c0] sm:$0xff]
  %v264 = vld [vmem:[%s0 + $0x7c8] sm:$0xff]
  %v265 = vld [vmem:[%s0 + $0x7d0] sm:$0xff]
  %v266 = vld [vmem:[%s0 + $0x7d8] sm:$0xff]
  %v267 = vld [vmem:[%s0 + $0x7e0] sm:$0xff]
  %v268 = vld [vmem:[%s0 + $0x7e8] sm:$0xff]
  %v269 = vld [vmem:[%s0 + $0x7f0] sm:$0xff]
  %v270 = vld [vmem:[%s0 + $0x7f8] sm:$0xff]
  %v271 = vld [vmem:[%s0 + $0x800] sm:$0xff]
  %v272 = vld [vmem:[%s0 + $0x808] sm:$0xff]
  %v273 = vld [vmem:[%s0 + $0x810] sm:$0xff]
  %v274 = vld [vmem:[%s0 + $0x818] sm:$0xff]
  %v275 = vld [vmem:[%s0 + $0x820] sm:$0xff]
  %v276 = vld [vmem:[%s0 + $0x828] sm:$0xff]
  %v277 = vld [vmem:[%s0 + $0x830] sm:$0xff]
  %v278 = vld [vmem:[%s0 + $0x838] sm:$0xff]
  %v279 = vld [vmem:[%s0 + $0x840] sm:$0xff]
  %v280 = vld [vmem:[%s0 + $0x848] sm:$0xff]
  %v281 = vld [vmem:[%s0 + $0x850] sm:$0xff]
  %v282 = vld [vmem:[%s0 + $0x858] sm:$0xff]
  %v283 = vld [vmem:[%s0 + $0x860] sm:$0xff]
  %v284 = vld [vmem:[%s0 + $0x868] sm:$0xff]
  %v285 = vld [vmem:[%s0 + $0x870] sm:$0xff]
  %v286 = vld [vmem:[%s0 + $0x878] sm:$0xff]
  %v287 = vld [vmem:[%s0 + $0x880] sm:$0xff]
  %v288 = vld [vmem:[%s0 + $0x888] sm:$0xff]
  %v289 = vld [vmem:[%s0 + $0x890] sm:$0xff]
  %v290 = vld [vmem:[%s0 + $0x898] sm:$0xff]
  %v291 = vld [vmem:[%s0 + $0x8a0] sm:$0xff]
  %v292 = vld [vmem:[%s0 + $0x8a8] sm:$0xff]
  %v293 = vld [vmem:[%s0 + $0x8b0] sm:$0xff]
  %v294 = vld [vmem:[%s0 + $0x8b8] sm:$0xff]
  %v295 = vld [vmem:[%s0 + $0x8c0] sm:$0xff]
  %v296 = vld [vmem:[%s0 + $0x8c8] sm:$0xff]
  %v297 = vld [vmem:[%s0 + $0x8d0] sm:$0xff]
  %v298 = vld [vmem:[%s0 + $0x8d8] sm:$0xff]
  %v299 = vld [vmem:[%s0 + $0x8e0] sm:$0xff]
  %v300 = vld [vmem:[%s0 + $0x8e8] sm:$0xff]
  %v301 = vld [vmem:[%s0 + $0x8f0] sm:$0xff]
  %v302 = vld [vmem:[%s0 + $0x8f8] sm:$0xff]
  %v303 = vld [vmem:[%s0 + $0x900] sm:$0xf]
  %v304 = vld [vmem:[%s0 + $0x908] sm:$0xf]
  %v305 = vld [vmem:[%s0 + $0x910] sm:$0xf]
  %v306 = vld [vmem:[%s0 + $0x918] sm:$0xf]
  %v307 = vld [vmem:[%s0 + $0x920] sm:$0xf]
  %v308 = vld [vmem:[%s0 + $0x928] sm:$0xf]
  %v309 = vld [vmem:[%s0 + $0x930] sm:$0xf]
  %v310 = vld [vmem:[%s0 + $0x938] sm:$0xf]
  %v311 = vld [vmem:[%s0 + $0x940] sm:$0xf]
  %v312 = vld [vmem:[%s0 + $0x948] sm:$0xf]
  %v313 = vld [vmem:[%s0 + $0x950] sm:$0xf]
  %v314 = vld [vmem:[%s0 + $0x958] sm:$0xf]
  %v315 = vpack.c.bf16 %v27, %v15
  %v316 = vpack.c.bf16 %v28, %v16
  %v317 = vpack.c.bf16 %v29, %v17
  %v318 = vpack.c.bf16 %v30, %v18
  %v319 = vpack.c.bf16 %v31, %v19
  %v320 = vpack.c.bf16 %v32, %v20
  %v321 = vpack.c.bf16 %v33, %v21
  %v322 = vpack.c.bf16 %v34, %v22
  %v323 = vpack.c.bf16 %v35, %v23
  %v324 = vpack.c.bf16 %v36, %v24
  %v325 = vpack.c.bf16 %v37, %v25
  %v326 = vpack.c.bf16 %v38, %v26
  %v327 = vpack.c.bf16 %v51, %v39
  %v328 = vpack.c.bf16 %v52, %v40
  %v329 = vpack.c.bf16 %v53, %v41
  %v330 = vpack.c.bf16 %v54, %v42
  %v331 = vpack.c.bf16 %v55, %v43
  %v332 = vpack.c.bf16 %v56, %v44
  %v333 = vpack.c.bf16 %v57, %v45
  %v334 = vpack.c.bf16 %v58, %v46
  %v335 = vpack.c.bf16 %v59, %v47
  %v336 = vpack.c.bf16 %v60, %v48
  %v337 = vpack.c.bf16 %v61, %v49
  %v338 = vpack.c.bf16 %v62, %v50
  %v339 = vpack.c.bf16 %v75, %v63
  %v340 = vpack.c.bf16 %v76, %v64
  %v341 = vpack.c.bf16 %v77, %v65
  %v342 = vpack.c.bf16 %v78, %v66
  %v343 = vpack.c.bf16 %v79, %v67
  %v344 = vpack.c.bf16 %v80, %v68
  %v345 = vpack.c.bf16 %v81, %v69
  %v346 = vpack.c.bf16 %v82, %v70
  %v347 = vpack.c.bf16 %v83, %v71
  %v348 = vpack.c.bf16 %v84, %v72
  %v349 = vpack.c.bf16 %v85, %v73
  %v350 = vpack.c.bf16 %v86, %v74
  %v351 = vpack.c.bf16 %v99, %v87
  %v352 = vpack.c.bf16 %v100, %v88
  %v353 = vpack.c.bf16 %v101, %v89
  %v354 = vpack.c.bf16 %v102, %v90
  %v355 = vpack.c.bf16 %v103, %v91
  %v356 = vpack.c.bf16 %v104, %v92
  %v357 = vpack.c.bf16 %v105, %v93
  %v358 = vpack.c.bf16 %v106, %v94
  %v359 = vpack.c.bf16 %v107, %v95
  %v360 = vpack.c.bf16 %v108, %v96
  %v361 = vpack.c.bf16 %v109, %v97
  %v362 = vpack.c.bf16 %v110, %v98
  %v363 = vpack.c.bf16 %v123, %v111
  %v364 = vpack.c.bf16 %v124, %v112
  %v365 = vpack.c.bf16 %v125, %v113
  %v366 = vpack.c.bf16 %v126, %v114
  %v367 = vpack.c.bf16 %v127, %v115
  %v368 = vpack.c.bf16 %v128, %v116
  %v369 = vpack.c.bf16 %v129, %v117
  %v370 = vpack.c.bf16 %v130, %v118
  %v371 = vpack.c.bf16 %v131, %v119
  %v372 = vpack.c.bf16 %v132, %v120
  %v373 = vpack.c.bf16 %v133, %v121
  %v374 = vpack.c.bf16 %v134, %v122
  %v375 = vpack.c.bf16 %v147, %v135
  %v376 = vpack.c.bf16 %v148, %v136
  %v377 = vpack.c.bf16 %v149, %v137
  %v378 = vpack.c.bf16 %v150, %v138
  %v379 = vpack.c.bf16 %v151, %v139
  %v380 = vpack.c.bf16 %v152, %v140
  %v381 = vpack.c.bf16 %v153, %v141
  %v382 = vpack.c.bf16 %v154, %v142
  %v383 = vpack.c.bf16 %v155, %v143
  %v384 = vpack.c.bf16 %v156, %v144
  %v385 = vpack.c.bf16 %v157, %v145
  %v386 = vpack.c.bf16 %v158, %v146
  %v387 = vpack.c.bf16 %v171, %v159
  %v388 = vpack.c.bf16 %v172, %v160
  %v389 = vpack.c.bf16 %v173, %v161
  %v390 = vpack.c.bf16 %v174, %v162
  %v391 = vpack.c.bf16 %v175, %v163
  %v392 = vpack.c.bf16 %v176, %v164
  %v393 = vpack.c.bf16 %v177, %v165
  %v394 = vpack.c.bf16 %v178, %v166
  %v395 = vpack.c.bf16 %v179, %v167
  %v396 = vpack.c.bf16 %v180, %v168
  %v397 = vpack.c.bf16 %v181, %v169
  %v398 = vpack.c.bf16 %v182, %v170
  %v399 = vpack.c.bf16 %v195, %v183
  %v400 = vpack.c.bf16 %v196, %v184
  %v401 = vpack.c.bf16 %v197, %v185
  %v402 = vpack.c.bf16 %v198, %v186
  %v403 = vpack.c.bf16 %v199, %v187
  %v404 = vpack.c.bf16 %v200, %v188
  %v405 = vpack.c.bf16 %v201, %v189
  %v406 = vpack.c.bf16 %v202, %v190
  %v407 = vpack.c.bf16 %v203, %v191
  %v408 = vpack.c.bf16 %v204, %v192
  %v409 = vpack.c.bf16 %v205, %v193
  %v410 = vpack.c.bf16 %v206, %v194
  %v411 = vpack.c.bf16 %v219, %v207
  %v412 = vpack.c.bf16 %v220, %v208
  %v413 = vpack.c.bf16 %v221, %v209
  %v414 = vpack.c.bf16 %v222, %v210
  %v415 = vpack.c.bf16 %v223, %v211
  %v416 = vpack.c.bf16 %v224, %v212
  %v417 = vpack.c.bf16 %v225, %v213
  %v418 = vpack.c.bf16 %v226, %v214
  %v419 = vpack.c.bf16 %v227, %v215
  %v420 = vpack.c.bf16 %v228, %v216
  %v421 = vpack.c.bf16 %v229, %v217
  %v422 = vpack.c.bf16 %v230, %v218
  %v423 = vpack.c.bf16 %v243, %v231
  %v424 = vpack.c.bf16 %v244, %v232
  %v425 = vpack.c.bf16 %v245, %v233
  %v426 = vpack.c.bf16 %v246, %v234
  %v427 = vpack.c.bf16 %v247, %v235
  %v428 = vpack.c.bf16 %v248, %v236
  %v429 = vpack.c.bf16 %v249, %v237
  %v430 = vpack.c.bf16 %v250, %v238
  %v431 = vpack.c.bf16 %v251, %v239
  %v432 = vpack.c.bf16 %v252, %v240
  %v433 = vpack.c.bf16 %v253, %v241
  %v434 = vpack.c.bf16 %v254, %v242
  %v435 = vpack.c.bf16 %v267, %v255
  %v436 = vpack.c.bf16 %v268, %v256
  %v437 = vpack.c.bf16 %v269, %v257
  %v438 = vpack.c.bf16 %v270, %v258
  %v439 = vpack.c.bf16 %v271, %v259
  %v440 = vpack.c.bf16 %v272, %v260
  %v441 = vpack.c.bf16 %v273, %v261
  %v442 = vpack.c.bf16 %v274, %v262
  %v443 = vpack.c.bf16 %v275, %v263
  %v444 = vpack.c.bf16 %v276, %v264
  %v445 = vpack.c.bf16 %v277, %v265
  %v446 = vpack.c.bf16 %v278, %v266
  %v447 = vpack.c.bf16 %v291, %v279
  %v448 = vpack.c.bf16 %v292, %v280
  %v449 = vpack.c.bf16 %v293, %v281
  %v450 = vpack.c.bf16 %v294, %v282
  %v451 = vpack.c.bf16 %v295, %v283
  %v452 = vpack.c.bf16 %v296, %v284
  %v453 = vpack.c.bf16 %v297, %v285
  %v454 = vpack.c.bf16 %v298, %v286
  %v455 = vpack.c.bf16 %v299, %v287
  %v456 = vpack.c.bf16 %v300, %v288
  %v457 = vpack.c.bf16 %v301, %v289
  %v458 = vpack.c.bf16 %v302, %v290
  %v459 = vpack.c.bf16 %v303, %v303
  %v460 = vpack.c.bf16 %v304, %v304
  %v461 = vpack.c.bf16 %v305, %v305
  %v462 = vpack.c.bf16 %v306, %v306
  %v463 = vpack.c.bf16 %v307, %v307
  %v464 = vpack.c.bf16 %v308, %v308
  %v465 = vpack.c.bf16 %v309, %v309
  %v466 = vpack.c.bf16 %v310, %v310
  %v467 = vpack.c.bf16 %v311, %v311
  %v468 = vpack.c.bf16 %v312, %v312
  %v469 = vpack.c.bf16 %v313, %v313
  %v470 = vpack.c.bf16 %v314, %v314
  %v471 = vld [vmem:[%s1] sm:$0xff]
  %v472 = vld [vmem:[%s1 + $0x8] sm:$0xf]
  %v473 = vld [vmem:[%s1 + $0xc] sm:$0xff]
  %v474 = vld [vmem:[%s1 + $0x14] sm:$0xf]
  %v475 = vld [vmem:[%s1 + $0x18] sm:$0xff]
  %v476 = vld [vmem:[%s1 + $0x20] sm:$0xf]
  %v477 = vld [vmem:[%s1 + $0x24] sm:$0xff]
  %v478 = vld [vmem:[%s1 + $0x2c] sm:$0xf]
  %v479 = vld [vmem:[%s1 + $0x30] sm:$0xff]
  %v480 = vld [vmem:[%s1 + $0x38] sm:$0xf]
  %v481 = vld [vmem:[%s1 + $0x3c] sm:$0xff]
  %v482 = vld [vmem:[%s1 + $0x44] sm:$0xf]
  %v483 = vld [vmem:[%s1 + $0x48] sm:$0xff]
  %v484 = vld [vmem:[%s1 + $0x50] sm:$0xf]
  %v485 = vld [vmem:[%s1 + $0x54] sm:$0xff]
  %v486 = vld [vmem:[%s1 + $0x5c] sm:$0xf]
  %v487 = vld [vmem:[%s1 + $0x60] sm:$0xff]
  %v488 = vld [vmem:[%s1 + $0x68] sm:$0xf]
  %v489 = vld [vmem:[%s1 + $0x6c] sm:$0xff]
  %v490 = vld [vmem:[%s1 + $0x74] sm:$0xf]
  %v491 = vld [vmem:[%s1 + $0x78] sm:$0xff]
  %v492 = vld [vmem:[%s1 + $0x80] sm:$0xf]
  %v493 = vld [vmem:[%s1 + $0x84] sm:$0xff]
  %v494 = vld [vmem:[%s1 + $0x8c] sm:$0xf]
  %v495 = vld [vmem:[%s1 + $0x90] sm:$0xff]
  %v496 = vld [vmem:[%s1 + $0x98] sm:$0xf]
  %v497 = vld [vmem:[%s1 + $0x9c] sm:$0xff]
  %v498 = vld [vmem:[%s1 + $0xa4] sm:$0xf]
  %v499 = vld [vmem:[%s1 + $0xa8] sm:$0xff]
  %v500 = vld [vmem:[%s1 + $0xb0] sm:$0xf]
  %v501 = vld [vmem:[%s1 + $0xb4] sm:$0xff]
  %v502 = vld [vmem:[%s1 + $0xbc] sm:$0xf]
  %v503 = vld [vmem:[%s1 + $0xc0] sm:$0xff]
  %v504 = vld [vmem:[%s1 + $0xc8] sm:$0xf]
  %v505 = vld [vmem:[%s1 + $0xcc] sm:$0xff]
  %v506 = vld [vmem:[%s1 + $0xd4] sm:$0xf]
  %v507 = vld [vmem:[%s1 + $0xd8] sm:$0xff]
  %v508 = vld [vmem:[%s1 + $0xe0] sm:$0xf]
  %v509 = vld [vmem:[%s1 + $0xe4] sm:$0xff]
  %v510 = vld [vmem:[%s1 + $0xec] sm:$0xf]
  %v511 = vld [vmem:[%s1 + $0xf0] sm:$0xff]
  %v512 = vld [vmem:[%s1 + $0xf8] sm:$0xf]
  %v513 = vld [vmem:[%s1 + $0xfc] sm:$0xff]
  %v514 = vld [vmem:[%s1 + $0x104] sm:$0xf]
  %v515 = vld [vmem:[%s1 + $0x108] sm:$0xff]
  %v516 = vld [vmem:[%s1 + $0x110] sm:$0xf]
  %v517 = vld [vmem:[%s1 + $0x114] sm:$0xff]
  %v518 = vld [vmem:[%s1 + $0x11c] sm:$0xf]
  %v519 = vld [vmem:[%s1 + $0x120] sm:$0xff]
  %v520 = vld [vmem:[%s1 + $0x128] sm:$0xf]
  %v521 = vld [vmem:[%s1 + $0x12c] sm:$0xff]
  %v522 = vld [vmem:[%s1 + $0x134] sm:$0xf]
  %v523 = vld [vmem:[%s1 + $0x138] sm:$0xff]
  %v524 = vld [vmem:[%s1 + $0x140] sm:$0xf]
  %v525 = vld [vmem:[%s1 + $0x144] sm:$0xff]
  %v526 = vld [vmem:[%s1 + $0x14c] sm:$0xf]
  %v527 = vld [vmem:[%s1 + $0x150] sm:$0xff]
  %v528 = vld [vmem:[%s1 + $0x158] sm:$0xf]
  %v529 = vld [vmem:[%s1 + $0x15c] sm:$0xff]
  %v530 = vld [vmem:[%s1 + $0x164] sm:$0xf]
  %v531 = vld [vmem:[%s1 + $0x168] sm:$0xff]
  %v532 = vld [vmem:[%s1 + $0x170] sm:$0xf]
  %v533 = vld [vmem:[%s1 + $0x174] sm:$0xff]
  %v534 = vld [vmem:[%s1 + $0x17c] sm:$0xf]
  %v535 = vld [vmem:[%s1 + $0x180] sm:$0xff]
  %v536 = vld [vmem:[%s1 + $0x188] sm:$0xf]
  %v537 = vld [vmem:[%s1 + $0x18c] sm:$0xff]
  %v538 = vld [vmem:[%s1 + $0x194] sm:$0xf]
  %v539 = vld [vmem:[%s1 + $0x198] sm:$0xff]
  %v540 = vld [vmem:[%s1 + $0x1a0] sm:$0xf]
  %v541 = vld [vmem:[%s1 + $0x1a4] sm:$0xff]
  %v542 = vld [vmem:[%s1 + $0x1ac] sm:$0xf]
  %v543 = vld [vmem:[%s1 + $0x1b0] sm:$0xff]
  %v544 = vld [vmem:[%s1 + $0x1b8] sm:$0xf]
  %v545 = vld [vmem:[%s1 + $0x1bc] sm:$0xff]
  %v546 = vld [vmem:[%s1 + $0x1c4] sm:$0xf]
  %v547 = vld [vmem:[%s1 + $0x1c8] sm:$0xff]
  %v548 = vld [vmem:[%s1 + $0x1d0] sm:$0xf]
  %v549 = vld [vmem:[%s1 + $0x1d4] sm:$0xff]
  %v550 = vld [vmem:[%s1 + $0x1dc] sm:$0xf]
  %v551 = vld [vmem:[%s1 + $0x1e0] sm:$0xff]
  %v552 = vld [vmem:[%s1 + $0x1e8] sm:$0xf]
  %v553 = vld [vmem:[%s1 + $0x1ec] sm:$0xff]
  %v554 = vld [vmem:[%s1 + $0x1f4] sm:$0xf]
  %v555 = vld [vmem:[%s1 + $0x1f8] sm:$0xff]
  %v556 = vld [vmem:[%s1 + $0x200] sm:$0xf]
  %v557 = vld [vmem:[%s1 + $0x204] sm:$0xff]
  %v558 = vld [vmem:[%s1 + $0x20c] sm:$0xf]
  %v559 = vld [vmem:[%s1 + $0x210] sm:$0xff]
  %v560 = vld [vmem:[%s1 + $0x218] sm:$0xf]
  %v561 = vld [vmem:[%s1 + $0x21c] sm:$0xff]
  %v562 = vld [vmem:[%s1 + $0x224] sm:$0xf]
  %v563 = vld [vmem:[%s1 + $0x228] sm:$0xff]
  %v564 = vld [vmem:[%s1 + $0x230] sm:$0xf]
  %v565 = vld [vmem:[%s1 + $0x234] sm:$0xff]
  %v566 = vld [vmem:[%s1 + $0x23c] sm:$0xf]
  %v567 = vld [vmem:[%s1 + $0x240] sm:$0xff]
  %v568 = vld [vmem:[%s1 + $0x248] sm:$0xf]
  %v569 = vld [vmem:[%s1 + $0x24c] sm:$0xff]
  %v570 = vld [vmem:[%s1 + $0x254] sm:$0xf]
  %v571 = vld [vmem:[%s1 + $0x258] sm:$0xff]
  %v572 = vld [vmem:[%s1 + $0x260] sm:$0xf]
  %v573 = vld [vmem:[%s1 + $0x264] sm:$0xff]
  %v574 = vld [vmem:[%s1 + $0x26c] sm:$0xf]
  %v575 = vld [vmem:[%s1 + $0x270] sm:$0xff]
  %v576 = vld [vmem:[%s1 + $0x278] sm:$0xf]
  %v577 = vld [vmem:[%s1 + $0x27c] sm:$0xff]
  %v578 = vld [vmem:[%s1 + $0x284] sm:$0xf]
  %v579 = vld [vmem:[%s1 + $0x288] sm:$0xff]
  %v580 = vld [vmem:[%s1 + $0x290] sm:$0xf]
  %v581 = vld [vmem:[%s1 + $0x294] sm:$0xff]
  %v582 = vld [vmem:[%s1 + $0x29c] sm:$0xf]
  %v583 = vld [vmem:[%s1 + $0x2a0] sm:$0xff]
  %v584 = vld [vmem:[%s1 + $0x2a8] sm:$0xf]
  %v585 = vld [vmem:[%s1 + $0x2ac] sm:$0xff]
  %v586 = vld [vmem:[%s1 + $0x2b4] sm:$0xf]
  %v587 = vld [vmem:[%s1 + $0x2b8] sm:$0xff]
  %v588 = vld [vmem:[%s1 + $0x2c0] sm:$0xf]
  %v589 = vld [vmem:[%s1 + $0x2c4] sm:$0xff]
  %v590 = vld [vmem:[%s1 + $0x2cc] sm:$0xf]
  %v591 = vld [vmem:[%s1 + $0x2d0] sm:$0xff]
  %v592 = vld [vmem:[%s1 + $0x2d8] sm:$0xf]
  %v593 = vld [vmem:[%s1 + $0x2dc] sm:$0xff]
  %v594 = vld [vmem:[%s1 + $0x2e4] sm:$0xf]
  %v595 = vld [vmem:[%s1 + $0x2e8] sm:$0xff]
  %v596 = vld [vmem:[%s1 + $0x2f0] sm:$0xf]
  %v597 = vld [vmem:[%s1 + $0x2f4] sm:$0xff]
  %v598 = vld [vmem:[%s1 + $0x2fc] sm:$0xf]
  %v599 = vld [vmem:[%s1 + $0x300] sm:$0xff]
  %v600 = vld [vmem:[%s1 + $0x308] sm:$0xf]
  %v601 = vld [vmem:[%s1 + $0x30c] sm:$0xff]
  %v602 = vld [vmem:[%s1 + $0x314] sm:$0xf]
  %v603 = vld [vmem:[%s1 + $0x318] sm:$0xff]
  %v604 = vld [vmem:[%s1 + $0x320] sm:$0xf]
  %v605 = vld [vmem:[%s1 + $0x324] sm:$0xff]
  %v606 = vld [vmem:[%s1 + $0x32c] sm:$0xf]
  %v607 = vld [vmem:[%s1 + $0x330] sm:$0xff]
  %v608 = vld [vmem:[%s1 + $0x338] sm:$0xf]
  %v609 = vld [vmem:[%s1 + $0x33c] sm:$0xff]
  %v610 = vld [vmem:[%s1 + $0x344] sm:$0xf]
  %v611 = vld [vmem:[%s1 + $0x348] sm:$0xff]
  %v612 = vld [vmem:[%s1 + $0x350] sm:$0xf]
  %v613 = vld [vmem:[%s1 + $0x354] sm:$0xff]
  %v614 = vld [vmem:[%s1 + $0x35c] sm:$0xf]
  %v615 = vld [vmem:[%s1 + $0x360] sm:$0xff]
  %v616 = vld [vmem:[%s1 + $0x368] sm:$0xf]
  %v617 = vld [vmem:[%s1 + $0x36c] sm:$0xff]
  %v618 = vld [vmem:[%s1 + $0x374] sm:$0xf]
  %v619 = vld [vmem:[%s1 + $0x378] sm:$0xff]
  %v620 = vld [vmem:[%s1 + $0x380] sm:$0xf]
  %v621 = vld [vmem:[%s1 + $0x384] sm:$0xff]
  %v622 = vld [vmem:[%s1 + $0x38c] sm:$0xf]
  %v623 = vld [vmem:[%s1 + $0x390] sm:$0xff]
  %v624 = vld [vmem:[%s1 + $0x398] sm:$0xf]
  %v625 = vld [vmem:[%s1 + $0x39c] sm:$0xff]
  %v626 = vld [vmem:[%s1 + $0x3a4] sm:$0xf]
  %v627 = vld [vmem:[%s1 + $0x3a8] sm:$0xff]
  %v628 = vld [vmem:[%s1 + $0x3b0] sm:$0xf]
  %v629 = vld [vmem:[%s1 + $0x3b4] sm:$0xff]
  %v630 = vld [vmem:[%s1 + $0x3bc] sm:$0xf]
  %v631 = vld [vmem:[%s1 + $0x3c0] sm:$0xff]
  %v632 = vld [vmem:[%s1 + $0x3c8] sm:$0xf]
  %v633 = vld [vmem:[%s1 + $0x3cc] sm:$0xff]
  %v634 = vld [vmem:[%s1 + $0x3d4] sm:$0xf]
  %v635 = vld [vmem:[%s1 + $0x3d8] sm:$0xff]
  %v636 = vld [vmem:[%s1 + $0x3e0] sm:$0xf]
  %v637 = vld [vmem:[%s1 + $0x3e4] sm:$0xff]
  %v638 = vld [vmem:[%s1 + $0x3ec] sm:$0xf]
  %v639 = vld [vmem:[%s1 + $0x3f0] sm:$0xff]
  %v640 = vld [vmem:[%s1 + $0x3f8] sm:$0xf]
  %v641 = vld [vmem:[%s1 + $0x3fc] sm:$0xff]
  %v642 = vld [vmem:[%s1 + $0x404] sm:$0xf]
  %v643 = vld [vmem:[%s1 + $0x408] sm:$0xff]
  %v644 = vld [vmem:[%s1 + $0x410] sm:$0xf]
  %v645 = vld [vmem:[%s1 + $0x414] sm:$0xff]
  %v646 = vld [vmem:[%s1 + $0x41c] sm:$0xf]
  %v647 = vld [vmem:[%s1 + $0x420] sm:$0xff]
  %v648 = vld [vmem:[%s1 + $0x428] sm:$0xf]
  %v649 = vld [vmem:[%s1 + $0x42c] sm:$0xff]
  %v650 = vld [vmem:[%s1 + $0x434] sm:$0xf]
  %v651 = vld [vmem:[%s1 + $0x438] sm:$0xff]
  %v652 = vld [vmem:[%s1 + $0x440] sm:$0xf]
  %v653 = vld [vmem:[%s1 + $0x444] sm:$0xff]
  %v654 = vld [vmem:[%s1 + $0x44c] sm:$0xf]
  %v655 = vld [vmem:[%s1 + $0x450] sm:$0xff]
  %v656 = vld [vmem:[%s1 + $0x458] sm:$0xf]
  %v657 = vld [vmem:[%s1 + $0x45c] sm:$0xff]
  %v658 = vld [vmem:[%s1 + $0x464] sm:$0xf]
  %v659 = vld [vmem:[%s1 + $0x468] sm:$0xff]
  %v660 = vld [vmem:[%s1 + $0x470] sm:$0xf]
  %v661 = vld [vmem:[%s1 + $0x474] sm:$0xff]
  %v662 = vld [vmem:[%s1 + $0x47c] sm:$0xf]
  %v663 = vld [vmem:[%s1 + $0x480] sm:$0xff]
  %v664 = vld [vmem:[%s1 + $0x488] sm:$0xf]
  %v665 = vld [vmem:[%s1 + $0x48c] sm:$0xff]
  %v666 = vld [vmem:[%s1 + $0x494] sm:$0xf]
  %v667 = vld [vmem:[%s1 + $0x498] sm:$0xff]
  %v668 = vld [vmem:[%s1 + $0x4a0] sm:$0xf]
  %v669 = vld [vmem:[%s1 + $0x4a4] sm:$0xff]
  %v670 = vld [vmem:[%s1 + $0x4ac] sm:$0xf]
  %v671 = vld [vmem:[%s1 + $0x4b0] sm:$0xff]
  %v672 = vld [vmem:[%s1 + $0x4b8] sm:$0xf]
  %v673 = vld [vmem:[%s1 + $0x4bc] sm:$0xff]
  %v674 = vld [vmem:[%s1 + $0x4c4] sm:$0xf]
  %v675 = vld [vmem:[%s1 + $0x4c8] sm:$0xff]
  %v676 = vld [vmem:[%s1 + $0x4d0] sm:$0xf]
  %v677 = vld [vmem:[%s1 + $0x4d4] sm:$0xff]
  %v678 = vld [vmem:[%s1 + $0x4dc] sm:$0xf]
  %v679 = vld [vmem:[%s1 + $0x4e0] sm:$0xff]
  %v680 = vld [vmem:[%s1 + $0x4e8] sm:$0xf]
  %v681 = vld [vmem:[%s1 + $0x4ec] sm:$0xff]
  %v682 = vld [vmem:[%s1 + $0x4f4] sm:$0xf]
  %v683 = vld [vmem:[%s1 + $0x4f8] sm:$0xff]
  %v684 = vld [vmem:[%s1 + $0x500] sm:$0xf]
  %v685 = vld [vmem:[%s1 + $0x504] sm:$0xff]
  %v686 = vld [vmem:[%s1 + $0x50c] sm:$0xf]
  %v687 = vld [vmem:[%s1 + $0x510] sm:$0xff]
  %v688 = vld [vmem:[%s1 + $0x518] sm:$0xf]
  %v689 = vld [vmem:[%s1 + $0x51c] sm:$0xff]
  %v690 = vld [vmem:[%s1 + $0x524] sm:$0xf]
  %v691 = vld [vmem:[%s1 + $0x528] sm:$0xff]
  %v692 = vld [vmem:[%s1 + $0x530] sm:$0xf]
  %v693 = vld [vmem:[%s1 + $0x534] sm:$0xff]
  %v694 = vld [vmem:[%s1 + $0x53c] sm:$0xf]
  %v695 = vld [vmem:[%s1 + $0x540] sm:$0xff]
  %v696 = vld [vmem:[%s1 + $0x548] sm:$0xf]
  %v697 = vld [vmem:[%s1 + $0x54c] sm:$0xff]
  %v698 = vld [vmem:[%s1 + $0x554] sm:$0xf]
  %v699 = vld [vmem:[%s1 + $0x558] sm:$0xff]
  %v700 = vld [vmem:[%s1 + $0x560] sm:$0xf]
  %v701 = vld [vmem:[%s1 + $0x564] sm:$0xff]
  %v702 = vld [vmem:[%s1 + $0x56c] sm:$0xf]
  %v703 = vld [vmem:[%s1 + $0x570] sm:$0xff]
  %v704 = vld [vmem:[%s1 + $0x578] sm:$0xf]
  %v705 = vld [vmem:[%s1 + $0x57c] sm:$0xff]
  %v706 = vld [vmem:[%s1 + $0x584] sm:$0xf]
  %v707 = vld [vmem:[%s1 + $0x588] sm:$0xff]
  %v708 = vld [vmem:[%s1 + $0x590] sm:$0xf]
  %v709 = vld [vmem:[%s1 + $0x594] sm:$0xff]
  %v710 = vld [vmem:[%s1 + $0x59c] sm:$0xf]
  %v711 = vld [vmem:[%s1 + $0x5a0] sm:$0xff]
  %v712 = vld [vmem:[%s1 + $0x5a8] sm:$0xf]
  %v713 = vld [vmem:[%s1 + $0x5ac] sm:$0xff]
  %v714 = vld [vmem:[%s1 + $0x5b4] sm:$0xf]
  %v715 = vld [vmem:[%s1 + $0x5b8] sm:$0xff]
  %v716 = vld [vmem:[%s1 + $0x5c0] sm:$0xf]
  %v717 = vld [vmem:[%s1 + $0x5c4] sm:$0xff]
  %v718 = vld [vmem:[%s1 + $0x5cc] sm:$0xf]
  %v719 = vld [vmem:[%s1 + $0x5d0] sm:$0xff]
  %v720 = vld [vmem:[%s1 + $0x5d8] sm:$0xf]
  %v721 = vld [vmem:[%s1 + $0x5dc] sm:$0xff]
  %v722 = vld [vmem:[%s1 + $0x5e4] sm:$0xf]
  %v723 = vld [vmem:[%s1 + $0x5e8] sm:$0xff]
  %v724 = vld [vmem:[%s1 + $0x5f0] sm:$0xf]
  %v725 = vld [vmem:[%s1 + $0x5f4] sm:$0xff]
  %v726 = vld [vmem:[%s1 + $0x5fc] sm:$0xf]
  %v727 = vld [vmem:[%s1 + $0x600] sm:$0xff]
  %v728 = vld [vmem:[%s1 + $0x608] sm:$0xf]
  %v729 = vld [vmem:[%s1 + $0x60c] sm:$0xff]
  %v730 = vld [vmem:[%s1 + $0x614] sm:$0xf]
  %v731 = vld [vmem:[%s1 + $0x618] sm:$0xff]
  %v732 = vld [vmem:[%s1 + $0x620] sm:$0xf]
  %v733 = vld [vmem:[%s1 + $0x624] sm:$0xff]
  %v734 = vld [vmem:[%s1 + $0x62c] sm:$0xf]
  %v735 = vld [vmem:[%s1 + $0x630] sm:$0xff]
  %v736 = vld [vmem:[%s1 + $0x638] sm:$0xf]
  %v737 = vld [vmem:[%s1 + $0x63c] sm:$0xff]
  %v738 = vld [vmem:[%s1 + $0x644] sm:$0xf]
  %v739 = vld [vmem:[%s1 + $0x648] sm:$0xff]
  %v740 = vld [vmem:[%s1 + $0x650] sm:$0xf]
  %v741 = vld [vmem:[%s1 + $0x654] sm:$0xff]
  %v742 = vld [vmem:[%s1 + $0x65c] sm:$0xf]
  %v743 = vld [vmem:[%s1 + $0x660] sm:$0xff]
  %v744 = vld [vmem:[%s1 + $0x668] sm:$0xf]
  %v745 = vld [vmem:[%s1 + $0x66c] sm:$0xff]
  %v746 = vld [vmem:[%s1 + $0x674] sm:$0xf]
  %v747 = vld [vmem:[%s1 + $0x678] sm:$0xff]
  %v748 = vld [vmem:[%s1 + $0x680] sm:$0xf]
  %v749 = vld [vmem:[%s1 + $0x684] sm:$0xff]
  %v750 = vld [vmem:[%s1 + $0x68c] sm:$0xf]
  %v751 = vld [vmem:[%s1 + $0x690] sm:$0xff]
  %v752 = vld [vmem:[%s1 + $0x698] sm:$0xf]
  %v753 = vld [vmem:[%s1 + $0x69c] sm:$0xff]
  %v754 = vld [vmem:[%s1 + $0x6a4] sm:$0xf]
  %v755 = vld [vmem:[%s1 + $0x6a8] sm:$0xff]
  %v756 = vld [vmem:[%s1 + $0x6b0] sm:$0xf]
  %v757 = vld [vmem:[%s1 + $0x6b4] sm:$0xff]
  %v758 = vld [vmem:[%s1 + $0x6bc] sm:$0xf]
  %v759 = vld [vmem:[%s1 + $0x6c0] sm:$0xff]
  %v760 = vld [vmem:[%s1 + $0x6c8] sm:$0xf]
  %v761 = vld [vmem:[%s1 + $0x6cc] sm:$0xff]
  %v762 = vld [vmem:[%s1 + $0x6d4] sm:$0xf]
  %v763 = vld [vmem:[%s1 + $0x6d8] sm:$0xff]
  %v764 = vld [vmem:[%s1 + $0x6e0] sm:$0xf]
  %v765 = vld [vmem:[%s1 + $0x6e4] sm:$0xff]
  %v766 = vld [vmem:[%s1 + $0x6ec] sm:$0xf]
  %v767 = vld [vmem:[%s1 + $0x6f0] sm:$0xff]
  %v768 = vld [vmem:[%s1 + $0x6f8] sm:$0xf]
  %v769 = vld [vmem:[%s1 + $0x6fc] sm:$0xff]
  %v770 = vld [vmem:[%s1 + $0x704] sm:$0xf]
  %v771 = vld [vmem:[%s1 + $0x708] sm:$0xff]
  %v772 = vld [vmem:[%s1 + $0x710] sm:$0xf]
  %v773 = vld [vmem:[%s1 + $0x714] sm:$0xff]
  %v774 = vld [vmem:[%s1 + $0x71c] sm:$0xf]
  %v775 = vld [vmem:[%s1 + $0x720] sm:$0xff]
  %v776 = vld [vmem:[%s1 + $0x728] sm:$0xf]
  %v777 = vld [vmem:[%s1 + $0x72c] sm:$0xff]
  %v778 = vld [vmem:[%s1 + $0x734] sm:$0xf]
  %v779 = vld [vmem:[%s1 + $0x738] sm:$0xff]
  %v780 = vld [vmem:[%s1 + $0x740] sm:$0xf]
  %v781 = vld [vmem:[%s1 + $0x744] sm:$0xff]
  %v782 = vld [vmem:[%s1 + $0x74c] sm:$0xf]
  %v783 = vld [vmem:[%s1 + $0x750] sm:$0xff]
  %v784 = vld [vmem:[%s1 + $0x758] sm:$0xf]
  %v785 = vld [vmem:[%s1 + $0x75c] sm:$0xff]
  %v786 = vld [vmem:[%s1 + $0x764] sm:$0xf]
  %v787 = vld [vmem:[%s1 + $0x768] sm:$0xff]
  %v788 = vld [vmem:[%s1 + $0x770] sm:$0xf]
  %v789 = vld [vmem:[%s1 + $0x774] sm:$0xff]
  %v790 = vld [vmem:[%s1 + $0x77c] sm:$0xf]
  %v791 = vld [vmem:[%s1 + $0x780] sm:$0xff]
  %v792 = vld [vmem:[%s1 + $0x788] sm:$0xf]
  %v793 = vld [vmem:[%s1 + $0x78c] sm:$0xff]
  %v794 = vld [vmem:[%s1 + $0x794] sm:$0xf]
  %v795 = vld [vmem:[%s1 + $0x798] sm:$0xff]
  %v796 = vld [vmem:[%s1 + $0x7a0] sm:$0xf]
  %v797 = vld [vmem:[%s1 + $0x7a4] sm:$0xff]
  %v798 = vld [vmem:[%s1 + $0x7ac] sm:$0xf]
  %v799 = vld [vmem:[%s1 + $0x7b0] sm:$0xff]
  %v800 = vld [vmem:[%s1 + $0x7b8] sm:$0xf]
  %v801 = vld [vmem:[%s1 + $0x7bc] sm:$0xff]
  %v802 = vld [vmem:[%s1 + $0x7c4] sm:$0xf]
  %v803 = vld [vmem:[%s1 + $0x7c8] sm:$0xff]
  %v804 = vld [vmem:[%s1 + $0x7d0] sm:$0xf]
  %v805 = vld [vmem:[%s1 + $0x7d4] sm:$0xff]
  %v806 = vld [vmem:[%s1 + $0x7dc] sm:$0xf]
  %v807 = vld [vmem:[%s1 + $0x7e0] sm:$0xff]
  %v808 = vld [vmem:[%s1 + $0x7e8] sm:$0xf]
  %v809 = vld [vmem:[%s1 + $0x7ec] sm:$0xff]
  %v810 = vld [vmem:[%s1 + $0x7f4] sm:$0xf]
  %v811 = vld [vmem:[%s1 + $0x7f8] sm:$0xff]
  %v812 = vld [vmem:[%s1 + $0x800] sm:$0xf]
  %v813 = vld [vmem:[%s1 + $0x804] sm:$0xff]
  %v814 = vld [vmem:[%s1 + $0x80c] sm:$0xf]
  %v815 = vld [vmem:[%s1 + $0x810] sm:$0xff]
  %v816 = vld [vmem:[%s1 + $0x818] sm:$0xf]
  %v817 = vld [vmem:[%s1 + $0x81c] sm:$0xff]
  %v818 = vld [vmem:[%s1 + $0x824] sm:$0xf]
  %v819 = vld [vmem:[%s1 + $0x828] sm:$0xff]
  %v820 = vld [vmem:[%s1 + $0x830] sm:$0xf]
  %v821 = vld [vmem:[%s1 + $0x834] sm:$0xff]
  %v822 = vld [vmem:[%s1 + $0x83c] sm:$0xf]
  %v823 = vld [vmem:[%s1 + $0x840] sm:$0xff]
  %v824 = vld [vmem:[%s1 + $0x848] sm:$0xf]
  %v825 = vld [vmem:[%s1 + $0x84c] sm:$0xff]
  %v826 = vld [vmem:[%s1 + $0x854] sm:$0xf]
  %v827 = vld [vmem:[%s1 + $0x858] sm:$0xff]
  %v828 = vld [vmem:[%s1 + $0x860] sm:$0xf]
  %v829 = vld [vmem:[%s1 + $0x864] sm:$0xff]
  %v830 = vld [vmem:[%s1 + $0x86c] sm:$0xf]
  %v831 = vld [vmem:[%s1 + $0x870] sm:$0xff]
  %v832 = vld [vmem:[%s1 + $0x878] sm:$0xf]
  %v833 = vld [vmem:[%s1 + $0x87c] sm:$0xff]
  %v834 = vld [vmem:[%s1 + $0x884] sm:$0xf]
  %v835 = vld [vmem:[%s1 + $0x888] sm:$0xff]
  %v836 = vld [vmem:[%s1 + $0x890] sm:$0xf]
  %v837 = vld [vmem:[%s1 + $0x894] sm:$0xff]
  %v838 = vld [vmem:[%s1 + $0x89c] sm:$0xf]
  %v839 = vld [vmem:[%s1 + $0x8a0] sm:$0xff]
  %v840 = vld [vmem:[%s1 + $0x8a8] sm:$0xf]
  %v841 = vld [vmem:[%s1 + $0x8ac] sm:$0xff]
  %v842 = vld [vmem:[%s1 + $0x8b4] sm:$0xf]
  %v843 = vld [vmem:[%s1 + $0x8b8] sm:$0xff]
  %v844 = vld [vmem:[%s1 + $0x8c0] sm:$0xf]
  %v845 = vld [vmem:[%s1 + $0x8c4] sm:$0xff]
  %v846 = vld [vmem:[%s1 + $0x8cc] sm:$0xf]
  %v847 = vld [vmem:[%s1 + $0x8d0] sm:$0xff]
  %v848 = vld [vmem:[%s1 + $0x8d8] sm:$0xf]
  %v849 = vld [vmem:[%s1 + $0x8dc] sm:$0xff]
  %v850 = vld [vmem:[%s1 + $0x8e4] sm:$0xf]
  %v851 = vld [vmem:[%s1 + $0x8e8] sm:$0xff]
  %v852 = vld [vmem:[%s1 + $0x8f0] sm:$0xf]
  %v853 = vld [vmem:[%s1 + $0x8f4] sm:$0xff]
  %v854 = vld [vmem:[%s1 + $0x8fc] sm:$0xf]
  %v855 = vld [vmem:[%s2] sm:$0x7]
  %v857 = vlaneseq
  %v858 = vshrl.u32 %v857, 7
  %v859 = vsub.s32 0, %v858
  %v860 = vrot.slane %v855, %v859
  %v861 = vlaneseq
  %v862 = vshrl.u32 %v861, 7
  %v863 = vsub.s32 1, %v862
  %v864 = vrot.slane %v855, %v863
  %v865 = vlaneseq
  %v866 = vshrl.u32 %v865, 7
  %v867 = vsub.s32 2, %v866
  %v868 = vrot.slane %v855, %v867
  %v1256 = vunpack.c.l.b16 %v471
  %v1257 = vunpack.c.h.b16 %v471
  %v1258 = vunpack.c.l.b16 %v472
  %v1259 = vunpack.c.l.b16 %v473
  %v1260 = vunpack.c.h.b16 %v473
  %v1261 = vunpack.c.l.b16 %v474
  %v1262 = vunpack.c.l.b16 %v475
  %v1263 = vunpack.c.h.b16 %v475
  %v1264 = vunpack.c.l.b16 %v476
  %v1265 = vunpack.c.l.b16 %v477
  %v1266 = vunpack.c.h.b16 %v477
  %v1267 = vunpack.c.l.b16 %v478
  %v1268 = vunpack.c.l.b16 %v479
  %v1269 = vunpack.c.h.b16 %v479
  %v1270 = vunpack.c.l.b16 %v480
  %v1271 = vunpack.c.l.b16 %v481
  %v1272 = vunpack.c.h.b16 %v481
  %v1273 = vunpack.c.l.b16 %v482
  %v1274 = vunpack.c.l.b16 %v483
  %v1275 = vunpack.c.h.b16 %v483
  %v1276 = vunpack.c.l.b16 %v484
  %v1277 = vunpack.c.l.b16 %v485
  %v1278 = vunpack.c.h.b16 %v485
  %v1279 = vunpack.c.l.b16 %v486
  %v1280 = vunpack.c.l.b16 %v487
  %v1281 = vunpack.c.h.b16 %v487
  %v1282 = vunpack.c.l.b16 %v488
  %v1283 = vunpack.c.l.b16 %v489
  %v1284 = vunpack.c.h.b16 %v489
  %v1285 = vunpack.c.l.b16 %v490
  %v1286 = vunpack.c.l.b16 %v491
  %v1287 = vunpack.c.h.b16 %v491
  %v1288 = vunpack.c.l.b16 %v492
  %v1289 = vunpack.c.l.b16 %v493
  %v1290 = vunpack.c.h.b16 %v493
  %v1291 = vunpack.c.l.b16 %v494
  %v1292 = vunpack.c.l.b16 %v495
  %v1293 = vunpack.c.h.b16 %v495
  %v1294 = vunpack.c.l.b16 %v496
  %v1295 = vunpack.c.l.b16 %v497
  %v1296 = vunpack.c.h.b16 %v497
  %v1297 = vunpack.c.l.b16 %v498
  %v1298 = vunpack.c.l.b16 %v499
  %v1299 = vunpack.c.h.b16 %v499
  %v1300 = vunpack.c.l.b16 %v500
  %v1301 = vunpack.c.l.b16 %v501
  %v1302 = vunpack.c.h.b16 %v501
  %v1303 = vunpack.c.l.b16 %v502
  %v1304 = vunpack.c.l.b16 %v503
  %v1305 = vunpack.c.h.b16 %v503
  %v1306 = vunpack.c.l.b16 %v504
  %v1307 = vunpack.c.l.b16 %v505
  %v1308 = vunpack.c.h.b16 %v505
  %v1309 = vunpack.c.l.b16 %v506
  %v1310 = vunpack.c.l.b16 %v507
  %v1311 = vunpack.c.h.b16 %v507
  %v1312 = vunpack.c.l.b16 %v508
  %v1313 = vunpack.c.l.b16 %v509
  %v1314 = vunpack.c.h.b16 %v509
  %v1315 = vunpack.c.l.b16 %v510
  %v1316 = vunpack.c.l.b16 %v511
  %v1317 = vunpack.c.h.b16 %v511
  %v1318 = vunpack.c.l.b16 %v512
  %v1319 = vunpack.c.l.b16 %v513
  %v1320 = vunpack.c.h.b16 %v513
  %v1321 = vunpack.c.l.b16 %v514
  %v1322 = vunpack.c.l.b16 %v515
  %v1323 = vunpack.c.h.b16 %v515
  %v1324 = vunpack.c.l.b16 %v516
  %v1325 = vunpack.c.l.b16 %v517
  %v1326 = vunpack.c.h.b16 %v517
  %v1327 = vunpack.c.l.b16 %v518
  %v1328 = vunpack.c.l.b16 %v519
  %v1329 = vunpack.c.h.b16 %v519
  %v1330 = vunpack.c.l.b16 %v520
  %v1331 = vunpack.c.l.b16 %v521
  %v1332 = vunpack.c.h.b16 %v521
  %v1333 = vunpack.c.l.b16 %v522
  %v1334 = vunpack.c.l.b16 %v523
  %v1335 = vunpack.c.h.b16 %v523
  %v1336 = vunpack.c.l.b16 %v524
  %v1337 = vunpack.c.l.b16 %v525
  %v1338 = vunpack.c.h.b16 %v525
  %v1339 = vunpack.c.l.b16 %v526
  %v1340 = vunpack.c.l.b16 %v527
  %v1341 = vunpack.c.h.b16 %v527
  %v1342 = vunpack.c.l.b16 %v528
  %v1343 = vunpack.c.l.b16 %v529
  %v1344 = vunpack.c.h.b16 %v529
  %v1345 = vunpack.c.l.b16 %v530
  %v1346 = vunpack.c.l.b16 %v531
  %v1347 = vunpack.c.h.b16 %v531
  %v1348 = vunpack.c.l.b16 %v532
  %v1349 = vunpack.c.l.b16 %v533
  %v1350 = vunpack.c.h.b16 %v533
  %v1351 = vunpack.c.l.b16 %v534
  %v1352 = vunpack.c.l.b16 %v535
  %v1353 = vunpack.c.h.b16 %v535
  %v1354 = vunpack.c.l.b16 %v536
  %v1355 = vunpack.c.l.b16 %v537
  %v1356 = vunpack.c.h.b16 %v537
  %v1357 = vunpack.c.l.b16 %v538
  %v1358 = vunpack.c.l.b16 %v539
  %v1359 = vunpack.c.h.b16 %v539
  %v1360 = vunpack.c.l.b16 %v540
  %v1361 = vunpack.c.l.b16 %v541
  %v1362 = vunpack.c.h.b16 %v541
  %v1363 = vunpack.c.l.b16 %v542
  %v1364 = vunpack.c.l.b16 %v543
  %v1365 = vunpack.c.h.b16 %v543
  %v1366 = vunpack.c.l.b16 %v544
  %v1367 = vunpack.c.l.b16 %v545
  %v1368 = vunpack.c.h.b16 %v545
  %v1369 = vunpack.c.l.b16 %v546
  %v1370 = vunpack.c.l.b16 %v547
  %v1371 = vunpack.c.h.b16 %v547
  %v1372 = vunpack.c.l.b16 %v548
  %v1373 = vunpack.c.l.b16 %v549
  %v1374 = vunpack.c.h.b16 %v549
  %v1375 = vunpack.c.l.b16 %v550
  %v1376 = vunpack.c.l.b16 %v551
  %v1377 = vunpack.c.h.b16 %v551
  %v1378 = vunpack.c.l.b16 %v552
  %v1379 = vunpack.c.l.b16 %v553
  %v1380 = vunpack.c.h.b16 %v553
  %v1381 = vunpack.c.l.b16 %v554
  %v1382 = vunpack.c.l.b16 %v555
  %v1383 = vunpack.c.h.b16 %v555
  %v1384 = vunpack.c.l.b16 %v556
  %v1385 = vunpack.c.l.b16 %v557
  %v1386 = vunpack.c.h.b16 %v557
  %v1387 = vunpack.c.l.b16 %v558
  %v1388 = vunpack.c.l.b16 %v559
  %v1389 = vunpack.c.h.b16 %v559
  %v1390 = vunpack.c.l.b16 %v560
  %v1391 = vunpack.c.l.b16 %v561
  %v1392 = vunpack.c.h.b16 %v561
  %v1393 = vunpack.c.l.b16 %v562
  %v1394 = vunpack.c.l.b16 %v563
  %v1395 = vunpack.c.h.b16 %v563
  %v1396 = vunpack.c.l.b16 %v564
  %v1397 = vunpack.c.l.b16 %v565
  %v1398 = vunpack.c.h.b16 %v565
  %v1399 = vunpack.c.l.b16 %v566
  %v1400 = vunpack.c.l.b16 %v567
  %v1401 = vunpack.c.h.b16 %v567
  %v1402 = vunpack.c.l.b16 %v568
  %v1403 = vunpack.c.l.b16 %v569
  %v1404 = vunpack.c.h.b16 %v569
  %v1405 = vunpack.c.l.b16 %v570
  %v1406 = vunpack.c.l.b16 %v571
  %v1407 = vunpack.c.h.b16 %v571
  %v1408 = vunpack.c.l.b16 %v572
  %v1409 = vunpack.c.l.b16 %v573
  %v1410 = vunpack.c.h.b16 %v573
  %v1411 = vunpack.c.l.b16 %v574
  %v1412 = vunpack.c.l.b16 %v575
  %v1413 = vunpack.c.h.b16 %v575
  %v1414 = vunpack.c.l.b16 %v576
  %v1415 = vunpack.c.l.b16 %v577
  %v1416 = vunpack.c.h.b16 %v577
  %v1417 = vunpack.c.l.b16 %v578
  %v1418 = vunpack.c.l.b16 %v579
  %v1419 = vunpack.c.h.b16 %v579
  %v1420 = vunpack.c.l.b16 %v580
  %v1421 = vunpack.c.l.b16 %v581
  %v1422 = vunpack.c.h.b16 %v581
  %v1423 = vunpack.c.l.b16 %v582
  %v1424 = vunpack.c.l.b16 %v583
  %v1425 = vunpack.c.h.b16 %v583
  %v1426 = vunpack.c.l.b16 %v584
  %v1427 = vunpack.c.l.b16 %v585
  %v1428 = vunpack.c.h.b16 %v585
  %v1429 = vunpack.c.l.b16 %v586
  %v1430 = vunpack.c.l.b16 %v587
  %v1431 = vunpack.c.h.b16 %v587
  %v1432 = vunpack.c.l.b16 %v588
  %v1433 = vunpack.c.l.b16 %v589
  %v1434 = vunpack.c.h.b16 %v589
  %v1435 = vunpack.c.l.b16 %v590
  %v1436 = vunpack.c.l.b16 %v591
  %v1437 = vunpack.c.h.b16 %v591
  %v1438 = vunpack.c.l.b16 %v592
  %v1439 = vunpack.c.l.b16 %v593
  %v1440 = vunpack.c.h.b16 %v593
  %v1441 = vunpack.c.l.b16 %v594
  %v1442 = vunpack.c.l.b16 %v595
  %v1443 = vunpack.c.h.b16 %v595
  %v1444 = vunpack.c.l.b16 %v596
  %v1445 = vunpack.c.l.b16 %v597
  %v1446 = vunpack.c.h.b16 %v597
  %v1447 = vunpack.c.l.b16 %v598
  %v1448 = vunpack.c.l.b16 %v599
  %v1449 = vunpack.c.h.b16 %v599
  %v1450 = vunpack.c.l.b16 %v600
  %v1451 = vunpack.c.l.b16 %v601
  %v1452 = vunpack.c.h.b16 %v601
  %v1453 = vunpack.c.l.b16 %v602
  %v1454 = vunpack.c.l.b16 %v603
  %v1455 = vunpack.c.h.b16 %v603
  %v1456 = vunpack.c.l.b16 %v604
  %v1457 = vunpack.c.l.b16 %v605
  %v1458 = vunpack.c.h.b16 %v605
  %v1459 = vunpack.c.l.b16 %v606
  %v1460 = vunpack.c.l.b16 %v607
  %v1461 = vunpack.c.h.b16 %v607
  %v1462 = vunpack.c.l.b16 %v608
  %v1463 = vunpack.c.l.b16 %v609
  %v1464 = vunpack.c.h.b16 %v609
  %v1465 = vunpack.c.l.b16 %v610
  %v1466 = vunpack.c.l.b16 %v611
  %v1467 = vunpack.c.h.b16 %v611
  %v1468 = vunpack.c.l.b16 %v612
  %v1469 = vunpack.c.l.b16 %v613
  %v1470 = vunpack.c.h.b16 %v613
  %v1471 = vunpack.c.l.b16 %v614
  %v1472 = vunpack.c.l.b16 %v615
  %v1473 = vunpack.c.h.b16 %v615
  %v1474 = vunpack.c.l.b16 %v616
  %v1475 = vunpack.c.l.b16 %v617
  %v1476 = vunpack.c.h.b16 %v617
  %v1477 = vunpack.c.l.b16 %v618
  %v1478 = vunpack.c.l.b16 %v619
  %v1479 = vunpack.c.h.b16 %v619
  %v1480 = vunpack.c.l.b16 %v620
  %v1481 = vunpack.c.l.b16 %v621
  %v1482 = vunpack.c.h.b16 %v621
  %v1483 = vunpack.c.l.b16 %v622
  %v1484 = vunpack.c.l.b16 %v623
  %v1485 = vunpack.c.h.b16 %v623
  %v1486 = vunpack.c.l.b16 %v624
  %v1487 = vunpack.c.l.b16 %v625
  %v1488 = vunpack.c.h.b16 %v625
  %v1489 = vunpack.c.l.b16 %v626
  %v1490 = vunpack.c.l.b16 %v627
  %v1491 = vunpack.c.h.b16 %v627
  %v1492 = vunpack.c.l.b16 %v628
  %v1493 = vunpack.c.l.b16 %v629
  %v1494 = vunpack.c.h.b16 %v629
  %v1495 = vunpack.c.l.b16 %v630
  %v1496 = vunpack.c.l.b16 %v631
  %v1497 = vunpack.c.h.b16 %v631
  %v1498 = vunpack.c.l.b16 %v632
  %v1499 = vunpack.c.l.b16 %v633
  %v1500 = vunpack.c.h.b16 %v633
  %v1501 = vunpack.c.l.b16 %v634
  %v1502 = vunpack.c.l.b16 %v635
  %v1503 = vunpack.c.h.b16 %v635
  %v1504 = vunpack.c.l.b16 %v636
  %v1505 = vunpack.c.l.b16 %v637
  %v1506 = vunpack.c.h.b16 %v637
  %v1507 = vunpack.c.l.b16 %v638
  %v1508 = vunpack.c.l.b16 %v639
  %v1509 = vunpack.c.h.b16 %v639
  %v1510 = vunpack.c.l.b16 %v640
  %v1511 = vunpack.c.l.b16 %v641
  %v1512 = vunpack.c.h.b16 %v641
  %v1513 = vunpack.c.l.b16 %v642
  %v1514 = vunpack.c.l.b16 %v643
  %v1515 = vunpack.c.h.b16 %v643
  %v1516 = vunpack.c.l.b16 %v644
  %v1517 = vunpack.c.l.b16 %v645
  %v1518 = vunpack.c.h.b16 %v645
  %v1519 = vunpack.c.l.b16 %v646
  %v1520 = vunpack.c.l.b16 %v647
  %v1521 = vunpack.c.h.b16 %v647
  %v1522 = vunpack.c.l.b16 %v648
  %v1523 = vunpack.c.l.b16 %v649
  %v1524 = vunpack.c.h.b16 %v649
  %v1525 = vunpack.c.l.b16 %v650
  %v1526 = vunpack.c.l.b16 %v651
  %v1527 = vunpack.c.h.b16 %v651
  %v1528 = vunpack.c.l.b16 %v652
  %v1529 = vunpack.c.l.b16 %v653
  %v1530 = vunpack.c.h.b16 %v653
  %v1531 = vunpack.c.l.b16 %v654
  %v1532 = vunpack.c.l.b16 %v655
  %v1533 = vunpack.c.h.b16 %v655
  %v1534 = vunpack.c.l.b16 %v656
  %v1535 = vunpack.c.l.b16 %v657
  %v1536 = vunpack.c.h.b16 %v657
  %v1537 = vunpack.c.l.b16 %v658
  %v1538 = vunpack.c.l.b16 %v659
  %v1539 = vunpack.c.h.b16 %v659
  %v1540 = vunpack.c.l.b16 %v660
  %v1541 = vunpack.c.l.b16 %v661
  %v1542 = vunpack.c.h.b16 %v661
  %v1543 = vunpack.c.l.b16 %v662
  %v1544 = vunpack.c.l.b16 %v663
  %v1545 = vunpack.c.h.b16 %v663
  %v1546 = vunpack.c.l.b16 %v664
  %v1547 = vunpack.c.l.b16 %v665
  %v1548 = vunpack.c.h.b16 %v665
  %v1549 = vunpack.c.l.b16 %v666
  %v1550 = vunpack.c.l.b16 %v667
  %v1551 = vunpack.c.h.b16 %v667
  %v1552 = vunpack.c.l.b16 %v668
  %v1553 = vunpack.c.l.b16 %v669
  %v1554 = vunpack.c.h.b16 %v669
  %v1555 = vunpack.c.l.b16 %v670
  %v1556 = vunpack.c.l.b16 %v671
  %v1557 = vunpack.c.h.b16 %v671
  %v1558 = vunpack.c.l.b16 %v672
  %v1559 = vunpack.c.l.b16 %v673
  %v1560 = vunpack.c.h.b16 %v673
  %v1561 = vunpack.c.l.b16 %v674
  %v1562 = vunpack.c.l.b16 %v675
  %v1563 = vunpack.c.h.b16 %v675
  %v1564 = vunpack.c.l.b16 %v676
  %v1565 = vunpack.c.l.b16 %v677
  %v1566 = vunpack.c.h.b16 %v677
  %v1567 = vunpack.c.l.b16 %v678
  %v1568 = vunpack.c.l.b16 %v679
  %v1569 = vunpack.c.h.b16 %v679
  %v1570 = vunpack.c.l.b16 %v680
  %v1571 = vunpack.c.l.b16 %v681
  %v1572 = vunpack.c.h.b16 %v681
  %v1573 = vunpack.c.l.b16 %v682
  %v1574 = vunpack.c.l.b16 %v683
  %v1575 = vunpack.c.h.b16 %v683
  %v1576 = vunpack.c.l.b16 %v684
  %v1577 = vunpack.c.l.b16 %v685
  %v1578 = vunpack.c.h.b16 %v685
  %v1579 = vunpack.c.l.b16 %v686
  %v1580 = vunpack.c.l.b16 %v687
  %v1581 = vunpack.c.h.b16 %v687
  %v1582 = vunpack.c.l.b16 %v688
  %v1583 = vunpack.c.l.b16 %v689
  %v1584 = vunpack.c.h.b16 %v689
  %v1585 = vunpack.c.l.b16 %v690
  %v1586 = vunpack.c.l.b16 %v691
  %v1587 = vunpack.c.h.b16 %v691
  %v1588 = vunpack.c.l.b16 %v692
  %v1589 = vunpack.c.l.b16 %v693
  %v1590 = vunpack.c.h.b16 %v693
  %v1591 = vunpack.c.l.b16 %v694
  %v1592 = vunpack.c.l.b16 %v695
  %v1593 = vunpack.c.h.b16 %v695
  %v1594 = vunpack.c.l.b16 %v696
  %v1595 = vunpack.c.l.b16 %v697
  %v1596 = vunpack.c.h.b16 %v697
  %v1597 = vunpack.c.l.b16 %v698
  %v1598 = vunpack.c.l.b16 %v699
  %v1599 = vunpack.c.h.b16 %v699
  %v1600 = vunpack.c.l.b16 %v700
  %v1601 = vunpack.c.l.b16 %v701
  %v1602 = vunpack.c.h.b16 %v701
  %v1603 = vunpack.c.l.b16 %v702
  %v1604 = vunpack.c.l.b16 %v703
  %v1605 = vunpack.c.h.b16 %v703
  %v1606 = vunpack.c.l.b16 %v704
  %v1607 = vunpack.c.l.b16 %v705
  %v1608 = vunpack.c.h.b16 %v705
  %v1609 = vunpack.c.l.b16 %v706
  %v1610 = vunpack.c.l.b16 %v707
  %v1611 = vunpack.c.h.b16 %v707
  %v1612 = vunpack.c.l.b16 %v708
  %v1613 = vunpack.c.l.b16 %v709
  %v1614 = vunpack.c.h.b16 %v709
  %v1615 = vunpack.c.l.b16 %v710
  %v1616 = vunpack.c.l.b16 %v711
  %v1617 = vunpack.c.h.b16 %v711
  %v1618 = vunpack.c.l.b16 %v712
  %v1619 = vunpack.c.l.b16 %v713
  %v1620 = vunpack.c.h.b16 %v713
  %v1621 = vunpack.c.l.b16 %v714
  %v1622 = vunpack.c.l.b16 %v715
  %v1623 = vunpack.c.h.b16 %v715
  %v1624 = vunpack.c.l.b16 %v716
  %v1625 = vunpack.c.l.b16 %v717
  %v1626 = vunpack.c.h.b16 %v717
  %v1627 = vunpack.c.l.b16 %v718
  %v1628 = vunpack.c.l.b16 %v719
  %v1629 = vunpack.c.h.b16 %v719
  %v1630 = vunpack.c.l.b16 %v720
  %v1631 = vunpack.c.l.b16 %v721
  %v1632 = vunpack.c.h.b16 %v721
  %v1633 = vunpack.c.l.b16 %v722
  %v1634 = vunpack.c.l.b16 %v723
  %v1635 = vunpack.c.h.b16 %v723
  %v1636 = vunpack.c.l.b16 %v724
  %v1637 = vunpack.c.l.b16 %v725
  %v1638 = vunpack.c.h.b16 %v725
  %v1639 = vunpack.c.l.b16 %v726
  %v1640 = vunpack.c.l.b16 %v727
  %v1641 = vunpack.c.h.b16 %v727
  %v1642 = vunpack.c.l.b16 %v728
  %v1643 = vunpack.c.l.b16 %v729
  %v1644 = vunpack.c.h.b16 %v729
  %v1645 = vunpack.c.l.b16 %v730
  %v1646 = vunpack.c.l.b16 %v731
  %v1647 = vunpack.c.h.b16 %v731
  %v1648 = vunpack.c.l.b16 %v732
  %v1649 = vunpack.c.l.b16 %v733
  %v1650 = vunpack.c.h.b16 %v733
  %v1651 = vunpack.c.l.b16 %v734
  %v1652 = vunpack.c.l.b16 %v735
  %v1653 = vunpack.c.h.b16 %v735
  %v1654 = vunpack.c.l.b16 %v736
  %v1655 = vunpack.c.l.b16 %v737
  %v1656 = vunpack.c.h.b16 %v737
  %v1657 = vunpack.c.l.b16 %v738
  %v1658 = vunpack.c.l.b16 %v739
  %v1659 = vunpack.c.h.b16 %v739
  %v1660 = vunpack.c.l.b16 %v740
  %v1661 = vunpack.c.l.b16 %v741
  %v1662 = vunpack.c.h.b16 %v741
  %v1663 = vunpack.c.l.b16 %v742
  %v1664 = vunpack.c.l.b16 %v743
  %v1665 = vunpack.c.h.b16 %v743
  %v1666 = vunpack.c.l.b16 %v744
  %v1667 = vunpack.c.l.b16 %v745
  %v1668 = vunpack.c.h.b16 %v745
  %v1669 = vunpack.c.l.b16 %v746
  %v1670 = vunpack.c.l.b16 %v747
  %v1671 = vunpack.c.h.b16 %v747
  %v1672 = vunpack.c.l.b16 %v748
  %v1673 = vunpack.c.l.b16 %v749
  %v1674 = vunpack.c.h.b16 %v749
  %v1675 = vunpack.c.l.b16 %v750
  %v1676 = vunpack.c.l.b16 %v751
  %v1677 = vunpack.c.h.b16 %v751
  %v1678 = vunpack.c.l.b16 %v752
  %v1679 = vunpack.c.l.b16 %v753
  %v1680 = vunpack.c.h.b16 %v753
  %v1681 = vunpack.c.l.b16 %v754
  %v1682 = vunpack.c.l.b16 %v755
  %v1683 = vunpack.c.h.b16 %v755
  %v1684 = vunpack.c.l.b16 %v756
  %v1685 = vunpack.c.l.b16 %v757
  %v1686 = vunpack.c.h.b16 %v757
  %v1687 = vunpack.c.l.b16 %v758
  %v1688 = vunpack.c.l.b16 %v759
  %v1689 = vunpack.c.h.b16 %v759
  %v1690 = vunpack.c.l.b16 %v760
  %v1691 = vunpack.c.l.b16 %v761
  %v1692 = vunpack.c.h.b16 %v761
  %v1693 = vunpack.c.l.b16 %v762
  %v1694 = vunpack.c.l.b16 %v763
  %v1695 = vunpack.c.h.b16 %v763
  %v1696 = vunpack.c.l.b16 %v764
  %v1697 = vunpack.c.l.b16 %v765
  %v1698 = vunpack.c.h.b16 %v765
  %v1699 = vunpack.c.l.b16 %v766
  %v1700 = vunpack.c.l.b16 %v767
  %v1701 = vunpack.c.h.b16 %v767
  %v1702 = vunpack.c.l.b16 %v768
  %v1703 = vunpack.c.l.b16 %v769
  %v1704 = vunpack.c.h.b16 %v769
  %v1705 = vunpack.c.l.b16 %v770
  %v1706 = vunpack.c.l.b16 %v771
  %v1707 = vunpack.c.h.b16 %v771
  %v1708 = vunpack.c.l.b16 %v772
  %v1709 = vunpack.c.l.b16 %v773
  %v1710 = vunpack.c.h.b16 %v773
  %v1711 = vunpack.c.l.b16 %v774
  %v1712 = vunpack.c.l.b16 %v775
  %v1713 = vunpack.c.h.b16 %v775
  %v1714 = vunpack.c.l.b16 %v776
  %v1715 = vunpack.c.l.b16 %v777
  %v1716 = vunpack.c.h.b16 %v777
  %v1717 = vunpack.c.l.b16 %v778
  %v1718 = vunpack.c.l.b16 %v779
  %v1719 = vunpack.c.h.b16 %v779
  %v1720 = vunpack.c.l.b16 %v780
  %v1721 = vunpack.c.l.b16 %v781
  %v1722 = vunpack.c.h.b16 %v781
  %v1723 = vunpack.c.l.b16 %v782
  %v1724 = vunpack.c.l.b16 %v783
  %v1725 = vunpack.c.h.b16 %v783
  %v1726 = vunpack.c.l.b16 %v784
  %v1727 = vunpack.c.l.b16 %v785
  %v1728 = vunpack.c.h.b16 %v785
  %v1729 = vunpack.c.l.b16 %v786
  %v1730 = vunpack.c.l.b16 %v787
  %v1731 = vunpack.c.h.b16 %v787
  %v1732 = vunpack.c.l.b16 %v788
  %v1733 = vunpack.c.l.b16 %v789
  %v1734 = vunpack.c.h.b16 %v789
  %v1735 = vunpack.c.l.b16 %v790
  %v1736 = vunpack.c.l.b16 %v791
  %v1737 = vunpack.c.h.b16 %v791
  %v1738 = vunpack.c.l.b16 %v792
  %v1739 = vunpack.c.l.b16 %v793
  %v1740 = vunpack.c.h.b16 %v793
  %v1741 = vunpack.c.l.b16 %v794
  %v1742 = vunpack.c.l.b16 %v795
  %v1743 = vunpack.c.h.b16 %v795
  %v1744 = vunpack.c.l.b16 %v796
  %v1745 = vunpack.c.l.b16 %v797
  %v1746 = vunpack.c.h.b16 %v797
  %v1747 = vunpack.c.l.b16 %v798
  %v1748 = vunpack.c.l.b16 %v799
  %v1749 = vunpack.c.h.b16 %v799
  %v1750 = vunpack.c.l.b16 %v800
  %v1751 = vunpack.c.l.b16 %v801
  %v1752 = vunpack.c.h.b16 %v801
  %v1753 = vunpack.c.l.b16 %v802
  %v1754 = vunpack.c.l.b16 %v803
  %v1755 = vunpack.c.h.b16 %v803
  %v1756 = vunpack.c.l.b16 %v804
  %v1757 = vunpack.c.l.b16 %v805
  %v1758 = vunpack.c.h.b16 %v805
  %v1759 = vunpack.c.l.b16 %v806
  %v1760 = vunpack.c.l.b16 %v807
  %v1761 = vunpack.c.h.b16 %v807
  %v1762 = vunpack.c.l.b16 %v808
  %v1763 = vunpack.c.l.b16 %v809
  %v1764 = vunpack.c.h.b16 %v809
  %v1765 = vunpack.c.l.b16 %v810
  %v1766 = vunpack.c.l.b16 %v811
  %v1767 = vunpack.c.h.b16 %v811
  %v1768 = vunpack.c.l.b16 %v812
  %v1769 = vunpack.c.l.b16 %v813
  %v1770 = vunpack.c.h.b16 %v813
  %v1771 = vunpack.c.l.b16 %v814
  %v1772 = vunpack.c.l.b16 %v815
  %v1773 = vunpack.c.h.b16 %v815
  %v1774 = vunpack.c.l.b16 %v816
  %v1775 = vunpack.c.l.b16 %v817
  %v1776 = vunpack.c.h.b16 %v817
  %v1777 = vunpack.c.l.b16 %v818
  %v1778 = vunpack.c.l.b16 %v819
  %v1779 = vunpack.c.h.b16 %v819
  %v1780 = vunpack.c.l.b16 %v820
  %v1781 = vunpack.c.l.b16 %v821
  %v1782 = vunpack.c.h.b16 %v821
  %v1783 = vunpack.c.l.b16 %v822
  %v1784 = vunpack.c.l.b16 %v823
  %v1785 = vunpack.c.h.b16 %v823
  %v1786 = vunpack.c.l.b16 %v824
  %v1787 = vunpack.c.l.b16 %v825
  %v1788 = vunpack.c.h.b16 %v825
  %v1789 = vunpack.c.l.b16 %v826
  %v1790 = vunpack.c.l.b16 %v827
  %v1791 = vunpack.c.h.b16 %v827
  %v1792 = vunpack.c.l.b16 %v828
  %v1793 = vunpack.c.l.b16 %v829
  %v1794 = vunpack.c.h.b16 %v829
  %v1795 = vunpack.c.l.b16 %v830
  %v1796 = vunpack.c.l.b16 %v831
  %v1797 = vunpack.c.h.b16 %v831
  %v1798 = vunpack.c.l.b16 %v832
  %v1799 = vunpack.c.l.b16 %v833
  %v1800 = vunpack.c.h.b16 %v833
  %v1801 = vunpack.c.l.b16 %v834
  %v1802 = vunpack.c.l.b16 %v835
  %v1803 = vunpack.c.h.b16 %v835
  %v1804 = vunpack.c.l.b16 %v836
  %v1805 = vunpack.c.l.b16 %v837
  %v1806 = vunpack.c.h.b16 %v837
  %v1807 = vunpack.c.l.b16 %v838
  %v1808 = vunpack.c.l.b16 %v839
  %v1809 = vunpack.c.h.b16 %v839
  %v1810 = vunpack.c.l.b16 %v840
  %v1811 = vunpack.c.l.b16 %v841
  %v1812 = vunpack.c.h.b16 %v841
  %v1813 = vunpack.c.l.b16 %v842
  %v1814 = vunpack.c.l.b16 %v843
  %v1815 = vunpack.c.h.b16 %v843
  %v1816 = vunpack.c.l.b16 %v844
  %v1817 = vunpack.c.l.b16 %v845
  %v1818 = vunpack.c.h.b16 %v845
  %v1819 = vunpack.c.l.b16 %v846
  %v1820 = vunpack.c.l.b16 %v847
  %v1821 = vunpack.c.h.b16 %v847
  %v1822 = vunpack.c.l.b16 %v848
  %v1823 = vunpack.c.l.b16 %v849
  %v1824 = vunpack.c.h.b16 %v849
  %v1825 = vunpack.c.l.b16 %v850
  %v1826 = vunpack.c.l.b16 %v851
  %v1827 = vunpack.c.h.b16 %v851
  %v1828 = vunpack.c.l.b16 %v852
  %v1829 = vunpack.c.l.b16 %v853
  %v1830 = vunpack.c.h.b16 %v853
  %v1831 = vunpack.c.l.b16 %v854
  %v1832 = vpack.c.b16 %v1259, %v1256
  %v1833 = vpack.c.b16 %v1260, %v1257
  %v1834 = vpack.c.b16 %v1261, %v1258
  %v1835 = vpack.c.b16 %v1265, %v1262
  %v1836 = vpack.c.b16 %v1266, %v1263
  %v1837 = vpack.c.b16 %v1267, %v1264
  %v1838 = vpack.c.b16 %v1271, %v1268
  %v1839 = vpack.c.b16 %v1272, %v1269
  %v1840 = vpack.c.b16 %v1273, %v1270
  %v1841 = vpack.c.b16 %v1277, %v1274
  %v1842 = vpack.c.b16 %v1278, %v1275
  %v1843 = vpack.c.b16 %v1279, %v1276
  %v1844 = vpack.c.b16 %v1283, %v1280
  %v1845 = vpack.c.b16 %v1284, %v1281
  %v1846 = vpack.c.b16 %v1285, %v1282
  %v1847 = vpack.c.b16 %v1289, %v1286
  %v1848 = vpack.c.b16 %v1290, %v1287
  %v1849 = vpack.c.b16 %v1291, %v1288
  %v1850 = vpack.c.b16 %v1295, %v1292
  %v1851 = vpack.c.b16 %v1296, %v1293
  %v1852 = vpack.c.b16 %v1297, %v1294
  %v1853 = vpack.c.b16 %v1301, %v1298
  %v1854 = vpack.c.b16 %v1302, %v1299
  %v1855 = vpack.c.b16 %v1303, %v1300
  %v1856 = vpack.c.b16 %v1307, %v1304
  %v1857 = vpack.c.b16 %v1308, %v1305
  %v1858 = vpack.c.b16 %v1309, %v1306
  %v1859 = vpack.c.b16 %v1313, %v1310
  %v1860 = vpack.c.b16 %v1314, %v1311
  %v1861 = vpack.c.b16 %v1315, %v1312
  %v1862 = vpack.c.b16 %v1319, %v1316
  %v1863 = vpack.c.b16 %v1320, %v1317
  %v1864 = vpack.c.b16 %v1321, %v1318
  %v1865 = vpack.c.b16 %v1325, %v1322
  %v1866 = vpack.c.b16 %v1326, %v1323
  %v1867 = vpack.c.b16 %v1327, %v1324
  %v1868 = vpack.c.b16 %v1331, %v1328
  %v1869 = vpack.c.b16 %v1332, %v1329
  %v1870 = vpack.c.b16 %v1333, %v1330
  %v1871 = vpack.c.b16 %v1337, %v1334
  %v1872 = vpack.c.b16 %v1338, %v1335
  %v1873 = vpack.c.b16 %v1339, %v1336
  %v1874 = vpack.c.b16 %v1343, %v1340
  %v1875 = vpack.c.b16 %v1344, %v1341
  %v1876 = vpack.c.b16 %v1345, %v1342
  %v1877 = vpack.c.b16 %v1349, %v1346
  %v1878 = vpack.c.b16 %v1350, %v1347
  %v1879 = vpack.c.b16 %v1351, %v1348
  %v1880 = vpack.c.b16 %v1355, %v1352
  %v1881 = vpack.c.b16 %v1356, %v1353
  %v1882 = vpack.c.b16 %v1357, %v1354
  %v1883 = vpack.c.b16 %v1361, %v1358
  %v1884 = vpack.c.b16 %v1362, %v1359
  %v1885 = vpack.c.b16 %v1363, %v1360
  %v1886 = vpack.c.b16 %v1367, %v1364
  %v1887 = vpack.c.b16 %v1368, %v1365
  %v1888 = vpack.c.b16 %v1369, %v1366
  %v1889 = vpack.c.b16 %v1373, %v1370
  %v1890 = vpack.c.b16 %v1374, %v1371
  %v1891 = vpack.c.b16 %v1375, %v1372
  %v1892 = vpack.c.b16 %v1379, %v1376
  %v1893 = vpack.c.b16 %v1380, %v1377
  %v1894 = vpack.c.b16 %v1381, %v1378
  %v1895 = vpack.c.b16 %v1385, %v1382
  %v1896 = vpack.c.b16 %v1386, %v1383
  %v1897 = vpack.c.b16 %v1387, %v1384
  %v1898 = vpack.c.b16 %v1391, %v1388
  %v1899 = vpack.c.b16 %v1392, %v1389
  %v1900 = vpack.c.b16 %v1393, %v1390
  %v1901 = vpack.c.b16 %v1397, %v1394
  %v1902 = vpack.c.b16 %v1398, %v1395
  %v1903 = vpack.c.b16 %v1399, %v1396
  %v1904 = vpack.c.b16 %v1403, %v1400
  %v1905 = vpack.c.b16 %v1404, %v1401
  %v1906 = vpack.c.b16 %v1405, %v1402
  %v1907 = vpack.c.b16 %v1409, %v1406
  %v1908 = vpack.c.b16 %v1410, %v1407
  %v1909 = vpack.c.b16 %v1411, %v1408
  %v1910 = vpack.c.b16 %v1415, %v1412
  %v1911 = vpack.c.b16 %v1416, %v1413
  %v1912 = vpack.c.b16 %v1417, %v1414
  %v1913 = vpack.c.b16 %v1421, %v1418
  %v1914 = vpack.c.b16 %v1422, %v1419
  %v1915 = vpack.c.b16 %v1423, %v1420
  %v1916 = vpack.c.b16 %v1427, %v1424
  %v1917 = vpack.c.b16 %v1428, %v1425
  %v1918 = vpack.c.b16 %v1429, %v1426
  %v1919 = vpack.c.b16 %v1433, %v1430
  %v1920 = vpack.c.b16 %v1434, %v1431
  %v1921 = vpack.c.b16 %v1435, %v1432
  %v1922 = vpack.c.b16 %v1439, %v1436
  %v1923 = vpack.c.b16 %v1440, %v1437
  %v1924 = vpack.c.b16 %v1441, %v1438
  %v1925 = vpack.c.b16 %v1445, %v1442
  %v1926 = vpack.c.b16 %v1446, %v1443
  %v1927 = vpack.c.b16 %v1447, %v1444
  %v1928 = vpack.c.b16 %v1451, %v1448
  %v1929 = vpack.c.b16 %v1452, %v1449
  %v1930 = vpack.c.b16 %v1453, %v1450
  %v1931 = vpack.c.b16 %v1457, %v1454
  %v1932 = vpack.c.b16 %v1458, %v1455
  %v1933 = vpack.c.b16 %v1459, %v1456
  %v1934 = vpack.c.b16 %v1463, %v1460
  %v1935 = vpack.c.b16 %v1464, %v1461
  %v1936 = vpack.c.b16 %v1465, %v1462
  %v1937 = vpack.c.b16 %v1469, %v1466
  %v1938 = vpack.c.b16 %v1470, %v1467
  %v1939 = vpack.c.b16 %v1471, %v1468
  %v1940 = vpack.c.b16 %v1475, %v1472
  %v1941 = vpack.c.b16 %v1476, %v1473
  %v1942 = vpack.c.b16 %v1477, %v1474
  %v1943 = vpack.c.b16 %v1481, %v1478
  %v1944 = vpack.c.b16 %v1482, %v1479
  %v1945 = vpack.c.b16 %v1483, %v1480
  %v1946 = vpack.c.b16 %v1487, %v1484
  %v1947 = vpack.c.b16 %v1488, %v1485
  %v1948 = vpack.c.b16 %v1489, %v1486
  %v1949 = vpack.c.b16 %v1493, %v1490
  %v1950 = vpack.c.b16 %v1494, %v1491
  %v1951 = vpack.c.b16 %v1495, %v1492
  %v1952 = vpack.c.b16 %v1499, %v1496
  %v1953 = vpack.c.b16 %v1500, %v1497
  %v1954 = vpack.c.b16 %v1501, %v1498
  %v1955 = vpack.c.b16 %v1505, %v1502
  %v1956 = vpack.c.b16 %v1506, %v1503
  %v1957 = vpack.c.b16 %v1507, %v1504
  %v1958 = vpack.c.b16 %v1511, %v1508
  %v1959 = vpack.c.b16 %v1512, %v1509
  %v1960 = vpack.c.b16 %v1513, %v1510
  %v1961 = vpack.c.b16 %v1517, %v1514
  %v1962 = vpack.c.b16 %v1518, %v1515
  %v1963 = vpack.c.b16 %v1519, %v1516
  %v1964 = vpack.c.b16 %v1523, %v1520
  %v1965 = vpack.c.b16 %v1524, %v1521
  %v1966 = vpack.c.b16 %v1525, %v1522
  %v1967 = vpack.c.b16 %v1529, %v1526
  %v1968 = vpack.c.b16 %v1530, %v1527
  %v1969 = vpack.c.b16 %v1531, %v1528
  %v1970 = vpack.c.b16 %v1535, %v1532
  %v1971 = vpack.c.b16 %v1536, %v1533
  %v1972 = vpack.c.b16 %v1537, %v1534
  %v1973 = vpack.c.b16 %v1541, %v1538
  %v1974 = vpack.c.b16 %v1542, %v1539
  %v1975 = vpack.c.b16 %v1543, %v1540
  %v1976 = vpack.c.b16 %v1547, %v1544
  %v1977 = vpack.c.b16 %v1548, %v1545
  %v1978 = vpack.c.b16 %v1549, %v1546
  %v1979 = vpack.c.b16 %v1553, %v1550
  %v1980 = vpack.c.b16 %v1554, %v1551
  %v1981 = vpack.c.b16 %v1555, %v1552
  %v1982 = vpack.c.b16 %v1559, %v1556
  %v1983 = vpack.c.b16 %v1560, %v1557
  %v1984 = vpack.c.b16 %v1561, %v1558
  %v1985 = vpack.c.b16 %v1565, %v1562
  %v1986 = vpack.c.b16 %v1566, %v1563
  %v1987 = vpack.c.b16 %v1567, %v1564
  %v1988 = vpack.c.b16 %v1571, %v1568
  %v1989 = vpack.c.b16 %v1572, %v1569
  %v1990 = vpack.c.b16 %v1573, %v1570
  %v1991 = vpack.c.b16 %v1577, %v1574
  %v1992 = vpack.c.b16 %v1578, %v1575
  %v1993 = vpack.c.b16 %v1579, %v1576
  %v1994 = vpack.c.b16 %v1583, %v1580
  %v1995 = vpack.c.b16 %v1584, %v1581
  %v1996 = vpack.c.b16 %v1585, %v1582
  %v1997 = vpack.c.b16 %v1589, %v1586
  %v1998 = vpack.c.b16 %v1590, %v1587
  %v1999 = vpack.c.b16 %v1591, %v1588
  %v2000 = vpack.c.b16 %v1595, %v1592
  %v2001 = vpack.c.b16 %v1596, %v1593
  %v2002 = vpack.c.b16 %v1597, %v1594
  %v2003 = vpack.c.b16 %v1601, %v1598
  %v2004 = vpack.c.b16 %v1602, %v1599
  %v2005 = vpack.c.b16 %v1603, %v1600
  %v2006 = vpack.c.b16 %v1607, %v1604
  %v2007 = vpack.c.b16 %v1608, %v1605
  %v2008 = vpack.c.b16 %v1609, %v1606
  %v2009 = vpack.c.b16 %v1613, %v1610
  %v2010 = vpack.c.b16 %v1614, %v1611
  %v2011 = vpack.c.b16 %v1615, %v1612
  %v2012 = vpack.c.b16 %v1619, %v1616
  %v2013 = vpack.c.b16 %v1620, %v1617
  %v2014 = vpack.c.b16 %v1621, %v1618
  %v2015 = vpack.c.b16 %v1625, %v1622
  %v2016 = vpack.c.b16 %v1626, %v1623
  %v2017 = vpack.c.b16 %v1627, %v1624
  %v2018 = vpack.c.b16 %v1631, %v1628
  %v2019 = vpack.c.b16 %v1632, %v1629
  %v2020 = vpack.c.b16 %v1633, %v1630
  %v2021 = vpack.c.b16 %v1637, %v1634
  %v2022 = vpack.c.b16 %v1638, %v1635
  %v2023 = vpack.c.b16 %v1639, %v1636
  %v2024 = vpack.c.b16 %v1643, %v1640
  %v2025 = vpack.c.b16 %v1644, %v1641
  %v2026 = vpack.c.b16 %v1645, %v1642
  %v2027 = vpack.c.b16 %v1649, %v1646
  %v2028 = vpack.c.b16 %v1650, %v1647
  %v2029 = vpack.c.b16 %v1651, %v1648
  %v2030 = vpack.c.b16 %v1655, %v1652
  %v2031 = vpack.c.b16 %v1656, %v1653
  %v2032 = vpack.c.b16 %v1657, %v1654
  %v2033 = vpack.c.b16 %v1661, %v1658
  %v2034 = vpack.c.b16 %v1662, %v1659
  %v2035 = vpack.c.b16 %v1663, %v1660
  %v2036 = vpack.c.b16 %v1667, %v1664
  %v2037 = vpack.c.b16 %v1668, %v1665
  %v2038 = vpack.c.b16 %v1669, %v1666
  %v2039 = vpack.c.b16 %v1673, %v1670
  %v2040 = vpack.c.b16 %v1674, %v1671
  %v2041 = vpack.c.b16 %v1675, %v1672
  %v2042 = vpack.c.b16 %v1679, %v1676
  %v2043 = vpack.c.b16 %v1680, %v1677
  %v2044 = vpack.c.b16 %v1681, %v1678
  %v2045 = vpack.c.b16 %v1685, %v1682
  %v2046 = vpack.c.b16 %v1686, %v1683
  %v2047 = vpack.c.b16 %v1687, %v1684
  %v2048 = vpack.c.b16 %v1691, %v1688
  %v2049 = vpack.c.b16 %v1692, %v1689
  %v2050 = vpack.c.b16 %v1693, %v1690
  %v2051 = vpack.c.b16 %v1697, %v1694
  %v2052 = vpack.c.b16 %v1698, %v1695
  %v2053 = vpack.c.b16 %v1699, %v1696
  %v2054 = vpack.c.b16 %v1703, %v1700
  %v2055 = vpack.c.b16 %v1704, %v1701
  %v2056 = vpack.c.b16 %v1705, %v1702
  %v2057 = vpack.c.b16 %v1709, %v1706
  %v2058 = vpack.c.b16 %v1710, %v1707
  %v2059 = vpack.c.b16 %v1711, %v1708
  %v2060 = vpack.c.b16 %v1715, %v1712
  %v2061 = vpack.c.b16 %v1716, %v1713
  %v2062 = vpack.c.b16 %v1717, %v1714
  %v2063 = vpack.c.b16 %v1721, %v1718
  %v2064 = vpack.c.b16 %v1722, %v1719
  %v2065 = vpack.c.b16 %v1723, %v1720
  %v2066 = vpack.c.b16 %v1727, %v1724
  %v2067 = vpack.c.b16 %v1728, %v1725
  %v2068 = vpack.c.b16 %v1729, %v1726
  %v2069 = vpack.c.b16 %v1733, %v1730
  %v2070 = vpack.c.b16 %v1734, %v1731
  %v2071 = vpack.c.b16 %v1735, %v1732
  %v2072 = vpack.c.b16 %v1739, %v1736
  %v2073 = vpack.c.b16 %v1740, %v1737
  %v2074 = vpack.c.b16 %v1741, %v1738
  %v2075 = vpack.c.b16 %v1745, %v1742
  %v2076 = vpack.c.b16 %v1746, %v1743
  %v2077 = vpack.c.b16 %v1747, %v1744
  %v2078 = vpack.c.b16 %v1751, %v1748
  %v2079 = vpack.c.b16 %v1752, %v1749
  %v2080 = vpack.c.b16 %v1753, %v1750
  %v2081 = vpack.c.b16 %v1757, %v1754
  %v2082 = vpack.c.b16 %v1758, %v1755
  %v2083 = vpack.c.b16 %v1759, %v1756
  %v2084 = vpack.c.b16 %v1763, %v1760
  %v2085 = vpack.c.b16 %v1764, %v1761
  %v2086 = vpack.c.b16 %v1765, %v1762
  %v2087 = vpack.c.b16 %v1769, %v1766
  %v2088 = vpack.c.b16 %v1770, %v1767
  %v2089 = vpack.c.b16 %v1771, %v1768
  %v2090 = vpack.c.b16 %v1775, %v1772
  %v2091 = vpack.c.b16 %v1776, %v1773
  %v2092 = vpack.c.b16 %v1777, %v1774
  %v2093 = vpack.c.b16 %v1781, %v1778
  %v2094 = vpack.c.b16 %v1782, %v1779
  %v2095 = vpack.c.b16 %v1783, %v1780
  %v2096 = vpack.c.b16 %v1787, %v1784
  %v2097 = vpack.c.b16 %v1788, %v1785
  %v2098 = vpack.c.b16 %v1789, %v1786
  %v2099 = vpack.c.b16 %v1793, %v1790
  %v2100 = vpack.c.b16 %v1794, %v1791
  %v2101 = vpack.c.b16 %v1795, %v1792
  %v2102 = vpack.c.b16 %v1799, %v1796
  %v2103 = vpack.c.b16 %v1800, %v1797
  %v2104 = vpack.c.b16 %v1801, %v1798
  %v2105 = vpack.c.b16 %v1805, %v1802
  %v2106 = vpack.c.b16 %v1806, %v1803
  %v2107 = vpack.c.b16 %v1807, %v1804
  %v2108 = vpack.c.b16 %v1811, %v1808
  %v2109 = vpack.c.b16 %v1812, %v1809
  %v2110 = vpack.c.b16 %v1813, %v1810
  %v2111 = vpack.c.b16 %v1817, %v1814
  %v2112 = vpack.c.b16 %v1818, %v1815
  %v2113 = vpack.c.b16 %v1819, %v1816
  %v2114 = vpack.c.b16 %v1823, %v1820
  %v2115 = vpack.c.b16 %v1824, %v1821
  %v2116 = vpack.c.b16 %v1825, %v1822
  %v2117 = vpack.c.b16 %v1829, %v1826
  %v2118 = vpack.c.b16 %v1830, %v1827
  %v2119 = vpack.c.b16 %v1831, %v1828
  %2408 = vmatprep.subr.bf16.mxu0 %v1854
  %2409 = vmatpush1.bf16.msra.mxu0 %v1853
  %2410 = vmatprep.subr.bf16.mxu0 %v1851
  %2411 = vmatpush1.bf16.msra.mxu0 %v1850
  %2412 = vmatprep.subr.bf16.mxu0 %v1848
  %2413 = vmatpush1.bf16.msra.mxu0 %v1847
  %2414 = vmatprep.subr.bf16.mxu0 %v1845
  %2415 = vmatpush1.bf16.msra.mxu0 %v1844
  %2416 = vmatprep.subr.bf16.mxu0 %v1842
  %2417 = vmatpush1.bf16.msra.mxu0 %v1841
  %2418 = vmatprep.subr.bf16.mxu0 %v1839
  %2419 = vmatpush1.bf16.msra.mxu0 %v1838
  %2420 = vmatprep.subr.bf16.mxu0 %v1836
  %2421 = vmatpush1.bf16.msra.mxu0 %v1835
  %2422 = vmatprep.subr.bf16.mxu0 %v1833
  %2423 = vmatpush1.bf16.msra.mxu0 %v1832
  %2424 = vmatprep.subr.bf16.mxu0 %v1878
  %2425 = vmatpush2.bf16.msra.mxu0 %v1877
  %2426 = vmatprep.subr.bf16.mxu0 %v1875
  %2427 = vmatpush2.bf16.msra.mxu0 %v1874
  %2428 = vmatprep.subr.bf16.mxu0 %v1872
  %2429 = vmatpush2.bf16.msra.mxu0 %v1871
  %2430 = vmatprep.subr.bf16.mxu0 %v1869
  %2431 = vmatpush2.bf16.msra.mxu0 %v1868
  %2432 = vmatprep.subr.bf16.mxu0 %v1866
  %2433 = vmatpush2.bf16.msra.mxu0 %v1865
  %2434 = vmatprep.subr.bf16.mxu0 %v1863
  %2435 = vmatpush2.bf16.msra.mxu0 %v1862
  %2436 = vmatprep.subr.bf16.mxu0 %v1860
  %2437 = vmatpush2.bf16.msra.mxu0 %v1859
  %2438 = vmatprep.subr.bf16.mxu0 %v1857
  %2439 = vmatpush2.bf16.msra.mxu0 %v1856
  %2440 = vmatprep.mubr.bf16.mxu0 %v316
  %2441 = vmatmul.mubr.bf16.gmra.mxu0 %v315
  %v2442 = vpop.f32.mrf.mxu0
  %v2443 = vadd.f32 %v860, %v2442
  %v2444 = vpop.f32.mrf.mxu0
  %v2445 = vadd.f32 %v864, %v2444
  %v2446 = vpop.f32.mrf.mxu0
  %v2447 = vadd.f32 %v860, %v2446
  %v2448 = vpop.f32.mrf.mxu0
  %v2449 = vadd.f32 %v864, %v2448
  %2450 = vmatprep.mubr.bf16.mxu0 %v328
  %2451 = vmatmul.mubr.bf16.gmra.mxu0 %v327
  %v2452 = vpop.f32.mrf.mxu0
  %v2453 = vadd.f32 %v860, %v2452
  %v2454 = vpop.f32.mrf.mxu0
  %v2455 = vadd.f32 %v864, %v2454
  %v2456 = vpop.f32.mrf.mxu0
  %v2457 = vadd.f32 %v860, %v2456
  %v2458 = vpop.f32.mrf.mxu0
  %v2459 = vadd.f32 %v864, %v2458
  %2460 = vmatprep.mubr.bf16.mxu0 %v340
  %2461 = vmatmul.mubr.bf16.gmra.mxu0 %v339
  %v2462 = vpop.f32.mrf.mxu0
  %v2463 = vadd.f32 %v860, %v2462
  %v2464 = vpop.f32.mrf.mxu0
  %v2465 = vadd.f32 %v864, %v2464
  %v2466 = vpop.f32.mrf.mxu0
  %v2467 = vadd.f32 %v860, %v2466
  %v2468 = vpop.f32.mrf.mxu0
  %v2469 = vadd.f32 %v864, %v2468
  %2470 = vmatprep.mubr.bf16.mxu0 %v352
  %2471 = vmatmul.mubr.bf16.gmra.mxu0 %v351
  %v2472 = vpop.f32.mrf.mxu0
  %v2473 = vadd.f32 %v860, %v2472
  %v2474 = vpop.f32.mrf.mxu0
  %v2475 = vadd.f32 %v864, %v2474
  %v2476 = vpop.f32.mrf.mxu0
  %v2477 = vadd.f32 %v860, %v2476
  %v2478 = vpop.f32.mrf.mxu0
  %v2479 = vadd.f32 %v864, %v2478
  %2480 = vmatprep.mubr.bf16.mxu0 %v364
  %2481 = vmatmul.mubr.bf16.gmra.mxu0 %v363
  %v2482 = vpop.f32.mrf.mxu0
  %v2483 = vadd.f32 %v860, %v2482
  %v2484 = vpop.f32.mrf.mxu0
  %v2485 = vadd.f32 %v864, %v2484
  %v2486 = vpop.f32.mrf.mxu0
  %v2487 = vadd.f32 %v860, %v2486
  %v2488 = vpop.f32.mrf.mxu0
  %v2489 = vadd.f32 %v864, %v2488
  %2490 = vmatprep.mubr.bf16.mxu0 %v376
  %2491 = vmatmul.mubr.bf16.gmra.mxu0 %v375
  %v2492 = vpop.f32.mrf.mxu0
  %v2493 = vadd.f32 %v860, %v2492
  %v2494 = vpop.f32.mrf.mxu0
  %v2495 = vadd.f32 %v864, %v2494
  %v2496 = vpop.f32.mrf.mxu0
  %v2497 = vadd.f32 %v860, %v2496
  %v2498 = vpop.f32.mrf.mxu0
  %v2499 = vadd.f32 %v864, %v2498
  %2500 = vmatprep.mubr.bf16.mxu0 %v388
  %2501 = vmatmul.mubr.bf16.gmra.mxu0 %v387
  %v2502 = vpop.f32.mrf.mxu0
  %v2503 = vadd.f32 %v860, %v2502
  %v2504 = vpop.f32.mrf.mxu0
  %v2505 = vadd.f32 %v864, %v2504
  %v2506 = vpop.f32.mrf.mxu0
  %v2507 = vadd.f32 %v860, %v2506
  %v2508 = vpop.f32.mrf.mxu0
  %v2509 = vadd.f32 %v864, %v2508
  %2510 = vmatprep.mubr.bf16.mxu0 %v400
  %2511 = vmatmul.mubr.bf16.gmra.mxu0 %v399
  %v2512 = vpop.f32.mrf.mxu0
  %v2513 = vadd.f32 %v860, %v2512
  %v2514 = vpop.f32.mrf.mxu0
  %v2515 = vadd.f32 %v864, %v2514
  %v2516 = vpop.f32.mrf.mxu0
  %v2517 = vadd.f32 %v860, %v2516
  %v2518 = vpop.f32.mrf.mxu0
  %v2519 = vadd.f32 %v864, %v2518
  %2520 = vmatprep.mubr.bf16.mxu0 %v412
  %2521 = vmatmul.mubr.bf16.gmra.mxu0 %v411
  %v2522 = vpop.f32.mrf.mxu0
  %v2523 = vadd.f32 %v860, %v2522
  %v2524 = vpop.f32.mrf.mxu0
  %v2525 = vadd.f32 %v864, %v2524
  %v2526 = vpop.f32.mrf.mxu0
  %v2527 = vadd.f32 %v860, %v2526
  %v2528 = vpop.f32.mrf.mxu0
  %v2529 = vadd.f32 %v864, %v2528
  %2530 = vmatprep.mubr.bf16.mxu0 %v424
  %2531 = vmatmul.mubr.bf16.gmra.mxu0 %v423
  %v2532 = vpop.f32.mrf.mxu0
  %v2533 = vadd.f32 %v860, %v2532
  %v2534 = vpop.f32.mrf.mxu0
  %v2535 = vadd.f32 %v864, %v2534
  %v2536 = vpop.f32.mrf.mxu0
  %v2537 = vadd.f32 %v860, %v2536
  %v2538 = vpop.f32.mrf.mxu0
  %v2539 = vadd.f32 %v864, %v2538
  %2540 = vmatprep.mubr.bf16.mxu0 %v436
  %2541 = vmatmul.mubr.bf16.gmra.mxu0 %v435
  %v2542 = vpop.f32.mrf.mxu0
  %v2543 = vadd.f32 %v860, %v2542
  %v2544 = vpop.f32.mrf.mxu0
  %v2545 = vadd.f32 %v864, %v2544
  %v2546 = vpop.f32.mrf.mxu0
  %v2547 = vadd.f32 %v860, %v2546
  %v2548 = vpop.f32.mrf.mxu0
  %v2549 = vadd.f32 %v864, %v2548
  %2550 = vmatprep.mubr.bf16.mxu0 %v448
  %2551 = vmatmul.mubr.bf16.gmra.mxu0 %v447
  %v2552 = vpop.f32.mrf.mxu0
  %v2553 = vadd.f32 %v860, %v2552
  %v2554 = vpop.f32.mrf.mxu0
  %v2555 = vadd.f32 %v864, %v2554
  %v2556 = vpop.f32.mrf.mxu0
  %v2557 = vadd.f32 %v860, %v2556
  %v2558 = vpop.f32.mrf.mxu0
  %v2559 = vadd.f32 %v864, %v2558
  %2560 = vmatprep.mubr.bf16.mxu0 %v460
  %2561 = vmatmul.mubr.bf16.gmra.mxu0 %v459
  %v2562 = vpop.f32.mrf.mxu0
  %v2563 = vadd.f32 %v860, %v2562
  %v2564 = vpop.f32.mrf.mxu0
  %v2565 = vadd.f32 %v864, %v2564
  %v2566 = vpop.f32.mrf.mxu0
  %v2567 = vpop.f32.mrf.mxu0
  %2568 = vdwg.mxu0
  %2569 = vmatprep.subr.bf16.mxu0 %v1902
  %2570 = vmatpush1.bf16.msra.mxu0 %v1901
  %2571 = vmatprep.subr.bf16.mxu0 %v1899
  %2572 = vmatpush1.bf16.msra.mxu0 %v1898
  %2573 = vmatprep.subr.bf16.mxu0 %v1896
  %2574 = vmatpush1.bf16.msra.mxu0 %v1895
  %2575 = vmatprep.subr.bf16.mxu0 %v1893
  %2576 = vmatpush1.bf16.msra.mxu0 %v1892
  %2577 = vmatprep.subr.bf16.mxu0 %v1890
  %2578 = vmatpush1.bf16.msra.mxu0 %v1889
  %2579 = vmatprep.subr.bf16.mxu0 %v1887
  %2580 = vmatpush1.bf16.msra.mxu0 %v1886
  %2581 = vmatprep.subr.bf16.mxu0 %v1884
  %2582 = vmatpush1.bf16.msra.mxu0 %v1883
  %2583 = vmatprep.subr.bf16.mxu0 %v1881
  %2584 = vmatpush1.bf16.msra.mxu0 %v1880
  %2585 = vmatprep.subr.bf16.mxu0 %v1926
  %2586 = vmatpush2.bf16.msra.mxu0 %v1925
  %2587 = vmatprep.subr.bf16.mxu0 %v1923
  %2588 = vmatpush2.bf16.msra.mxu0 %v1922
  %2589 = vmatprep.subr.bf16.mxu0 %v1920
  %2590 = vmatpush2.bf16.msra.mxu0 %v1919
  %2591 = vmatprep.subr.bf16.mxu0 %v1917
  %2592 = vmatpush2.bf16.msra.mxu0 %v1916
  %2593 = vmatprep.subr.bf16.mxu0 %v1914
  %2594 = vmatpush2.bf16.msra.mxu0 %v1913
  %2595 = vmatprep.subr.bf16.mxu0 %v1911
  %2596 = vmatpush2.bf16.msra.mxu0 %v1910
  %2597 = vmatprep.subr.bf16.mxu0 %v1908
  %2598 = vmatpush2.bf16.msra.mxu0 %v1907
  %2599 = vmatprep.subr.bf16.mxu0 %v1905
  %2600 = vmatpush2.bf16.msra.mxu0 %v1904
  %2601 = vmatprep.mubr.bf16.mxu0 %v318
  %2602 = vmatmul.mubr.bf16.gmra.mxu0 %v317
  %v2603 = vpop.f32.mrf.mxu0
  %v2604 = vadd.f32 %v2443, %v2603
  %v2605 = vpop.f32.mrf.mxu0
  %v2606 = vadd.f32 %v2445, %v2605
  %v2607 = vpop.f32.mrf.mxu0
  %v2608 = vadd.f32 %v2447, %v2607
  %v2609 = vpop.f32.mrf.mxu0
  %v2610 = vadd.f32 %v2449, %v2609
  %2611 = vmatprep.mubr.bf16.mxu0 %v330
  %2612 = vmatmul.mubr.bf16.gmra.mxu0 %v329
  %v2613 = vpop.f32.mrf.mxu0
  %v2614 = vadd.f32 %v2453, %v2613
  %v2615 = vpop.f32.mrf.mxu0
  %v2616 = vadd.f32 %v2455, %v2615
  %v2617 = vpop.f32.mrf.mxu0
  %v2618 = vadd.f32 %v2457, %v2617
  %v2619 = vpop.f32.mrf.mxu0
  %v2620 = vadd.f32 %v2459, %v2619
  %2621 = vmatprep.mubr.bf16.mxu0 %v342
  %2622 = vmatmul.mubr.bf16.gmra.mxu0 %v341
  %v2623 = vpop.f32.mrf.mxu0
  %v2624 = vadd.f32 %v2463, %v2623
  %v2625 = vpop.f32.mrf.mxu0
  %v2626 = vadd.f32 %v2465, %v2625
  %v2627 = vpop.f32.mrf.mxu0
  %v2628 = vadd.f32 %v2467, %v2627
  %v2629 = vpop.f32.mrf.mxu0
  %v2630 = vadd.f32 %v2469, %v2629
  %2631 = vmatprep.mubr.bf16.mxu0 %v354
  %2632 = vmatmul.mubr.bf16.gmra.mxu0 %v353
  %v2633 = vpop.f32.mrf.mxu0
  %v2634 = vadd.f32 %v2473, %v2633
  %v2635 = vpop.f32.mrf.mxu0
  %v2636 = vadd.f32 %v2475, %v2635
  %v2637 = vpop.f32.mrf.mxu0
  %v2638 = vadd.f32 %v2477, %v2637
  %v2639 = vpop.f32.mrf.mxu0
  %v2640 = vadd.f32 %v2479, %v2639
  %2641 = vmatprep.mubr.bf16.mxu0 %v366
  %2642 = vmatmul.mubr.bf16.gmra.mxu0 %v365
  %v2643 = vpop.f32.mrf.mxu0
  %v2644 = vadd.f32 %v2483, %v2643
  %v2645 = vpop.f32.mrf.mxu0
  %v2646 = vadd.f32 %v2485, %v2645
  %v2647 = vpop.f32.mrf.mxu0
  %v2648 = vadd.f32 %v2487, %v2647
  %v2649 = vpop.f32.mrf.mxu0
  %v2650 = vadd.f32 %v2489, %v2649
  %2651 = vmatprep.mubr.bf16.mxu0 %v378
  %2652 = vmatmul.mubr.bf16.gmra.mxu0 %v377
  %v2653 = vpop.f32.mrf.mxu0
  %v2654 = vadd.f32 %v2493, %v2653
  %v2655 = vpop.f32.mrf.mxu0
  %v2656 = vadd.f32 %v2495, %v2655
  %v2657 = vpop.f32.mrf.mxu0
  %v2658 = vadd.f32 %v2497, %v2657
  %v2659 = vpop.f32.mrf.mxu0
  %v2660 = vadd.f32 %v2499, %v2659
  %2661 = vmatprep.mubr.bf16.mxu0 %v390
  %2662 = vmatmul.mubr.bf16.gmra.mxu0 %v389
  %v2663 = vpop.f32.mrf.mxu0
  %v2664 = vadd.f32 %v2503, %v2663
  %v2665 = vpop.f32.mrf.mxu0
  %v2666 = vadd.f32 %v2505, %v2665
  %v2667 = vpop.f32.mrf.mxu0
  %v2668 = vadd.f32 %v2507, %v2667
  %v2669 = vpop.f32.mrf.mxu0
  %v2670 = vadd.f32 %v2509, %v2669
  %2671 = vmatprep.mubr.bf16.mxu0 %v402
  %2672 = vmatmul.mubr.bf16.gmra.mxu0 %v401
  %v2673 = vpop.f32.mrf.mxu0
  %v2674 = vadd.f32 %v2513, %v2673
  %v2675 = vpop.f32.mrf.mxu0
  %v2676 = vadd.f32 %v2515, %v2675
  %v2677 = vpop.f32.mrf.mxu0
  %v2678 = vadd.f32 %v2517, %v2677
  %v2679 = vpop.f32.mrf.mxu0
  %v2680 = vadd.f32 %v2519, %v2679
  %2681 = vmatprep.mubr.bf16.mxu0 %v414
  %2682 = vmatmul.mubr.bf16.gmra.mxu0 %v413
  %v2683 = vpop.f32.mrf.mxu0
  %v2684 = vadd.f32 %v2523, %v2683
  %v2685 = vpop.f32.mrf.mxu0
  %v2686 = vadd.f32 %v2525, %v2685
  %v2687 = vpop.f32.mrf.mxu0
  %v2688 = vadd.f32 %v2527, %v2687
  %v2689 = vpop.f32.mrf.mxu0
  %v2690 = vadd.f32 %v2529, %v2689
  %2691 = vmatprep.mubr.bf16.mxu0 %v426
  %2692 = vmatmul.mubr.bf16.gmra.mxu0 %v425
  %v2693 = vpop.f32.mrf.mxu0
  %v2694 = vadd.f32 %v2533, %v2693
  %v2695 = vpop.f32.mrf.mxu0
  %v2696 = vadd.f32 %v2535, %v2695
  %v2697 = vpop.f32.mrf.mxu0
  %v2698 = vadd.f32 %v2537, %v2697
  %v2699 = vpop.f32.mrf.mxu0
  %v2700 = vadd.f32 %v2539, %v2699
  %2701 = vmatprep.mubr.bf16.mxu0 %v438
  %2702 = vmatmul.mubr.bf16.gmra.mxu0 %v437
  %v2703 = vpop.f32.mrf.mxu0
  %v2704 = vadd.f32 %v2543, %v2703
  %v2705 = vpop.f32.mrf.mxu0
  %v2706 = vadd.f32 %v2545, %v2705
  %v2707 = vpop.f32.mrf.mxu0
  %v2708 = vadd.f32 %v2547, %v2707
  %v2709 = vpop.f32.mrf.mxu0
  %v2710 = vadd.f32 %v2549, %v2709
  %2711 = vmatprep.mubr.bf16.mxu0 %v450
  %2712 = vmatmul.mubr.bf16.gmra.mxu0 %v449
  %v2713 = vpop.f32.mrf.mxu0
  %v2714 = vadd.f32 %v2553, %v2713
  %v2715 = vpop.f32.mrf.mxu0
  %v2716 = vadd.f32 %v2555, %v2715
  %v2717 = vpop.f32.mrf.mxu0
  %v2718 = vadd.f32 %v2557, %v2717
  %v2719 = vpop.f32.mrf.mxu0
  %v2720 = vadd.f32 %v2559, %v2719
  %2721 = vmatprep.mubr.bf16.mxu0 %v462
  %2722 = vmatmul.mubr.bf16.gmra.mxu0 %v461
  %v2723 = vpop.f32.mrf.mxu0
  %v2724 = vadd.f32 %v2563, %v2723
  %v2725 = vpop.f32.mrf.mxu0
  %v2726 = vadd.f32 %v2565, %v2725
  %v2727 = vpop.f32.mrf.mxu0
  %v2728 = vpop.f32.mrf.mxu0
  %2729 = vdwg.mxu0
  %2730 = vmatprep.subr.bf16.mxu0 %v1950
  %2731 = vmatpush1.bf16.msra.mxu0 %v1949
  %2732 = vmatprep.subr.bf16.mxu0 %v1947
  %2733 = vmatpush1.bf16.msra.mxu0 %v1946
  %2734 = vmatprep.subr.bf16.mxu0 %v1944
  %2735 = vmatpush1.bf16.msra.mxu0 %v1943
  %2736 = vmatprep.subr.bf16.mxu0 %v1941
  %2737 = vmatpush1.bf16.msra.mxu0 %v1940
  %2738 = vmatprep.subr.bf16.mxu0 %v1938
  %2739 = vmatpush1.bf16.msra.mxu0 %v1937
  %2740 = vmatprep.subr.bf16.mxu0 %v1935
  %2741 = vmatpush1.bf16.msra.mxu0 %v1934
  %2742 = vmatprep.subr.bf16.mxu0 %v1932
  %2743 = vmatpush1.bf16.msra.mxu0 %v1931
  %2744 = vmatprep.subr.bf16.mxu0 %v1929
  %2745 = vmatpush1.bf16.msra.mxu0 %v1928
  %2746 = vmatprep.subr.bf16.mxu0 %v1974
  %2747 = vmatpush2.bf16.msra.mxu0 %v1973
  %2748 = vmatprep.subr.bf16.mxu0 %v1971
  %2749 = vmatpush2.bf16.msra.mxu0 %v1970
  %2750 = vmatprep.subr.bf16.mxu0 %v1968
  %2751 = vmatpush2.bf16.msra.mxu0 %v1967
  %2752 = vmatprep.subr.bf16.mxu0 %v1965
  %2753 = vmatpush2.bf16.msra.mxu0 %v1964
  %2754 = vmatprep.subr.bf16.mxu0 %v1962
  %2755 = vmatpush2.bf16.msra.mxu0 %v1961
  %2756 = vmatprep.subr.bf16.mxu0 %v1959
  %2757 = vmatpush2.bf16.msra.mxu0 %v1958
  %2758 = vmatprep.subr.bf16.mxu0 %v1956
  %2759 = vmatpush2.bf16.msra.mxu0 %v1955
  %2760 = vmatprep.subr.bf16.mxu0 %v1953
  %2761 = vmatpush2.bf16.msra.mxu0 %v1952
  %2762 = vmatprep.mubr.bf16.mxu0 %v320
  %2763 = vmatmul.mubr.bf16.gmra.mxu0 %v319
  %v2764 = vpop.f32.mrf.mxu0
  %v2765 = vadd.f32 %v2604, %v2764
  %v2766 = vpop.f32.mrf.mxu0
  %v2767 = vadd.f32 %v2606, %v2766
  %v2768 = vpop.f32.mrf.mxu0
  %v2769 = vadd.f32 %v2608, %v2768
  %v2770 = vpop.f32.mrf.mxu0
  %v2771 = vadd.f32 %v2610, %v2770
  %2772 = vmatprep.mubr.bf16.mxu0 %v332
  %2773 = vmatmul.mubr.bf16.gmra.mxu0 %v331
  %v2774 = vpop.f32.mrf.mxu0
  %v2775 = vadd.f32 %v2614, %v2774
  %v2776 = vpop.f32.mrf.mxu0
  %v2777 = vadd.f32 %v2616, %v2776
  %v2778 = vpop.f32.mrf.mxu0
  %v2779 = vadd.f32 %v2618, %v2778
  %v2780 = vpop.f32.mrf.mxu0
  %v2781 = vadd.f32 %v2620, %v2780
  %2782 = vmatprep.mubr.bf16.mxu0 %v344
  %2783 = vmatmul.mubr.bf16.gmra.mxu0 %v343
  %v2784 = vpop.f32.mrf.mxu0
  %v2785 = vadd.f32 %v2624, %v2784
  %v2786 = vpop.f32.mrf.mxu0
  %v2787 = vadd.f32 %v2626, %v2786
  %v2788 = vpop.f32.mrf.mxu0
  %v2789 = vadd.f32 %v2628, %v2788
  %v2790 = vpop.f32.mrf.mxu0
  %v2791 = vadd.f32 %v2630, %v2790
  %2792 = vmatprep.mubr.bf16.mxu0 %v356
  %2793 = vmatmul.mubr.bf16.gmra.mxu0 %v355
  %v2794 = vpop.f32.mrf.mxu0
  %v2795 = vadd.f32 %v2634, %v2794
  %v2796 = vpop.f32.mrf.mxu0
  %v2797 = vadd.f32 %v2636, %v2796
  %v2798 = vpop.f32.mrf.mxu0
  %v2799 = vadd.f32 %v2638, %v2798
  %v2800 = vpop.f32.mrf.mxu0
  %v2801 = vadd.f32 %v2640, %v2800
  %2802 = vmatprep.mubr.bf16.mxu0 %v368
  %2803 = vmatmul.mubr.bf16.gmra.mxu0 %v367
  %v2804 = vpop.f32.mrf.mxu0
  %v2805 = vadd.f32 %v2644, %v2804
  %v2806 = vpop.f32.mrf.mxu0
  %v2807 = vadd.f32 %v2646, %v2806
  %v2808 = vpop.f32.mrf.mxu0
  %v2809 = vadd.f32 %v2648, %v2808
  %v2810 = vpop.f32.mrf.mxu0
  %v2811 = vadd.f32 %v2650, %v2810
  %2812 = vmatprep.mubr.bf16.mxu0 %v380
  %2813 = vmatmul.mubr.bf16.gmra.mxu0 %v379
  %v2814 = vpop.f32.mrf.mxu0
  %v2815 = vadd.f32 %v2654, %v2814
  %v2816 = vpop.f32.mrf.mxu0
  %v2817 = vadd.f32 %v2656, %v2816
  %v2818 = vpop.f32.mrf.mxu0
  %v2819 = vadd.f32 %v2658, %v2818
  %v2820 = vpop.f32.mrf.mxu0
  %v2821 = vadd.f32 %v2660, %v2820
  %2822 = vmatprep.mubr.bf16.mxu0 %v392
  %2823 = vmatmul.mubr.bf16.gmra.mxu0 %v391
  %v2824 = vpop.f32.mrf.mxu0
  %v2825 = vadd.f32 %v2664, %v2824
  %v2826 = vpop.f32.mrf.mxu0
  %v2827 = vadd.f32 %v2666, %v2826
  %v2828 = vpop.f32.mrf.mxu0
  %v2829 = vadd.f32 %v2668, %v2828
  %v2830 = vpop.f32.mrf.mxu0
  %v2831 = vadd.f32 %v2670, %v2830
  %2832 = vmatprep.mubr.bf16.mxu0 %v404
  %2833 = vmatmul.mubr.bf16.gmra.mxu0 %v403
  %v2834 = vpop.f32.mrf.mxu0
  %v2835 = vadd.f32 %v2674, %v2834
  %v2836 = vpop.f32.mrf.mxu0
  %v2837 = vadd.f32 %v2676, %v2836
  %v2838 = vpop.f32.mrf.mxu0
  %v2839 = vadd.f32 %v2678, %v2838
  %v2840 = vpop.f32.mrf.mxu0
  %v2841 = vadd.f32 %v2680, %v2840
  %2842 = vmatprep.mubr.bf16.mxu0 %v416
  %2843 = vmatmul.mubr.bf16.gmra.mxu0 %v415
  %v2844 = vpop.f32.mrf.mxu0
  %v2845 = vadd.f32 %v2684, %v2844
  %v2846 = vpop.f32.mrf.mxu0
  %v2847 = vadd.f32 %v2686, %v2846
  %v2848 = vpop.f32.mrf.mxu0
  %v2849 = vadd.f32 %v2688, %v2848
  %v2850 = vpop.f32.mrf.mxu0
  %v2851 = vadd.f32 %v2690, %v2850
  %2852 = vmatprep.mubr.bf16.mxu0 %v428
  %2853 = vmatmul.mubr.bf16.gmra.mxu0 %v427
  %v2854 = vpop.f32.mrf.mxu0
  %v2855 = vadd.f32 %v2694, %v2854
  %v2856 = vpop.f32.mrf.mxu0
  %v2857 = vadd.f32 %v2696, %v2856
  %v2858 = vpop.f32.mrf.mxu0
  %v2859 = vadd.f32 %v2698, %v2858
  %v2860 = vpop.f32.mrf.mxu0
  %v2861 = vadd.f32 %v2700, %v2860
  %2862 = vmatprep.mubr.bf16.mxu0 %v440
  %2863 = vmatmul.mubr.bf16.gmra.mxu0 %v439
  %v2864 = vpop.f32.mrf.mxu0
  %v2865 = vadd.f32 %v2704, %v2864
  %v2866 = vpop.f32.mrf.mxu0
  %v2867 = vadd.f32 %v2706, %v2866
  %v2868 = vpop.f32.mrf.mxu0
  %v2869 = vadd.f32 %v2708, %v2868
  %v2870 = vpop.f32.mrf.mxu0
  %v2871 = vadd.f32 %v2710, %v2870
  %2872 = vmatprep.mubr.bf16.mxu0 %v452
  %2873 = vmatmul.mubr.bf16.gmra.mxu0 %v451
  %v2874 = vpop.f32.mrf.mxu0
  %v2875 = vadd.f32 %v2714, %v2874
  %v2876 = vpop.f32.mrf.mxu0
  %v2877 = vadd.f32 %v2716, %v2876
  %v2878 = vpop.f32.mrf.mxu0
  %v2879 = vadd.f32 %v2718, %v2878
  %v2880 = vpop.f32.mrf.mxu0
  %v2881 = vadd.f32 %v2720, %v2880
  %2882 = vmatprep.mubr.bf16.mxu0 %v464
  %2883 = vmatmul.mubr.bf16.gmra.mxu0 %v463
  %v2884 = vpop.f32.mrf.mxu0
  %v2885 = vadd.f32 %v2724, %v2884
  %v2886 = vpop.f32.mrf.mxu0
  %v2887 = vadd.f32 %v2726, %v2886
  %v2888 = vpop.f32.mrf.mxu0
  %v2889 = vpop.f32.mrf.mxu0
  %2890 = vdwg.mxu0
  %2891 = vmatprep.subr.bf16.mxu0 %v1998
  %2892 = vmatpush1.bf16.msra.mxu0 %v1997
  %2893 = vmatprep.subr.bf16.mxu0 %v1995
  %2894 = vmatpush1.bf16.msra.mxu0 %v1994
  %2895 = vmatprep.subr.bf16.mxu0 %v1992
  %2896 = vmatpush1.bf16.msra.mxu0 %v1991
  %2897 = vmatprep.subr.bf16.mxu0 %v1989
  %2898 = vmatpush1.bf16.msra.mxu0 %v1988
  %2899 = vmatprep.subr.bf16.mxu0 %v1986
  %2900 = vmatpush1.bf16.msra.mxu0 %v1985
  %2901 = vmatprep.subr.bf16.mxu0 %v1983
  %2902 = vmatpush1.bf16.msra.mxu0 %v1982
  %2903 = vmatprep.subr.bf16.mxu0 %v1980
  %2904 = vmatpush1.bf16.msra.mxu0 %v1979
  %2905 = vmatprep.subr.bf16.mxu0 %v1977
  %2906 = vmatpush1.bf16.msra.mxu0 %v1976
  %2907 = vmatprep.subr.bf16.mxu0 %v2022
  %2908 = vmatpush2.bf16.msra.mxu0 %v2021
  %2909 = vmatprep.subr.bf16.mxu0 %v2019
  %2910 = vmatpush2.bf16.msra.mxu0 %v2018
  %2911 = vmatprep.subr.bf16.mxu0 %v2016
  %2912 = vmatpush2.bf16.msra.mxu0 %v2015
  %2913 = vmatprep.subr.bf16.mxu0 %v2013
  %2914 = vmatpush2.bf16.msra.mxu0 %v2012
  %2915 = vmatprep.subr.bf16.mxu0 %v2010
  %2916 = vmatpush2.bf16.msra.mxu0 %v2009
  %2917 = vmatprep.subr.bf16.mxu0 %v2007
  %2918 = vmatpush2.bf16.msra.mxu0 %v2006
  %2919 = vmatprep.subr.bf16.mxu0 %v2004
  %2920 = vmatpush2.bf16.msra.mxu0 %v2003
  %2921 = vmatprep.subr.bf16.mxu0 %v2001
  %2922 = vmatpush2.bf16.msra.mxu0 %v2000
  %2923 = vmatprep.mubr.bf16.mxu0 %v322
  %2924 = vmatmul.mubr.bf16.gmra.mxu0 %v321
  %v2925 = vpop.f32.mrf.mxu0
  %v2926 = vadd.f32 %v2765, %v2925
  %v2927 = vpop.f32.mrf.mxu0
  %v2928 = vadd.f32 %v2767, %v2927
  %v2929 = vpop.f32.mrf.mxu0
  %v2930 = vadd.f32 %v2769, %v2929
  %v2931 = vpop.f32.mrf.mxu0
  %v2932 = vadd.f32 %v2771, %v2931
  %2933 = vmatprep.mubr.bf16.mxu0 %v334
  %2934 = vmatmul.mubr.bf16.gmra.mxu0 %v333
  %v2935 = vpop.f32.mrf.mxu0
  %v2936 = vadd.f32 %v2775, %v2935
  %v2937 = vpop.f32.mrf.mxu0
  %v2938 = vadd.f32 %v2777, %v2937
  %v2939 = vpop.f32.mrf.mxu0
  %v2940 = vadd.f32 %v2779, %v2939
  %v2941 = vpop.f32.mrf.mxu0
  %v2942 = vadd.f32 %v2781, %v2941
  %2943 = vmatprep.mubr.bf16.mxu0 %v346
  %2944 = vmatmul.mubr.bf16.gmra.mxu0 %v345
  %v2945 = vpop.f32.mrf.mxu0
  %v2946 = vadd.f32 %v2785, %v2945
  %v2947 = vpop.f32.mrf.mxu0
  %v2948 = vadd.f32 %v2787, %v2947
  %v2949 = vpop.f32.mrf.mxu0
  %v2950 = vadd.f32 %v2789, %v2949
  %v2951 = vpop.f32.mrf.mxu0
  %v2952 = vadd.f32 %v2791, %v2951
  %2953 = vmatprep.mubr.bf16.mxu0 %v358
  %2954 = vmatmul.mubr.bf16.gmra.mxu0 %v357
  %v2955 = vpop.f32.mrf.mxu0
  %v2956 = vadd.f32 %v2795, %v2955
  %v2957 = vpop.f32.mrf.mxu0
  %v2958 = vadd.f32 %v2797, %v2957
  %v2959 = vpop.f32.mrf.mxu0
  %v2960 = vadd.f32 %v2799, %v2959
  %v2961 = vpop.f32.mrf.mxu0
  %v2962 = vadd.f32 %v2801, %v2961
  %2963 = vmatprep.mubr.bf16.mxu0 %v370
  %2964 = vmatmul.mubr.bf16.gmra.mxu0 %v369
  %v2965 = vpop.f32.mrf.mxu0
  %v2966 = vadd.f32 %v2805, %v2965
  %v2967 = vpop.f32.mrf.mxu0
  %v2968 = vadd.f32 %v2807, %v2967
  %v2969 = vpop.f32.mrf.mxu0
  %v2970 = vadd.f32 %v2809, %v2969
  %v2971 = vpop.f32.mrf.mxu0
  %v2972 = vadd.f32 %v2811, %v2971
  %2973 = vmatprep.mubr.bf16.mxu0 %v382
  %2974 = vmatmul.mubr.bf16.gmra.mxu0 %v381
  %v2975 = vpop.f32.mrf.mxu0
  %v2976 = vadd.f32 %v2815, %v2975
  %v2977 = vpop.f32.mrf.mxu0
  %v2978 = vadd.f32 %v2817, %v2977
  %v2979 = vpop.f32.mrf.mxu0
  %v2980 = vadd.f32 %v2819, %v2979
  %v2981 = vpop.f32.mrf.mxu0
  %v2982 = vadd.f32 %v2821, %v2981
  %2983 = vmatprep.mubr.bf16.mxu0 %v394
  %2984 = vmatmul.mubr.bf16.gmra.mxu0 %v393
  %v2985 = vpop.f32.mrf.mxu0
  %v2986 = vadd.f32 %v2825, %v2985
  %v2987 = vpop.f32.mrf.mxu0
  %v2988 = vadd.f32 %v2827, %v2987
  %v2989 = vpop.f32.mrf.mxu0
  %v2990 = vadd.f32 %v2829, %v2989
  %v2991 = vpop.f32.mrf.mxu0
  %v2992 = vadd.f32 %v2831, %v2991
  %2993 = vmatprep.mubr.bf16.mxu0 %v406
  %2994 = vmatmul.mubr.bf16.gmra.mxu0 %v405
  %v2995 = vpop.f32.mrf.mxu0
  %v2996 = vadd.f32 %v2835, %v2995
  %v2997 = vpop.f32.mrf.mxu0
  %v2998 = vadd.f32 %v2837, %v2997
  %v2999 = vpop.f32.mrf.mxu0
  %v3000 = vadd.f32 %v2839, %v2999
  %v3001 = vpop.f32.mrf.mxu0
  %v3002 = vadd.f32 %v2841, %v3001
  %3003 = vmatprep.mubr.bf16.mxu0 %v418
  %3004 = vmatmul.mubr.bf16.gmra.mxu0 %v417
  %v3005 = vpop.f32.mrf.mxu0
  %v3006 = vadd.f32 %v2845, %v3005
  %v3007 = vpop.f32.mrf.mxu0
  %v3008 = vadd.f32 %v2847, %v3007
  %v3009 = vpop.f32.mrf.mxu0
  %v3010 = vadd.f32 %v2849, %v3009
  %v3011 = vpop.f32.mrf.mxu0
  %v3012 = vadd.f32 %v2851, %v3011
  %3013 = vmatprep.mubr.bf16.mxu0 %v430
  %3014 = vmatmul.mubr.bf16.gmra.mxu0 %v429
  %v3015 = vpop.f32.mrf.mxu0
  %v3016 = vadd.f32 %v2855, %v3015
  %v3017 = vpop.f32.mrf.mxu0
  %v3018 = vadd.f32 %v2857, %v3017
  %v3019 = vpop.f32.mrf.mxu0
  %v3020 = vadd.f32 %v2859, %v3019
  %v3021 = vpop.f32.mrf.mxu0
  %v3022 = vadd.f32 %v2861, %v3021
  %3023 = vmatprep.mubr.bf16.mxu0 %v442
  %3024 = vmatmul.mubr.bf16.gmra.mxu0 %v441
  %v3025 = vpop.f32.mrf.mxu0
  %v3026 = vadd.f32 %v2865, %v3025
  %v3027 = vpop.f32.mrf.mxu0
  %v3028 = vadd.f32 %v2867, %v3027
  %v3029 = vpop.f32.mrf.mxu0
  %v3030 = vadd.f32 %v2869, %v3029
  %v3031 = vpop.f32.mrf.mxu0
  %v3032 = vadd.f32 %v2871, %v3031
  %3033 = vmatprep.mubr.bf16.mxu0 %v454
  %3034 = vmatmul.mubr.bf16.gmra.mxu0 %v453
  %v3035 = vpop.f32.mrf.mxu0
  %v3036 = vadd.f32 %v2875, %v3035
  %v3037 = vpop.f32.mrf.mxu0
  %v3038 = vadd.f32 %v2877, %v3037
  %v3039 = vpop.f32.mrf.mxu0
  %v3040 = vadd.f32 %v2879, %v3039
  %v3041 = vpop.f32.mrf.mxu0
  %v3042 = vadd.f32 %v2881, %v3041
  %3043 = vmatprep.mubr.bf16.mxu0 %v466
  %3044 = vmatmul.mubr.bf16.gmra.mxu0 %v465
  %v3045 = vpop.f32.mrf.mxu0
  %v3046 = vadd.f32 %v2885, %v3045
  %v3047 = vpop.f32.mrf.mxu0
  %v3048 = vadd.f32 %v2887, %v3047
  %v3049 = vpop.f32.mrf.mxu0
  %v3050 = vpop.f32.mrf.mxu0
  %3051 = vdwg.mxu0
  %3052 = vmatprep.subr.bf16.mxu0 %v2046
  %3053 = vmatpush1.bf16.msra.mxu0 %v2045
  %3054 = vmatprep.subr.bf16.mxu0 %v2043
  %3055 = vmatpush1.bf16.msra.mxu0 %v2042
  %3056 = vmatprep.subr.bf16.mxu0 %v2040
  %3057 = vmatpush1.bf16.msra.mxu0 %v2039
  %3058 = vmatprep.subr.bf16.mxu0 %v2037
  %3059 = vmatpush1.bf16.msra.mxu0 %v2036
  %3060 = vmatprep.subr.bf16.mxu0 %v2034
  %3061 = vmatpush1.bf16.msra.mxu0 %v2033
  %3062 = vmatprep.subr.bf16.mxu0 %v2031
  %3063 = vmatpush1.bf16.msra.mxu0 %v2030
  %3064 = vmatprep.subr.bf16.mxu0 %v2028
  %3065 = vmatpush1.bf16.msra.mxu0 %v2027
  %3066 = vmatprep.subr.bf16.mxu0 %v2025
  %3067 = vmatpush1.bf16.msra.mxu0 %v2024
  %3068 = vmatprep.subr.bf16.mxu0 %v2070
  %3069 = vmatpush2.bf16.msra.mxu0 %v2069
  %3070 = vmatprep.subr.bf16.mxu0 %v2067
  %3071 = vmatpush2.bf16.msra.mxu0 %v2066
  %3072 = vmatprep.subr.bf16.mxu0 %v2064
  %3073 = vmatpush2.bf16.msra.mxu0 %v2063
  %3074 = vmatprep.subr.bf16.mxu0 %v2061
  %3075 = vmatpush2.bf16.msra.mxu0 %v2060
  %3076 = vmatprep.subr.bf16.mxu0 %v2058
  %3077 = vmatpush2.bf16.msra.mxu0 %v2057
  %3078 = vmatprep.subr.bf16.mxu0 %v2055
  %3079 = vmatpush2.bf16.msra.mxu0 %v2054
  %3080 = vmatprep.subr.bf16.mxu0 %v2052
  %3081 = vmatpush2.bf16.msra.mxu0 %v2051
  %3082 = vmatprep.subr.bf16.mxu0 %v2049
  %3083 = vmatpush2.bf16.msra.mxu0 %v2048
  %3084 = vmatprep.mubr.bf16.mxu0 %v324
  %3085 = vmatmul.mubr.bf16.gmra.mxu0 %v323
  %v3086 = vpop.f32.mrf.mxu0
  %v3087 = vadd.f32 %v2926, %v3086
  %v3088 = vpop.f32.mrf.mxu0
  %v3089 = vadd.f32 %v2928, %v3088
  %v3090 = vpop.f32.mrf.mxu0
  %v3091 = vadd.f32 %v2930, %v3090
  %v3092 = vpop.f32.mrf.mxu0
  %v3093 = vadd.f32 %v2932, %v3092
  %3094 = vmatprep.mubr.bf16.mxu0 %v336
  %3095 = vmatmul.mubr.bf16.gmra.mxu0 %v335
  %v3096 = vpop.f32.mrf.mxu0
  %v3097 = vadd.f32 %v2936, %v3096
  %v3098 = vpop.f32.mrf.mxu0
  %v3099 = vadd.f32 %v2938, %v3098
  %v3100 = vpop.f32.mrf.mxu0
  %v3101 = vadd.f32 %v2940, %v3100
  %v3102 = vpop.f32.mrf.mxu0
  %v3103 = vadd.f32 %v2942, %v3102
  %3104 = vmatprep.mubr.bf16.mxu0 %v348
  %3105 = vmatmul.mubr.bf16.gmra.mxu0 %v347
  %v3106 = vpop.f32.mrf.mxu0
  %v3107 = vadd.f32 %v2946, %v3106
  %v3108 = vpop.f32.mrf.mxu0
  %v3109 = vadd.f32 %v2948, %v3108
  %v3110 = vpop.f32.mrf.mxu0
  %v3111 = vadd.f32 %v2950, %v3110
  %v3112 = vpop.f32.mrf.mxu0
  %v3113 = vadd.f32 %v2952, %v3112
  %3114 = vmatprep.mubr.bf16.mxu0 %v360
  %3115 = vmatmul.mubr.bf16.gmra.mxu0 %v359
  %v3116 = vpop.f32.mrf.mxu0
  %v3117 = vadd.f32 %v2956, %v3116
  %v3118 = vpop.f32.mrf.mxu0
  %v3119 = vadd.f32 %v2958, %v3118
  %v3120 = vpop.f32.mrf.mxu0
  %v3121 = vadd.f32 %v2960, %v3120
  %v3122 = vpop.f32.mrf.mxu0
  %v3123 = vadd.f32 %v2962, %v3122
  %3124 = vmatprep.mubr.bf16.mxu0 %v372
  %3125 = vmatmul.mubr.bf16.gmra.mxu0 %v371
  %v3126 = vpop.f32.mrf.mxu0
  %v3127 = vadd.f32 %v2966, %v3126
  %v3128 = vpop.f32.mrf.mxu0
  %v3129 = vadd.f32 %v2968, %v3128
  %v3130 = vpop.f32.mrf.mxu0
  %v3131 = vadd.f32 %v2970, %v3130
  %v3132 = vpop.f32.mrf.mxu0
  %v3133 = vadd.f32 %v2972, %v3132
  %3134 = vmatprep.mubr.bf16.mxu0 %v384
  %3135 = vmatmul.mubr.bf16.gmra.mxu0 %v383
  %v3136 = vpop.f32.mrf.mxu0
  %v3137 = vadd.f32 %v2976, %v3136
  %v3138 = vpop.f32.mrf.mxu0
  %v3139 = vadd.f32 %v2978, %v3138
  %v3140 = vpop.f32.mrf.mxu0
  %v3141 = vadd.f32 %v2980, %v3140
  %v3142 = vpop.f32.mrf.mxu0
  %v3143 = vadd.f32 %v2982, %v3142
  %3144 = vmatprep.mubr.bf16.mxu0 %v396
  %3145 = vmatmul.mubr.bf16.gmra.mxu0 %v395
  %v3146 = vpop.f32.mrf.mxu0
  %v3147 = vadd.f32 %v2986, %v3146
  %v3148 = vpop.f32.mrf.mxu0
  %v3149 = vadd.f32 %v2988, %v3148
  %v3150 = vpop.f32.mrf.mxu0
  %v3151 = vadd.f32 %v2990, %v3150
  %v3152 = vpop.f32.mrf.mxu0
  %v3153 = vadd.f32 %v2992, %v3152
  %3154 = vmatprep.mubr.bf16.mxu0 %v408
  %3155 = vmatmul.mubr.bf16.gmra.mxu0 %v407
  %v3156 = vpop.f32.mrf.mxu0
  %v3157 = vadd.f32 %v2996, %v3156
  %v3158 = vpop.f32.mrf.mxu0
  %v3159 = vadd.f32 %v2998, %v3158
  %v3160 = vpop.f32.mrf.mxu0
  %v3161 = vadd.f32 %v3000, %v3160
  %v3162 = vpop.f32.mrf.mxu0
  %v3163 = vadd.f32 %v3002, %v3162
  %3164 = vmatprep.mubr.bf16.mxu0 %v420
  %3165 = vmatmul.mubr.bf16.gmra.mxu0 %v419
  %v3166 = vpop.f32.mrf.mxu0
  %v3167 = vadd.f32 %v3006, %v3166
  %v3168 = vpop.f32.mrf.mxu0
  %v3169 = vadd.f32 %v3008, %v3168
  %v3170 = vpop.f32.mrf.mxu0
  %v3171 = vadd.f32 %v3010, %v3170
  %v3172 = vpop.f32.mrf.mxu0
  %v3173 = vadd.f32 %v3012, %v3172
  %3174 = vmatprep.mubr.bf16.mxu0 %v432
  %3175 = vmatmul.mubr.bf16.gmra.mxu0 %v431
  %v3176 = vpop.f32.mrf.mxu0
  %v3177 = vadd.f32 %v3016, %v3176
  %v3178 = vpop.f32.mrf.mxu0
  %v3179 = vadd.f32 %v3018, %v3178
  %v3180 = vpop.f32.mrf.mxu0
  %v3181 = vadd.f32 %v3020, %v3180
  %v3182 = vpop.f32.mrf.mxu0
  %v3183 = vadd.f32 %v3022, %v3182
  %3184 = vmatprep.mubr.bf16.mxu0 %v444
  %3185 = vmatmul.mubr.bf16.gmra.mxu0 %v443
  %v3186 = vpop.f32.mrf.mxu0
  %v3187 = vadd.f32 %v3026, %v3186
  %v3188 = vpop.f32.mrf.mxu0
  %v3189 = vadd.f32 %v3028, %v3188
  %v3190 = vpop.f32.mrf.mxu0
  %v3191 = vadd.f32 %v3030, %v3190
  %v3192 = vpop.f32.mrf.mxu0
  %v3193 = vadd.f32 %v3032, %v3192
  %3194 = vmatprep.mubr.bf16.mxu0 %v456
  %3195 = vmatmul.mubr.bf16.gmra.mxu0 %v455
  %v3196 = vpop.f32.mrf.mxu0
  %v3197 = vadd.f32 %v3036, %v3196
  %v3198 = vpop.f32.mrf.mxu0
  %v3199 = vadd.f32 %v3038, %v3198
  %v3200 = vpop.f32.mrf.mxu0
  %v3201 = vadd.f32 %v3040, %v3200
  %v3202 = vpop.f32.mrf.mxu0
  %v3203 = vadd.f32 %v3042, %v3202
  %3204 = vmatprep.mubr.bf16.mxu0 %v468
  %3205 = vmatmul.mubr.bf16.gmra.mxu0 %v467
  %v3206 = vpop.f32.mrf.mxu0
  %v3207 = vadd.f32 %v3046, %v3206
  %v3208 = vpop.f32.mrf.mxu0
  %v3209 = vadd.f32 %v3048, %v3208
  %v3210 = vpop.f32.mrf.mxu0
  %v3211 = vpop.f32.mrf.mxu0
  %3212 = vdwg.mxu0
  %3213 = vmatprep.subr.bf16.mxu0 %v2094
  %3214 = vmatpush1.bf16.msra.mxu0 %v2093
  %3215 = vmatprep.subr.bf16.mxu0 %v2091
  %3216 = vmatpush1.bf16.msra.mxu0 %v2090
  %3217 = vmatprep.subr.bf16.mxu0 %v2088
  %3218 = vmatpush1.bf16.msra.mxu0 %v2087
  %3219 = vmatprep.subr.bf16.mxu0 %v2085
  %3220 = vmatpush1.bf16.msra.mxu0 %v2084
  %3221 = vmatprep.subr.bf16.mxu0 %v2082
  %3222 = vmatpush1.bf16.msra.mxu0 %v2081
  %3223 = vmatprep.subr.bf16.mxu0 %v2079
  %3224 = vmatpush1.bf16.msra.mxu0 %v2078
  %3225 = vmatprep.subr.bf16.mxu0 %v2076
  %3226 = vmatpush1.bf16.msra.mxu0 %v2075
  %3227 = vmatprep.subr.bf16.mxu0 %v2073
  %3228 = vmatpush1.bf16.msra.mxu0 %v2072
  %3229 = vmatprep.subr.bf16.mxu0 %v2118
  %3230 = vmatpush2.bf16.msra.mxu0 %v2117
  %3231 = vmatprep.subr.bf16.mxu0 %v2115
  %3232 = vmatpush2.bf16.msra.mxu0 %v2114
  %3233 = vmatprep.subr.bf16.mxu0 %v2112
  %3234 = vmatpush2.bf16.msra.mxu0 %v2111
  %3235 = vmatprep.subr.bf16.mxu0 %v2109
  %3236 = vmatpush2.bf16.msra.mxu0 %v2108
  %3237 = vmatprep.subr.bf16.mxu0 %v2106
  %3238 = vmatpush2.bf16.msra.mxu0 %v2105
  %3239 = vmatprep.subr.bf16.mxu0 %v2103
  %3240 = vmatpush2.bf16.msra.mxu0 %v2102
  %3241 = vmatprep.subr.bf16.mxu0 %v2100
  %3242 = vmatpush2.bf16.msra.mxu0 %v2099
  %3243 = vmatprep.subr.bf16.mxu0 %v2097
  %3244 = vmatpush2.bf16.msra.mxu0 %v2096
  %3245 = vmatprep.mubr.bf16.mxu0 %v326
  %3246 = vmatmul.mubr.bf16.gmra.mxu0 %v325
  %v3247 = vpop.f32.mrf.mxu0
  %v3248 = vadd.f32 %v3087, %v3247
  %v3249 = vpop.f32.mrf.mxu0
  %v3250 = vadd.f32 %v3089, %v3249
  %v3251 = vpop.f32.mrf.mxu0
  %v3252 = vadd.f32 %v3091, %v3251
  %v3253 = vpop.f32.mrf.mxu0
  %v3254 = vadd.f32 %v3093, %v3253
  %3255 = vmatprep.mubr.bf16.mxu0 %v338
  %3256 = vmatmul.mubr.bf16.gmra.mxu0 %v337
  %v3257 = vpop.f32.mrf.mxu0
  %v3258 = vadd.f32 %v3097, %v3257
  %v3259 = vpop.f32.mrf.mxu0
  %v3260 = vadd.f32 %v3099, %v3259
  %v3261 = vpop.f32.mrf.mxu0
  %v3262 = vadd.f32 %v3101, %v3261
  %v3263 = vpop.f32.mrf.mxu0
  %v3264 = vadd.f32 %v3103, %v3263
  %3265 = vmatprep.mubr.bf16.mxu0 %v350
  %3266 = vmatmul.mubr.bf16.gmra.mxu0 %v349
  %v3267 = vpop.f32.mrf.mxu0
  %v3268 = vadd.f32 %v3107, %v3267
  %v3269 = vpop.f32.mrf.mxu0
  %v3270 = vadd.f32 %v3109, %v3269
  %v3271 = vpop.f32.mrf.mxu0
  %v3272 = vadd.f32 %v3111, %v3271
  %v3273 = vpop.f32.mrf.mxu0
  %v3274 = vadd.f32 %v3113, %v3273
  %3275 = vmatprep.mubr.bf16.mxu0 %v362
  %3276 = vmatmul.mubr.bf16.gmra.mxu0 %v361
  %v3277 = vpop.f32.mrf.mxu0
  %v3278 = vadd.f32 %v3117, %v3277
  %v3279 = vpop.f32.mrf.mxu0
  %v3280 = vadd.f32 %v3119, %v3279
  %v3281 = vpop.f32.mrf.mxu0
  %v3282 = vadd.f32 %v3121, %v3281
  %v3283 = vpop.f32.mrf.mxu0
  %v3284 = vadd.f32 %v3123, %v3283
  %3285 = vmatprep.mubr.bf16.mxu0 %v374
  %3286 = vmatmul.mubr.bf16.gmra.mxu0 %v373
  %v3287 = vpop.f32.mrf.mxu0
  %v3288 = vadd.f32 %v3127, %v3287
  %v3289 = vpop.f32.mrf.mxu0
  %v3290 = vadd.f32 %v3129, %v3289
  %v3291 = vpop.f32.mrf.mxu0
  %v3292 = vadd.f32 %v3131, %v3291
  %v3293 = vpop.f32.mrf.mxu0
  %v3294 = vadd.f32 %v3133, %v3293
  %3295 = vmatprep.mubr.bf16.mxu0 %v386
  %3296 = vmatmul.mubr.bf16.gmra.mxu0 %v385
  %v3297 = vpop.f32.mrf.mxu0
  %v3298 = vadd.f32 %v3137, %v3297
  %v3299 = vpop.f32.mrf.mxu0
  %v3300 = vadd.f32 %v3139, %v3299
  %v3301 = vpop.f32.mrf.mxu0
  %v3302 = vadd.f32 %v3141, %v3301
  %v3303 = vpop.f32.mrf.mxu0
  %v3304 = vadd.f32 %v3143, %v3303
  %3305 = vmatprep.mubr.bf16.mxu0 %v398
  %3306 = vmatmul.mubr.bf16.gmra.mxu0 %v397
  %v3307 = vpop.f32.mrf.mxu0
  %v3308 = vadd.f32 %v3147, %v3307
  %v3309 = vpop.f32.mrf.mxu0
  %v3310 = vadd.f32 %v3149, %v3309
  %v3311 = vpop.f32.mrf.mxu0
  %v3312 = vadd.f32 %v3151, %v3311
  %v3313 = vpop.f32.mrf.mxu0
  %v3314 = vadd.f32 %v3153, %v3313
  %3315 = vmatprep.mubr.bf16.mxu0 %v410
  %3316 = vmatmul.mubr.bf16.gmra.mxu0 %v409
  %v3317 = vpop.f32.mrf.mxu0
  %v3318 = vadd.f32 %v3157, %v3317
  %v3319 = vpop.f32.mrf.mxu0
  %v3320 = vadd.f32 %v3159, %v3319
  %v3321 = vpop.f32.mrf.mxu0
  %v3322 = vadd.f32 %v3161, %v3321
  %v3323 = vpop.f32.mrf.mxu0
  %v3324 = vadd.f32 %v3163, %v3323
  %3325 = vmatprep.mubr.bf16.mxu0 %v422
  %3326 = vmatmul.mubr.bf16.gmra.mxu0 %v421
  %v3327 = vpop.f32.mrf.mxu0
  %v3328 = vadd.f32 %v3167, %v3327
  %v3329 = vpop.f32.mrf.mxu0
  %v3330 = vadd.f32 %v3169, %v3329
  %v3331 = vpop.f32.mrf.mxu0
  %v3332 = vadd.f32 %v3171, %v3331
  %v3333 = vpop.f32.mrf.mxu0
  %v3334 = vadd.f32 %v3173, %v3333
  %3335 = vmatprep.mubr.bf16.mxu0 %v434
  %3336 = vmatmul.mubr.bf16.gmra.mxu0 %v433
  %v3337 = vpop.f32.mrf.mxu0
  %v3338 = vadd.f32 %v3177, %v3337
  %v3339 = vpop.f32.mrf.mxu0
  %v3340 = vadd.f32 %v3179, %v3339
  %v3341 = vpop.f32.mrf.mxu0
  %v3342 = vadd.f32 %v3181, %v3341
  %v3343 = vpop.f32.mrf.mxu0
  %v3344 = vadd.f32 %v3183, %v3343
  %3345 = vmatprep.mubr.bf16.mxu0 %v446
  %3346 = vmatmul.mubr.bf16.gmra.mxu0 %v445
  %v3347 = vpop.f32.mrf.mxu0
  %v3348 = vadd.f32 %v3187, %v3347
  %v3349 = vpop.f32.mrf.mxu0
  %v3350 = vadd.f32 %v3189, %v3349
  %v3351 = vpop.f32.mrf.mxu0
  %v3352 = vadd.f32 %v3191, %v3351
  %v3353 = vpop.f32.mrf.mxu0
  %v3354 = vadd.f32 %v3193, %v3353
  %3355 = vmatprep.mubr.bf16.mxu0 %v458
  %3356 = vmatmul.mubr.bf16.gmra.mxu0 %v457
  %v3357 = vpop.f32.mrf.mxu0
  %v3358 = vadd.f32 %v3197, %v3357
  %v3359 = vpop.f32.mrf.mxu0
  %v3360 = vadd.f32 %v3199, %v3359
  %v3361 = vpop.f32.mrf.mxu0
  %v3362 = vadd.f32 %v3201, %v3361
  %v3363 = vpop.f32.mrf.mxu0
  %v3364 = vadd.f32 %v3203, %v3363
  %3365 = vmatprep.mubr.bf16.mxu0 %v470
  %3366 = vmatmul.mubr.bf16.gmra.mxu0 %v469
  %v3367 = vpop.f32.mrf.mxu0
  %v3368 = vadd.f32 %v3207, %v3367
  %v3369 = vpop.f32.mrf.mxu0
  %v3370 = vadd.f32 %v3209, %v3369
  %v3371 = vpop.f32.mrf.mxu0
  %v3372 = vpop.f32.mrf.mxu0
  %3373 = vdwg.mxu0
  %3374 = vmatprep.subr.bf16.mxu0 0
  %3375 = vmatpush1.bf16.msra.mxu0 %v1855
  %3376 = vmatprep.subr.bf16.mxu0 0
  %3377 = vmatpush1.bf16.msra.mxu0 %v1852
  %3378 = vmatprep.subr.bf16.mxu0 0
  %3379 = vmatpush1.bf16.msra.mxu0 %v1849
  %3380 = vmatprep.subr.bf16.mxu0 0
  %3381 = vmatpush1.bf16.msra.mxu0 %v1846
  %3382 = vmatprep.subr.bf16.mxu0 0
  %3383 = vmatpush1.bf16.msra.mxu0 %v1843
  %3384 = vmatprep.subr.bf16.mxu0 0
  %3385 = vmatpush1.bf16.msra.mxu0 %v1840
  %3386 = vmatprep.subr.bf16.mxu0 0
  %3387 = vmatpush1.bf16.msra.mxu0 %v1837
  %3388 = vmatprep.subr.bf16.mxu0 0
  %3389 = vmatpush1.bf16.msra.mxu0 %v1834
  %3390 = vmatprep.subr.bf16.mxu0 0
  %3391 = vmatpush2.bf16.msra.mxu0 %v1879
  %3392 = vmatprep.subr.bf16.mxu0 0
  %3393 = vmatpush2.bf16.msra.mxu0 %v1876
  %3394 = vmatprep.subr.bf16.mxu0 0
  %3395 = vmatpush2.bf16.msra.mxu0 %v1873
  %3396 = vmatprep.subr.bf16.mxu0 0
  %3397 = vmatpush2.bf16.msra.mxu0 %v1870
  %3398 = vmatprep.subr.bf16.mxu0 0
  %3399 = vmatpush2.bf16.msra.mxu0 %v1867
  %3400 = vmatprep.subr.bf16.mxu0 0
  %3401 = vmatpush2.bf16.msra.mxu0 %v1864
  %3402 = vmatprep.subr.bf16.mxu0 0
  %3403 = vmatpush2.bf16.msra.mxu0 %v1861
  %3404 = vmatprep.subr.bf16.mxu0 0
  %3405 = vmatpush2.bf16.msra.mxu0 %v1858
  %3406 = vmatprep.mubr.bf16.mxu0 %v316
  %3407 = vmatmul.mubr.bf16.gmra.mxu0 %v315
  %v3408 = vpop.f32.mrf.mxu0
  %v3409 = vadd.f32 %v868, %v3408
  %v3410 = vpop.f32.mrf.mxu0
  %v3411 = vpop.f32.mrf.mxu0
  %v3412 = vadd.f32 %v868, %v3411
  %v3413 = vpop.f32.mrf.mxu0
  %3414 = vmatprep.mubr.bf16.mxu0 %v328
  %3415 = vmatmul.mubr.bf16.gmra.mxu0 %v327
  %v3416 = vpop.f32.mrf.mxu0
  %v3417 = vadd.f32 %v868, %v3416
  %v3418 = vpop.f32.mrf.mxu0
  %v3419 = vpop.f32.mrf.mxu0
  %v3420 = vadd.f32 %v868, %v3419
  %v3421 = vpop.f32.mrf.mxu0
  %3422 = vmatprep.mubr.bf16.mxu0 %v340
  %3423 = vmatmul.mubr.bf16.gmra.mxu0 %v339
  %v3424 = vpop.f32.mrf.mxu0
  %v3425 = vadd.f32 %v868, %v3424
  %v3426 = vpop.f32.mrf.mxu0
  %v3427 = vpop.f32.mrf.mxu0
  %v3428 = vadd.f32 %v868, %v3427
  %v3429 = vpop.f32.mrf.mxu0
  %3430 = vmatprep.mubr.bf16.mxu0 %v352
  %3431 = vmatmul.mubr.bf16.gmra.mxu0 %v351
  %v3432 = vpop.f32.mrf.mxu0
  %v3433 = vadd.f32 %v868, %v3432
  %v3434 = vpop.f32.mrf.mxu0
  %v3435 = vpop.f32.mrf.mxu0
  %v3436 = vadd.f32 %v868, %v3435
  %v3437 = vpop.f32.mrf.mxu0
  %3438 = vmatprep.mubr.bf16.mxu0 %v364
  %3439 = vmatmul.mubr.bf16.gmra.mxu0 %v363
  %v3440 = vpop.f32.mrf.mxu0
  %v3441 = vadd.f32 %v868, %v3440
  %v3442 = vpop.f32.mrf.mxu0
  %v3443 = vpop.f32.mrf.mxu0
  %v3444 = vadd.f32 %v868, %v3443
  %v3445 = vpop.f32.mrf.mxu0
  %3446 = vmatprep.mubr.bf16.mxu0 %v376
  %3447 = vmatmul.mubr.bf16.gmra.mxu0 %v375
  %v3448 = vpop.f32.mrf.mxu0
  %v3449 = vadd.f32 %v868, %v3448
  %v3450 = vpop.f32.mrf.mxu0
  %v3451 = vpop.f32.mrf.mxu0
  %v3452 = vadd.f32 %v868, %v3451
  %v3453 = vpop.f32.mrf.mxu0
  %3454 = vmatprep.mubr.bf16.mxu0 %v388
  %3455 = vmatmul.mubr.bf16.gmra.mxu0 %v387
  %v3456 = vpop.f32.mrf.mxu0
  %v3457 = vadd.f32 %v868, %v3456
  %v3458 = vpop.f32.mrf.mxu0
  %v3459 = vpop.f32.mrf.mxu0
  %v3460 = vadd.f32 %v868, %v3459
  %v3461 = vpop.f32.mrf.mxu0
  %3462 = vmatprep.mubr.bf16.mxu0 %v400
  %3463 = vmatmul.mubr.bf16.gmra.mxu0 %v399
  %v3464 = vpop.f32.mrf.mxu0
  %v3465 = vadd.f32 %v868, %v3464
  %v3466 = vpop.f32.mrf.mxu0
  %v3467 = vpop.f32.mrf.mxu0
  %v3468 = vadd.f32 %v868, %v3467
  %v3469 = vpop.f32.mrf.mxu0
  %3470 = vmatprep.mubr.bf16.mxu0 %v412
  %3471 = vmatmul.mubr.bf16.gmra.mxu0 %v411
  %v3472 = vpop.f32.mrf.mxu0
  %v3473 = vadd.f32 %v868, %v3472
  %v3474 = vpop.f32.mrf.mxu0
  %v3475 = vpop.f32.mrf.mxu0
  %v3476 = vadd.f32 %v868, %v3475
  %v3477 = vpop.f32.mrf.mxu0
  %3478 = vmatprep.mubr.bf16.mxu0 %v424
  %3479 = vmatmul.mubr.bf16.gmra.mxu0 %v423
  %v3480 = vpop.f32.mrf.mxu0
  %v3481 = vadd.f32 %v868, %v3480
  %v3482 = vpop.f32.mrf.mxu0
  %v3483 = vpop.f32.mrf.mxu0
  %v3484 = vadd.f32 %v868, %v3483
  %v3485 = vpop.f32.mrf.mxu0
  %3486 = vmatprep.mubr.bf16.mxu0 %v436
  %3487 = vmatmul.mubr.bf16.gmra.mxu0 %v435
  %v3488 = vpop.f32.mrf.mxu0
  %v3489 = vadd.f32 %v868, %v3488
  %v3490 = vpop.f32.mrf.mxu0
  %v3491 = vpop.f32.mrf.mxu0
  %v3492 = vadd.f32 %v868, %v3491
  %v3493 = vpop.f32.mrf.mxu0
  %3494 = vmatprep.mubr.bf16.mxu0 %v448
  %3495 = vmatmul.mubr.bf16.gmra.mxu0 %v447
  %v3496 = vpop.f32.mrf.mxu0
  %v3497 = vadd.f32 %v868, %v3496
  %v3498 = vpop.f32.mrf.mxu0
  %v3499 = vpop.f32.mrf.mxu0
  %v3500 = vadd.f32 %v868, %v3499
  %v3501 = vpop.f32.mrf.mxu0
  %3502 = vmatprep.mubr.bf16.mxu0 %v460
  %3503 = vmatmul.mubr.bf16.gmra.mxu0 %v459
  %v3504 = vpop.f32.mrf.mxu0
  %v3505 = vadd.f32 %v868, %v3504
  %v3506 = vpop.f32.mrf.mxu0
  %v3507 = vpop.f32.mrf.mxu0
  %v3508 = vpop.f32.mrf.mxu0
  %3509 = vdwg.mxu0
  %3510 = vmatprep.subr.bf16.mxu0 0
  %3511 = vmatpush1.bf16.msra.mxu0 %v1903
  %3512 = vmatprep.subr.bf16.mxu0 0
  %3513 = vmatpush1.bf16.msra.mxu0 %v1900
  %3514 = vmatprep.subr.bf16.mxu0 0
  %3515 = vmatpush1.bf16.msra.mxu0 %v1897
  %3516 = vmatprep.subr.bf16.mxu0 0
  %3517 = vmatpush1.bf16.msra.mxu0 %v1894
  %3518 = vmatprep.subr.bf16.mxu0 0
  %3519 = vmatpush1.bf16.msra.mxu0 %v1891
  %3520 = vmatprep.subr.bf16.mxu0 0
  %3521 = vmatpush1.bf16.msra.mxu0 %v1888
  %3522 = vmatprep.subr.bf16.mxu0 0
  %3523 = vmatpush1.bf16.msra.mxu0 %v1885
  %3524 = vmatprep.subr.bf16.mxu0 0
  %3525 = vmatpush1.bf16.msra.mxu0 %v1882
  %3526 = vmatprep.subr.bf16.mxu0 0
  %3527 = vmatpush2.bf16.msra.mxu0 %v1927
  %3528 = vmatprep.subr.bf16.mxu0 0
  %3529 = vmatpush2.bf16.msra.mxu0 %v1924
  %3530 = vmatprep.subr.bf16.mxu0 0
  %3531 = vmatpush2.bf16.msra.mxu0 %v1921
  %3532 = vmatprep.subr.bf16.mxu0 0
  %3533 = vmatpush2.bf16.msra.mxu0 %v1918
  %3534 = vmatprep.subr.bf16.mxu0 0
  %3535 = vmatpush2.bf16.msra.mxu0 %v1915
  %3536 = vmatprep.subr.bf16.mxu0 0
  %3537 = vmatpush2.bf16.msra.mxu0 %v1912
  %3538 = vmatprep.subr.bf16.mxu0 0
  %3539 = vmatpush2.bf16.msra.mxu0 %v1909
  %3540 = vmatprep.subr.bf16.mxu0 0
  %3541 = vmatpush2.bf16.msra.mxu0 %v1906
  %3542 = vmatprep.mubr.bf16.mxu0 %v318
  %3543 = vmatmul.mubr.bf16.gmra.mxu0 %v317
  %v3544 = vpop.f32.mrf.mxu0
  %v3545 = vadd.f32 %v3409, %v3544
  %v3546 = vpop.f32.mrf.mxu0
  %v3547 = vpop.f32.mrf.mxu0
  %v3548 = vadd.f32 %v3412, %v3547
  %v3549 = vpop.f32.mrf.mxu0
  %3550 = vmatprep.mubr.bf16.mxu0 %v330
  %3551 = vmatmul.mubr.bf16.gmra.mxu0 %v329
  %v3552 = vpop.f32.mrf.mxu0
  %v3553 = vadd.f32 %v3417, %v3552
  %v3554 = vpop.f32.mrf.mxu0
  %v3555 = vpop.f32.mrf.mxu0
  %v3556 = vadd.f32 %v3420, %v3555
  %v3557 = vpop.f32.mrf.mxu0
  %3558 = vmatprep.mubr.bf16.mxu0 %v342
  %3559 = vmatmul.mubr.bf16.gmra.mxu0 %v341
  %v3560 = vpop.f32.mrf.mxu0
  %v3561 = vadd.f32 %v3425, %v3560
  %v3562 = vpop.f32.mrf.mxu0
  %v3563 = vpop.f32.mrf.mxu0
  %v3564 = vadd.f32 %v3428, %v3563
  %v3565 = vpop.f32.mrf.mxu0
  %3566 = vmatprep.mubr.bf16.mxu0 %v354
  %3567 = vmatmul.mubr.bf16.gmra.mxu0 %v353
  %v3568 = vpop.f32.mrf.mxu0
  %v3569 = vadd.f32 %v3433, %v3568
  %v3570 = vpop.f32.mrf.mxu0
  %v3571 = vpop.f32.mrf.mxu0
  %v3572 = vadd.f32 %v3436, %v3571
  %v3573 = vpop.f32.mrf.mxu0
  %3574 = vmatprep.mubr.bf16.mxu0 %v366
  %3575 = vmatmul.mubr.bf16.gmra.mxu0 %v365
  %v3576 = vpop.f32.mrf.mxu0
  %v3577 = vadd.f32 %v3441, %v3576
  %v3578 = vpop.f32.mrf.mxu0
  %v3579 = vpop.f32.mrf.mxu0
  %v3580 = vadd.f32 %v3444, %v3579
  %v3581 = vpop.f32.mrf.mxu0
  %3582 = vmatprep.mubr.bf16.mxu0 %v378
  %3583 = vmatmul.mubr.bf16.gmra.mxu0 %v377
  %v3584 = vpop.f32.mrf.mxu0
  %v3585 = vadd.f32 %v3449, %v3584
  %v3586 = vpop.f32.mrf.mxu0
  %v3587 = vpop.f32.mrf.mxu0
  %v3588 = vadd.f32 %v3452, %v3587
  %v3589 = vpop.f32.mrf.mxu0
  %3590 = vmatprep.mubr.bf16.mxu0 %v390
  %3591 = vmatmul.mubr.bf16.gmra.mxu0 %v389
  %v3592 = vpop.f32.mrf.mxu0
  %v3593 = vadd.f32 %v3457, %v3592
  %v3594 = vpop.f32.mrf.mxu0
  %v3595 = vpop.f32.mrf.mxu0
  %v3596 = vadd.f32 %v3460, %v3595
  %v3597 = vpop.f32.mrf.mxu0
  %3598 = vmatprep.mubr.bf16.mxu0 %v402
  %3599 = vmatmul.mubr.bf16.gmra.mxu0 %v401
  %v3600 = vpop.f32.mrf.mxu0
  %v3601 = vadd.f32 %v3465, %v3600
  %v3602 = vpop.f32.mrf.mxu0
  %v3603 = vpop.f32.mrf.mxu0
  %v3604 = vadd.f32 %v3468, %v3603
  %v3605 = vpop.f32.mrf.mxu0
  %3606 = vmatprep.mubr.bf16.mxu0 %v414
  %3607 = vmatmul.mubr.bf16.gmra.mxu0 %v413
  %v3608 = vpop.f32.mrf.mxu0
  %v3609 = vadd.f32 %v3473, %v3608
  %v3610 = vpop.f32.mrf.mxu0
  %v3611 = vpop.f32.mrf.mxu0
  %v3612 = vadd.f32 %v3476, %v3611
  %v3613 = vpop.f32.mrf.mxu0
  %3614 = vmatprep.mubr.bf16.mxu0 %v426
  %3615 = vmatmul.mubr.bf16.gmra.mxu0 %v425
  %v3616 = vpop.f32.mrf.mxu0
  %v3617 = vadd.f32 %v3481, %v3616
  %v3618 = vpop.f32.mrf.mxu0
  %v3619 = vpop.f32.mrf.mxu0
  %v3620 = vadd.f32 %v3484, %v3619
  %v3621 = vpop.f32.mrf.mxu0
  %3622 = vmatprep.mubr.bf16.mxu0 %v438
  %3623 = vmatmul.mubr.bf16.gmra.mxu0 %v437
  %v3624 = vpop.f32.mrf.mxu0
  %v3625 = vadd.f32 %v3489, %v3624
  %v3626 = vpop.f32.mrf.mxu0
  %v3627 = vpop.f32.mrf.mxu0
  %v3628 = vadd.f32 %v3492, %v3627
  %v3629 = vpop.f32.mrf.mxu0
  %3630 = vmatprep.mubr.bf16.mxu0 %v450
  %3631 = vmatmul.mubr.bf16.gmra.mxu0 %v449
  %v3632 = vpop.f32.mrf.mxu0
  %v3633 = vadd.f32 %v3497, %v3632
  %v3634 = vpop.f32.mrf.mxu0
  %v3635 = vpop.f32.mrf.mxu0
  %v3636 = vadd.f32 %v3500, %v3635
  %v3637 = vpop.f32.mrf.mxu0
  %3638 = vmatprep.mubr.bf16.mxu0 %v462
  %3639 = vmatmul.mubr.bf16.gmra.mxu0 %v461
  %v3640 = vpop.f32.mrf.mxu0
  %v3641 = vadd.f32 %v3505, %v3640
  %v3642 = vpop.f32.mrf.mxu0
  %v3643 = vpop.f32.mrf.mxu0
  %v3644 = vpop.f32.mrf.mxu0
  %3645 = vdwg.mxu0
  %3646 = vmatprep.subr.bf16.mxu0 0
  %3647 = vmatpush1.bf16.msra.mxu0 %v1951
  %3648 = vmatprep.subr.bf16.mxu0 0
  %3649 = vmatpush1.bf16.msra.mxu0 %v1948
  %3650 = vmatprep.subr.bf16.mxu0 0
  %3651 = vmatpush1.bf16.msra.mxu0 %v1945
  %3652 = vmatprep.subr.bf16.mxu0 0
  %3653 = vmatpush1.bf16.msra.mxu0 %v1942
  %3654 = vmatprep.subr.bf16.mxu0 0
  %3655 = vmatpush1.bf16.msra.mxu0 %v1939
  %3656 = vmatprep.subr.bf16.mxu0 0
  %3657 = vmatpush1.bf16.msra.mxu0 %v1936
  %3658 = vmatprep.subr.bf16.mxu0 0
  %3659 = vmatpush1.bf16.msra.mxu0 %v1933
  %3660 = vmatprep.subr.bf16.mxu0 0
  %3661 = vmatpush1.bf16.msra.mxu0 %v1930
  %3662 = vmatprep.subr.bf16.mxu0 0
  %3663 = vmatpush2.bf16.msra.mxu0 %v1975
  %3664 = vmatprep.subr.bf16.mxu0 0
  %3665 = vmatpush2.bf16.msra.mxu0 %v1972
  %3666 = vmatprep.subr.bf16.mxu0 0
  %3667 = vmatpush2.bf16.msra.mxu0 %v1969
  %3668 = vmatprep.subr.bf16.mxu0 0
  %3669 = vmatpush2.bf16.msra.mxu0 %v1966
  %3670 = vmatprep.subr.bf16.mxu0 0
  %3671 = vmatpush2.bf16.msra.mxu0 %v1963
  %3672 = vmatprep.subr.bf16.mxu0 0
  %3673 = vmatpush2.bf16.msra.mxu0 %v1960
  %3674 = vmatprep.subr.bf16.mxu0 0
  %3675 = vmatpush2.bf16.msra.mxu0 %v1957
  %3676 = vmatprep.subr.bf16.mxu0 0
  %3677 = vmatpush2.bf16.msra.mxu0 %v1954
  %3678 = vmatprep.mubr.bf16.mxu0 %v320
  %3679 = vmatmul.mubr.bf16.gmra.mxu0 %v319
  %v3680 = vpop.f32.mrf.mxu0
  %v3681 = vadd.f32 %v3545, %v3680
  %v3682 = vpop.f32.mrf.mxu0
  %v3683 = vpop.f32.mrf.mxu0
  %v3684 = vadd.f32 %v3548, %v3683
  %v3685 = vpop.f32.mrf.mxu0
  %3686 = vmatprep.mubr.bf16.mxu0 %v332
  %3687 = vmatmul.mubr.bf16.gmra.mxu0 %v331
  %v3688 = vpop.f32.mrf.mxu0
  %v3689 = vadd.f32 %v3553, %v3688
  %v3690 = vpop.f32.mrf.mxu0
  %v3691 = vpop.f32.mrf.mxu0
  %v3692 = vadd.f32 %v3556, %v3691
  %v3693 = vpop.f32.mrf.mxu0
  %3694 = vmatprep.mubr.bf16.mxu0 %v344
  %3695 = vmatmul.mubr.bf16.gmra.mxu0 %v343
  %v3696 = vpop.f32.mrf.mxu0
  %v3697 = vadd.f32 %v3561, %v3696
  %v3698 = vpop.f32.mrf.mxu0
  %v3699 = vpop.f32.mrf.mxu0
  %v3700 = vadd.f32 %v3564, %v3699
  %v3701 = vpop.f32.mrf.mxu0
  %3702 = vmatprep.mubr.bf16.mxu0 %v356
  %3703 = vmatmul.mubr.bf16.gmra.mxu0 %v355
  %v3704 = vpop.f32.mrf.mxu0
  %v3705 = vadd.f32 %v3569, %v3704
  %v3706 = vpop.f32.mrf.mxu0
  %v3707 = vpop.f32.mrf.mxu0
  %v3708 = vadd.f32 %v3572, %v3707
  %v3709 = vpop.f32.mrf.mxu0
  %3710 = vmatprep.mubr.bf16.mxu0 %v368
  %3711 = vmatmul.mubr.bf16.gmra.mxu0 %v367
  %v3712 = vpop.f32.mrf.mxu0
  %v3713 = vadd.f32 %v3577, %v3712
  %v3714 = vpop.f32.mrf.mxu0
  %v3715 = vpop.f32.mrf.mxu0
  %v3716 = vadd.f32 %v3580, %v3715
  %v3717 = vpop.f32.mrf.mxu0
  %3718 = vmatprep.mubr.bf16.mxu0 %v380
  %3719 = vmatmul.mubr.bf16.gmra.mxu0 %v379
  %v3720 = vpop.f32.mrf.mxu0
  %v3721 = vadd.f32 %v3585, %v3720
  %v3722 = vpop.f32.mrf.mxu0
  %v3723 = vpop.f32.mrf.mxu0
  %v3724 = vadd.f32 %v3588, %v3723
  %v3725 = vpop.f32.mrf.mxu0
  %3726 = vmatprep.mubr.bf16.mxu0 %v392
  %3727 = vmatmul.mubr.bf16.gmra.mxu0 %v391
  %v3728 = vpop.f32.mrf.mxu0
  %v3729 = vadd.f32 %v3593, %v3728
  %v3730 = vpop.f32.mrf.mxu0
  %v3731 = vpop.f32.mrf.mxu0
  %v3732 = vadd.f32 %v3596, %v3731
  %v3733 = vpop.f32.mrf.mxu0
  %3734 = vmatprep.mubr.bf16.mxu0 %v404
  %3735 = vmatmul.mubr.bf16.gmra.mxu0 %v403
  %v3736 = vpop.f32.mrf.mxu0
  %v3737 = vadd.f32 %v3601, %v3736
  %v3738 = vpop.f32.mrf.mxu0
  %v3739 = vpop.f32.mrf.mxu0
  %v3740 = vadd.f32 %v3604, %v3739
  %v3741 = vpop.f32.mrf.mxu0
  %3742 = vmatprep.mubr.bf16.mxu0 %v416
  %3743 = vmatmul.mubr.bf16.gmra.mxu0 %v415
  %v3744 = vpop.f32.mrf.mxu0
  %v3745 = vadd.f32 %v3609, %v3744
  %v3746 = vpop.f32.mrf.mxu0
  %v3747 = vpop.f32.mrf.mxu0
  %v3748 = vadd.f32 %v3612, %v3747
  %v3749 = vpop.f32.mrf.mxu0
  %3750 = vmatprep.mubr.bf16.mxu0 %v428
  %3751 = vmatmul.mubr.bf16.gmra.mxu0 %v427
  %v3752 = vpop.f32.mrf.mxu0
  %v3753 = vadd.f32 %v3617, %v3752
  %v3754 = vpop.f32.mrf.mxu0
  %v3755 = vpop.f32.mrf.mxu0
  %v3756 = vadd.f32 %v3620, %v3755
  %v3757 = vpop.f32.mrf.mxu0
  %3758 = vmatprep.mubr.bf16.mxu0 %v440
  %3759 = vmatmul.mubr.bf16.gmra.mxu0 %v439
  %v3760 = vpop.f32.mrf.mxu0
  %v3761 = vadd.f32 %v3625, %v3760
  %v3762 = vpop.f32.mrf.mxu0
  %v3763 = vpop.f32.mrf.mxu0
  %v3764 = vadd.f32 %v3628, %v3763
  %v3765 = vpop.f32.mrf.mxu0
  %3766 = vmatprep.mubr.bf16.mxu0 %v452
  %3767 = vmatmul.mubr.bf16.gmra.mxu0 %v451
  %v3768 = vpop.f32.mrf.mxu0
  %v3769 = vadd.f32 %v3633, %v3768
  %v3770 = vpop.f32.mrf.mxu0
  %v3771 = vpop.f32.mrf.mxu0
  %v3772 = vadd.f32 %v3636, %v3771
  %v3773 = vpop.f32.mrf.mxu0
  %3774 = vmatprep.mubr.bf16.mxu0 %v464
  %3775 = vmatmul.mubr.bf16.gmra.mxu0 %v463
  %v3776 = vpop.f32.mrf.mxu0
  %v3777 = vadd.f32 %v3641, %v3776
  %v3778 = vpop.f32.mrf.mxu0
  %v3779 = vpop.f32.mrf.mxu0
  %v3780 = vpop.f32.mrf.mxu0
  %3781 = vdwg.mxu0
  %3782 = vmatprep.subr.bf16.mxu0 0
  %3783 = vmatpush1.bf16.msra.mxu0 %v1999
  %3784 = vmatprep.subr.bf16.mxu0 0
  %3785 = vmatpush1.bf16.msra.mxu0 %v1996
  %3786 = vmatprep.subr.bf16.mxu0 0
  %3787 = vmatpush1.bf16.msra.mxu0 %v1993
  %3788 = vmatprep.subr.bf16.mxu0 0
  %3789 = vmatpush1.bf16.msra.mxu0 %v1990
  %3790 = vmatprep.subr.bf16.mxu0 0
  %3791 = vmatpush1.bf16.msra.mxu0 %v1987
  %3792 = vmatprep.subr.bf16.mxu0 0
  %3793 = vmatpush1.bf16.msra.mxu0 %v1984
  %3794 = vmatprep.subr.bf16.mxu0 0
  %3795 = vmatpush1.bf16.msra.mxu0 %v1981
  %3796 = vmatprep.subr.bf16.mxu0 0
  %3797 = vmatpush1.bf16.msra.mxu0 %v1978
  %3798 = vmatprep.subr.bf16.mxu0 0
  %3799 = vmatpush2.bf16.msra.mxu0 %v2023
  %3800 = vmatprep.subr.bf16.mxu0 0
  %3801 = vmatpush2.bf16.msra.mxu0 %v2020
  %3802 = vmatprep.subr.bf16.mxu0 0
  %3803 = vmatpush2.bf16.msra.mxu0 %v2017
  %3804 = vmatprep.subr.bf16.mxu0 0
  %3805 = vmatpush2.bf16.msra.mxu0 %v2014
  %3806 = vmatprep.subr.bf16.mxu0 0
  %3807 = vmatpush2.bf16.msra.mxu0 %v2011
  %3808 = vmatprep.subr.bf16.mxu0 0
  %3809 = vmatpush2.bf16.msra.mxu0 %v2008
  %3810 = vmatprep.subr.bf16.mxu0 0
  %3811 = vmatpush2.bf16.msra.mxu0 %v2005
  %3812 = vmatprep.subr.bf16.mxu0 0
  %3813 = vmatpush2.bf16.msra.mxu0 %v2002
  %3814 = vmatprep.mubr.bf16.mxu0 %v322
  %3815 = vmatmul.mubr.bf16.gmra.mxu0 %v321
  %v3816 = vpop.f32.mrf.mxu0
  %v3817 = vadd.f32 %v3681, %v3816
  %v3818 = vpop.f32.mrf.mxu0
  %v3819 = vpop.f32.mrf.mxu0
  %v3820 = vadd.f32 %v3684, %v3819
  %v3821 = vpop.f32.mrf.mxu0
  %3822 = vmatprep.mubr.bf16.mxu0 %v334
  %3823 = vmatmul.mubr.bf16.gmra.mxu0 %v333
  %v3824 = vpop.f32.mrf.mxu0
  %v3825 = vadd.f32 %v3689, %v3824
  %v3826 = vpop.f32.mrf.mxu0
  %v3827 = vpop.f32.mrf.mxu0
  %v3828 = vadd.f32 %v3692, %v3827
  %v3829 = vpop.f32.mrf.mxu0
  %3830 = vmatprep.mubr.bf16.mxu0 %v346
  %3831 = vmatmul.mubr.bf16.gmra.mxu0 %v345
  %v3832 = vpop.f32.mrf.mxu0
  %v3833 = vadd.f32 %v3697, %v3832
  %v3834 = vpop.f32.mrf.mxu0
  %v3835 = vpop.f32.mrf.mxu0
  %v3836 = vadd.f32 %v3700, %v3835
  %v3837 = vpop.f32.mrf.mxu0
  %3838 = vmatprep.mubr.bf16.mxu0 %v358
  %3839 = vmatmul.mubr.bf16.gmra.mxu0 %v357
  %v3840 = vpop.f32.mrf.mxu0
  %v3841 = vadd.f32 %v3705, %v3840
  %v3842 = vpop.f32.mrf.mxu0
  %v3843 = vpop.f32.mrf.mxu0
  %v3844 = vadd.f32 %v3708, %v3843
  %v3845 = vpop.f32.mrf.mxu0
  %3846 = vmatprep.mubr.bf16.mxu0 %v370
  %3847 = vmatmul.mubr.bf16.gmra.mxu0 %v369
  %v3848 = vpop.f32.mrf.mxu0
  %v3849 = vadd.f32 %v3713, %v3848
  %v3850 = vpop.f32.mrf.mxu0
  %v3851 = vpop.f32.mrf.mxu0
  %v3852 = vadd.f32 %v3716, %v3851
  %v3853 = vpop.f32.mrf.mxu0
  %3854 = vmatprep.mubr.bf16.mxu0 %v382
  %3855 = vmatmul.mubr.bf16.gmra.mxu0 %v381
  %v3856 = vpop.f32.mrf.mxu0
  %v3857 = vadd.f32 %v3721, %v3856
  %v3858 = vpop.f32.mrf.mxu0
  %v3859 = vpop.f32.mrf.mxu0
  %v3860 = vadd.f32 %v3724, %v3859
  %v3861 = vpop.f32.mrf.mxu0
  %3862 = vmatprep.mubr.bf16.mxu0 %v394
  %3863 = vmatmul.mubr.bf16.gmra.mxu0 %v393
  %v3864 = vpop.f32.mrf.mxu0
  %v3865 = vadd.f32 %v3729, %v3864
  %v3866 = vpop.f32.mrf.mxu0
  %v3867 = vpop.f32.mrf.mxu0
  %v3868 = vadd.f32 %v3732, %v3867
  %v3869 = vpop.f32.mrf.mxu0
  %3870 = vmatprep.mubr.bf16.mxu0 %v406
  %3871 = vmatmul.mubr.bf16.gmra.mxu0 %v405
  %v3872 = vpop.f32.mrf.mxu0
  %v3873 = vadd.f32 %v3737, %v3872
  %v3874 = vpop.f32.mrf.mxu0
  %v3875 = vpop.f32.mrf.mxu0
  %v3876 = vadd.f32 %v3740, %v3875
  %v3877 = vpop.f32.mrf.mxu0
  %3878 = vmatprep.mubr.bf16.mxu0 %v418
  %3879 = vmatmul.mubr.bf16.gmra.mxu0 %v417
  %v3880 = vpop.f32.mrf.mxu0
  %v3881 = vadd.f32 %v3745, %v3880
  %v3882 = vpop.f32.mrf.mxu0
  %v3883 = vpop.f32.mrf.mxu0
  %v3884 = vadd.f32 %v3748, %v3883
  %v3885 = vpop.f32.mrf.mxu0
  %3886 = vmatprep.mubr.bf16.mxu0 %v430
  %3887 = vmatmul.mubr.bf16.gmra.mxu0 %v429
  %v3888 = vpop.f32.mrf.mxu0
  %v3889 = vadd.f32 %v3753, %v3888
  %v3890 = vpop.f32.mrf.mxu0
  %v3891 = vpop.f32.mrf.mxu0
  %v3892 = vadd.f32 %v3756, %v3891
  %v3893 = vpop.f32.mrf.mxu0
  %3894 = vmatprep.mubr.bf16.mxu0 %v442
  %3895 = vmatmul.mubr.bf16.gmra.mxu0 %v441
  %v3896 = vpop.f32.mrf.mxu0
  %v3897 = vadd.f32 %v3761, %v3896
  %v3898 = vpop.f32.mrf.mxu0
  %v3899 = vpop.f32.mrf.mxu0
  %v3900 = vadd.f32 %v3764, %v3899
  %v3901 = vpop.f32.mrf.mxu0
  %3902 = vmatprep.mubr.bf16.mxu0 %v454
  %3903 = vmatmul.mubr.bf16.gmra.mxu0 %v453
  %v3904 = vpop.f32.mrf.mxu0
  %v3905 = vadd.f32 %v3769, %v3904
  %v3906 = vpop.f32.mrf.mxu0
  %v3907 = vpop.f32.mrf.mxu0
  %v3908 = vadd.f32 %v3772, %v3907
  %v3909 = vpop.f32.mrf.mxu0
  %3910 = vmatprep.mubr.bf16.mxu0 %v466
  %3911 = vmatmul.mubr.bf16.gmra.mxu0 %v465
  %v3912 = vpop.f32.mrf.mxu0
  %v3913 = vadd.f32 %v3777, %v3912
  %v3914 = vpop.f32.mrf.mxu0
  %v3915 = vpop.f32.mrf.mxu0
  %v3916 = vpop.f32.mrf.mxu0
  %3917 = vdwg.mxu0
  %3918 = vmatprep.subr.bf16.mxu0 0
  %3919 = vmatpush1.bf16.msra.mxu0 %v2047
  %3920 = vmatprep.subr.bf16.mxu0 0
  %3921 = vmatpush1.bf16.msra.mxu0 %v2044
  %3922 = vmatprep.subr.bf16.mxu0 0
  %3923 = vmatpush1.bf16.msra.mxu0 %v2041
  %3924 = vmatprep.subr.bf16.mxu0 0
  %3925 = vmatpush1.bf16.msra.mxu0 %v2038
  %3926 = vmatprep.subr.bf16.mxu0 0
  %3927 = vmatpush1.bf16.msra.mxu0 %v2035
  %3928 = vmatprep.subr.bf16.mxu0 0
  %3929 = vmatpush1.bf16.msra.mxu0 %v2032
  %3930 = vmatprep.subr.bf16.mxu0 0
  %3931 = vmatpush1.bf16.msra.mxu0 %v2029
  %3932 = vmatprep.subr.bf16.mxu0 0
  %3933 = vmatpush1.bf16.msra.mxu0 %v2026
  %3934 = vmatprep.subr.bf16.mxu0 0
  %3935 = vmatpush2.bf16.msra.mxu0 %v2071
  %3936 = vmatprep.subr.bf16.mxu0 0
  %3937 = vmatpush2.bf16.msra.mxu0 %v2068
  %3938 = vmatprep.subr.bf16.mxu0 0
  %3939 = vmatpush2.bf16.msra.mxu0 %v2065
  %3940 = vmatprep.subr.bf16.mxu0 0
  %3941 = vmatpush2.bf16.msra.mxu0 %v2062
  %3942 = vmatprep.subr.bf16.mxu0 0
  %3943 = vmatpush2.bf16.msra.mxu0 %v2059
  %3944 = vmatprep.subr.bf16.mxu0 0
  %3945 = vmatpush2.bf16.msra.mxu0 %v2056
  %3946 = vmatprep.subr.bf16.mxu0 0
  %3947 = vmatpush2.bf16.msra.mxu0 %v2053
  %3948 = vmatprep.subr.bf16.mxu0 0
  %3949 = vmatpush2.bf16.msra.mxu0 %v2050
  %3950 = vmatprep.mubr.bf16.mxu0 %v324
  %3951 = vmatmul.mubr.bf16.gmra.mxu0 %v323
  %v3952 = vpop.f32.mrf.mxu0
  %v3953 = vadd.f32 %v3817, %v3952
  %v3954 = vpop.f32.mrf.mxu0
  %v3955 = vpop.f32.mrf.mxu0
  %v3956 = vadd.f32 %v3820, %v3955
  %v3957 = vpop.f32.mrf.mxu0
  %3958 = vmatprep.mubr.bf16.mxu0 %v336
  %3959 = vmatmul.mubr.bf16.gmra.mxu0 %v335
  %v3960 = vpop.f32.mrf.mxu0
  %v3961 = vadd.f32 %v3825, %v3960
  %v3962 = vpop.f32.mrf.mxu0
  %v3963 = vpop.f32.mrf.mxu0
  %v3964 = vadd.f32 %v3828, %v3963
  %v3965 = vpop.f32.mrf.mxu0
  %3966 = vmatprep.mubr.bf16.mxu0 %v348
  %3967 = vmatmul.mubr.bf16.gmra.mxu0 %v347
  %v3968 = vpop.f32.mrf.mxu0
  %v3969 = vadd.f32 %v3833, %v3968
  %v3970 = vpop.f32.mrf.mxu0
  %v3971 = vpop.f32.mrf.mxu0
  %v3972 = vadd.f32 %v3836, %v3971
  %v3973 = vpop.f32.mrf.mxu0
  %3974 = vmatprep.mubr.bf16.mxu0 %v360
  %3975 = vmatmul.mubr.bf16.gmra.mxu0 %v359
  %v3976 = vpop.f32.mrf.mxu0
  %v3977 = vadd.f32 %v3841, %v3976
  %v3978 = vpop.f32.mrf.mxu0
  %v3979 = vpop.f32.mrf.mxu0
  %v3980 = vadd.f32 %v3844, %v3979
  %v3981 = vpop.f32.mrf.mxu0
  %3982 = vmatprep.mubr.bf16.mxu0 %v372
  %3983 = vmatmul.mubr.bf16.gmra.mxu0 %v371
  %v3984 = vpop.f32.mrf.mxu0
  %v3985 = vadd.f32 %v3849, %v3984
  %v3986 = vpop.f32.mrf.mxu0
  %v3987 = vpop.f32.mrf.mxu0
  %v3988 = vadd.f32 %v3852, %v3987
  %v3989 = vpop.f32.mrf.mxu0
  %3990 = vmatprep.mubr.bf16.mxu0 %v384
  %3991 = vmatmul.mubr.bf16.gmra.mxu0 %v383
  %v3992 = vpop.f32.mrf.mxu0
  %v3993 = vadd.f32 %v3857, %v3992
  %v3994 = vpop.f32.mrf.mxu0
  %v3995 = vpop.f32.mrf.mxu0
  %v3996 = vadd.f32 %v3860, %v3995
  %v3997 = vpop.f32.mrf.mxu0
  %3998 = vmatprep.mubr.bf16.mxu0 %v396
  %3999 = vmatmul.mubr.bf16.gmra.mxu0 %v395
  %v4000 = vpop.f32.mrf.mxu0
  %v4001 = vadd.f32 %v3865, %v4000
  %v4002 = vpop.f32.mrf.mxu0
  %v4003 = vpop.f32.mrf.mxu0
  %v4004 = vadd.f32 %v3868, %v4003
  %v4005 = vpop.f32.mrf.mxu0
  %4006 = vmatprep.mubr.bf16.mxu0 %v408
  %4007 = vmatmul.mubr.bf16.gmra.mxu0 %v407
  %v4008 = vpop.f32.mrf.mxu0
  %v4009 = vadd.f32 %v3873, %v4008
  %v4010 = vpop.f32.mrf.mxu0
  %v4011 = vpop.f32.mrf.mxu0
  %v4012 = vadd.f32 %v3876, %v4011
  %v4013 = vpop.f32.mrf.mxu0
  %4014 = vmatprep.mubr.bf16.mxu0 %v420
  %4015 = vmatmul.mubr.bf16.gmra.mxu0 %v419
  %v4016 = vpop.f32.mrf.mxu0
  %v4017 = vadd.f32 %v3881, %v4016
  %v4018 = vpop.f32.mrf.mxu0
  %v4019 = vpop.f32.mrf.mxu0
  %v4020 = vadd.f32 %v3884, %v4019
  %v4021 = vpop.f32.mrf.mxu0
  %4022 = vmatprep.mubr.bf16.mxu0 %v432
  %4023 = vmatmul.mubr.bf16.gmra.mxu0 %v431
  %v4024 = vpop.f32.mrf.mxu0
  %v4025 = vadd.f32 %v3889, %v4024
  %v4026 = vpop.f32.mrf.mxu0
  %v4027 = vpop.f32.mrf.mxu0
  %v4028 = vadd.f32 %v3892, %v4027
  %v4029 = vpop.f32.mrf.mxu0
  %4030 = vmatprep.mubr.bf16.mxu0 %v444
  %4031 = vmatmul.mubr.bf16.gmra.mxu0 %v443
  %v4032 = vpop.f32.mrf.mxu0
  %v4033 = vadd.f32 %v3897, %v4032
  %v4034 = vpop.f32.mrf.mxu0
  %v4035 = vpop.f32.mrf.mxu0
  %v4036 = vadd.f32 %v3900, %v4035
  %v4037 = vpop.f32.mrf.mxu0
  %4038 = vmatprep.mubr.bf16.mxu0 %v456
  %4039 = vmatmul.mubr.bf16.gmra.mxu0 %v455
  %v4040 = vpop.f32.mrf.mxu0
  %v4041 = vadd.f32 %v3905, %v4040
  %v4042 = vpop.f32.mrf.mxu0
  %v4043 = vpop.f32.mrf.mxu0
  %v4044 = vadd.f32 %v3908, %v4043
  %v4045 = vpop.f32.mrf.mxu0
  %4046 = vmatprep.mubr.bf16.mxu0 %v468
  %4047 = vmatmul.mubr.bf16.gmra.mxu0 %v467
  %v4048 = vpop.f32.mrf.mxu0
  %v4049 = vadd.f32 %v3913, %v4048
  %v4050 = vpop.f32.mrf.mxu0
  %v4051 = vpop.f32.mrf.mxu0
  %v4052 = vpop.f32.mrf.mxu0
  %4053 = vdwg.mxu0
  %4054 = vmatprep.subr.bf16.mxu0 0
  %4055 = vmatpush1.bf16.msra.mxu0 %v2095
  %4056 = vmatprep.subr.bf16.mxu0 0
  %4057 = vmatpush1.bf16.msra.mxu0 %v2092
  %4058 = vmatprep.subr.bf16.mxu0 0
  %4059 = vmatpush1.bf16.msra.mxu0 %v2089
  %4060 = vmatprep.subr.bf16.mxu0 0
  %4061 = vmatpush1.bf16.msra.mxu0 %v2086
  %4062 = vmatprep.subr.bf16.mxu0 0
  %4063 = vmatpush1.bf16.msra.mxu0 %v2083
  %4064 = vmatprep.subr.bf16.mxu0 0
  %4065 = vmatpush1.bf16.msra.mxu0 %v2080
  %4066 = vmatprep.subr.bf16.mxu0 0
  %4067 = vmatpush1.bf16.msra.mxu0 %v2077
  %4068 = vmatprep.subr.bf16.mxu0 0
  %4069 = vmatpush1.bf16.msra.mxu0 %v2074
  %4070 = vmatprep.subr.bf16.mxu0 0
  %4071 = vmatpush2.bf16.msra.mxu0 %v2119
  %4072 = vmatprep.subr.bf16.mxu0 0
  %4073 = vmatpush2.bf16.msra.mxu0 %v2116
  %4074 = vmatprep.subr.bf16.mxu0 0
  %4075 = vmatpush2.bf16.msra.mxu0 %v2113
  %4076 = vmatprep.subr.bf16.mxu0 0
  %4077 = vmatpush2.bf16.msra.mxu0 %v2110
  %4078 = vmatprep.subr.bf16.mxu0 0
  %4079 = vmatpush2.bf16.msra.mxu0 %v2107
  %4080 = vmatprep.subr.bf16.mxu0 0
  %4081 = vmatpush2.bf16.msra.mxu0 %v2104
  %4082 = vmatprep.subr.bf16.mxu0 0
  %4083 = vmatpush2.bf16.msra.mxu0 %v2101
  %4084 = vmatprep.subr.bf16.mxu0 0
  %4085 = vmatpush2.bf16.msra.mxu0 %v2098
  %4086 = vmatprep.mubr.bf16.mxu0 %v326
  %4087 = vmatmul.mubr.bf16.gmra.mxu0 %v325
  %v4088 = vpop.f32.mrf.mxu0
  %v4089 = vadd.f32 %v3953, %v4088
  %v4090 = vpop.f32.mrf.mxu0
  %v4091 = vpop.f32.mrf.mxu0
  %v4092 = vadd.f32 %v3956, %v4091
  %v4093 = vpop.f32.mrf.mxu0
  %4094 = vmatprep.mubr.bf16.mxu0 %v338
  %4095 = vmatmul.mubr.bf16.gmra.mxu0 %v337
  %v4096 = vpop.f32.mrf.mxu0
  %v4097 = vadd.f32 %v3961, %v4096
  %v4098 = vpop.f32.mrf.mxu0
  %v4099 = vpop.f32.mrf.mxu0
  %v4100 = vadd.f32 %v3964, %v4099
  %v4101 = vpop.f32.mrf.mxu0
  %4102 = vmatprep.mubr.bf16.mxu0 %v350
  %4103 = vmatmul.mubr.bf16.gmra.mxu0 %v349
  %v4104 = vpop.f32.mrf.mxu0
  %v4105 = vadd.f32 %v3969, %v4104
  %v4106 = vpop.f32.mrf.mxu0
  %v4107 = vpop.f32.mrf.mxu0
  %v4108 = vadd.f32 %v3972, %v4107
  %v4109 = vpop.f32.mrf.mxu0
  %4110 = vmatprep.mubr.bf16.mxu0 %v362
  %4111 = vmatmul.mubr.bf16.gmra.mxu0 %v361
  %v4112 = vpop.f32.mrf.mxu0
  %v4113 = vadd.f32 %v3977, %v4112
  %v4114 = vpop.f32.mrf.mxu0
  %v4115 = vpop.f32.mrf.mxu0
  %v4116 = vadd.f32 %v3980, %v4115
  %v4117 = vpop.f32.mrf.mxu0
  %4118 = vmatprep.mubr.bf16.mxu0 %v374
  %4119 = vmatmul.mubr.bf16.gmra.mxu0 %v373
  %v4120 = vpop.f32.mrf.mxu0
  %v4121 = vadd.f32 %v3985, %v4120
  %v4122 = vpop.f32.mrf.mxu0
  %v4123 = vpop.f32.mrf.mxu0
  %v4124 = vadd.f32 %v3988, %v4123
  %v4125 = vpop.f32.mrf.mxu0
  %4126 = vmatprep.mubr.bf16.mxu0 %v386
  %4127 = vmatmul.mubr.bf16.gmra.mxu0 %v385
  %v4128 = vpop.f32.mrf.mxu0
  %v4129 = vadd.f32 %v3993, %v4128
  %v4130 = vpop.f32.mrf.mxu0
  %v4131 = vpop.f32.mrf.mxu0
  %v4132 = vadd.f32 %v3996, %v4131
  %v4133 = vpop.f32.mrf.mxu0
  %4134 = vmatprep.mubr.bf16.mxu0 %v398
  %4135 = vmatmul.mubr.bf16.gmra.mxu0 %v397
  %v4136 = vpop.f32.mrf.mxu0
  %v4137 = vadd.f32 %v4001, %v4136
  %v4138 = vpop.f32.mrf.mxu0
  %v4139 = vpop.f32.mrf.mxu0
  %v4140 = vadd.f32 %v4004, %v4139
  %v4141 = vpop.f32.mrf.mxu0
  %4142 = vmatprep.mubr.bf16.mxu0 %v410
  %4143 = vmatmul.mubr.bf16.gmra.mxu0 %v409
  %v4144 = vpop.f32.mrf.mxu0
  %v4145 = vadd.f32 %v4009, %v4144
  %v4146 = vpop.f32.mrf.mxu0
  %v4147 = vpop.f32.mrf.mxu0
  %v4148 = vadd.f32 %v4012, %v4147
  %v4149 = vpop.f32.mrf.mxu0
  %4150 = vmatprep.mubr.bf16.mxu0 %v422
  %4151 = vmatmul.mubr.bf16.gmra.mxu0 %v421
  %v4152 = vpop.f32.mrf.mxu0
  %v4153 = vadd.f32 %v4017, %v4152
  %v4154 = vpop.f32.mrf.mxu0
  %v4155 = vpop.f32.mrf.mxu0
  %v4156 = vadd.f32 %v4020, %v4155
  %v4157 = vpop.f32.mrf.mxu0
  %4158 = vmatprep.mubr.bf16.mxu0 %v434
  %4159 = vmatmul.mubr.bf16.gmra.mxu0 %v433
  %v4160 = vpop.f32.mrf.mxu0
  %v4161 = vadd.f32 %v4025, %v4160
  %v4162 = vpop.f32.mrf.mxu0
  %v4163 = vpop.f32.mrf.mxu0
  %v4164 = vadd.f32 %v4028, %v4163
  %v4165 = vpop.f32.mrf.mxu0
  %4166 = vmatprep.mubr.bf16.mxu0 %v446
  %4167 = vmatmul.mubr.bf16.gmra.mxu0 %v445
  %v4168 = vpop.f32.mrf.mxu0
  %v4169 = vadd.f32 %v4033, %v4168
  %v4170 = vpop.f32.mrf.mxu0
  %v4171 = vpop.f32.mrf.mxu0
  %v4172 = vadd.f32 %v4036, %v4171
  %v4173 = vpop.f32.mrf.mxu0
  %4174 = vmatprep.mubr.bf16.mxu0 %v458
  %4175 = vmatmul.mubr.bf16.gmra.mxu0 %v457
  %v4176 = vpop.f32.mrf.mxu0
  %v4177 = vadd.f32 %v4041, %v4176
  %v4178 = vpop.f32.mrf.mxu0
  %v4179 = vpop.f32.mrf.mxu0
  %v4180 = vadd.f32 %v4044, %v4179
  %v4181 = vpop.f32.mrf.mxu0
  %4182 = vmatprep.mubr.bf16.mxu0 %v470
  %4183 = vmatmul.mubr.bf16.gmra.mxu0 %v469
  %v4184 = vpop.f32.mrf.mxu0
  %v4185 = vadd.f32 %v4049, %v4184
  %v4186 = vpop.f32.mrf.mxu0
  %v4187 = vpop.f32.mrf.mxu0
  %v4188 = vpop.f32.mrf.mxu0
  %4189 = vdwg.mxu0
  %4190 = vst [vmem:[%s3] sm:$0xff] %v3248
  %4191 = vst [vmem:[%s3 + $0x8] sm:$0xff] %v3250
  %4192 = vst [vmem:[%s3 + $0x10] sm:$0xff] %v4089
  %4193 = vst [vmem:[%s3 + $0x18] sm:$0xff] %v3252
  %4194 = vst [vmem:[%s3 + $0x20] sm:$0xff] %v3254
  %4195 = vst [vmem:[%s3 + $0x28] sm:$0xff] %v4092
  %4196 = vst [vmem:[%s3 + $0x30] sm:$0xff] %v3258
  %4197 = vst [vmem:[%s3 + $0x38] sm:$0xff] %v3260
  %4198 = vst [vmem:[%s3 + $0x40] sm:$0xff] %v4097
  %4199 = vst [vmem:[%s3 + $0x48] sm:$0xff] %v3262
  %4200 = vst [vmem:[%s3 + $0x50] sm:$0xff] %v3264
  %4201 = vst [vmem:[%s3 + $0x58] sm:$0xff] %v4100
  %4202 = vst [vmem:[%s3 + $0x60] sm:$0xff] %v3268
  %4203 = vst [vmem:[%s3 + $0x68] sm:$0xff] %v3270
  %4204 = vst [vmem:[%s3 + $0x70] sm:$0xff] %v4105
  %4205 = vst [vmem:[%s3 + $0x78] sm:$0xff] %v3272
  %4206 = vst [vmem:[%s3 + $0x80] sm:$0xff] %v3274
  %4207 = vst [vmem:[%s3 + $0x88] sm:$0xff] %v4108
  %4208 = vst [vmem:[%s3 + $0x90] sm:$0xff] %v3278
  %4209 = vst [vmem:[%s3 + $0x98] sm:$0xff] %v3280
  %4210 = vst [vmem:[%s3 + $0xa0] sm:$0xff] %v4113
  %4211 = vst [vmem:[%s3 + $0xa8] sm:$0xff] %v3282
  %4212 = vst [vmem:[%s3 + $0xb0] sm:$0xff] %v3284
  %4213 = vst [vmem:[%s3 + $0xb8] sm:$0xff] %v4116
  %4214 = vst [vmem:[%s3 + $0xc0] sm:$0xff] %v3288
  %4215 = vst [vmem:[%s3 + $0xc8] sm:$0xff] %v3290
  %4216 = vst [vmem:[%s3 + $0xd0] sm:$0xff] %v4121
  %4217 = vst [vmem:[%s3 + $0xd8] sm:$0xff] %v3292
  %4218 = vst [vmem:[%s3 + $0xe0] sm:$0xff] %v3294
  %4219 = vst [vmem:[%s3 + $0xe8] sm:$0xff] %v4124
  %4220 = vst [vmem:[%s3 + $0xf0] sm:$0xff] %v3298
  %4221 = vst [vmem:[%s3 + $0xf8] sm:$0xff] %v3300
  %4222 = vst [vmem:[%s3 + $0x100] sm:$0xff] %v4129
  %4223 = vst [vmem:[%s3 + $0x108] sm:$0xff] %v3302
  %4224 = vst [vmem:[%s3 + $0x110] sm:$0xff] %v3304
  %4225 = vst [vmem:[%s3 + $0x118] sm:$0xff] %v4132
  %4226 = vst [vmem:[%s3 + $0x120] sm:$0xff] %v3308
  %4227 = vst [vmem:[%s3 + $0x128] sm:$0xff] %v3310
  %4228 = vst [vmem:[%s3 + $0x130] sm:$0xff] %v4137
  %4229 = vst [vmem:[%s3 + $0x138] sm:$0xff] %v3312
  %4230 = vst [vmem:[%s3 + $0x140] sm:$0xff] %v3314
  %4231 = vst [vmem:[%s3 + $0x148] sm:$0xff] %v4140
  %4232 = vst [vmem:[%s3 + $0x150] sm:$0xff] %v3318
  %4233 = vst [vmem:[%s3 + $0x158] sm:$0xff] %v3320
  %4234 = vst [vmem:[%s3 + $0x160] sm:$0xff] %v4145
  %4235 = vst [vmem:[%s3 + $0x168] sm:$0xff] %v3322
  %4236 = vst [vmem:[%s3 + $0x170] sm:$0xff] %v3324
  %4237 = vst [vmem:[%s3 + $0x178] sm:$0xff] %v4148
  %4238 = vst [vmem:[%s3 + $0x180] sm:$0xff] %v3328
  %4239 = vst [vmem:[%s3 + $0x188] sm:$0xff] %v3330
  %4240 = vst [vmem:[%s3 + $0x190] sm:$0xff] %v4153
  %4241 = vst [vmem:[%s3 + $0x198] sm:$0xff] %v3332
  %4242 = vst [vmem:[%s3 + $0x1a0] sm:$0xff] %v3334
  %4243 = vst [vmem:[%s3 + $0x1a8] sm:$0xff] %v4156
  %4244 = vst [vmem:[%s3 + $0x1b0] sm:$0xff] %v3338
  %4245 = vst [vmem:[%s3 + $0x1b8] sm:$0xff] %v3340
  %4246 = vst [vmem:[%s3 + $0x1c0] sm:$0xff] %v4161
  %4247 = vst [vmem:[%s3 + $0x1c8] sm:$0xff] %v3342
  %4248 = vst [vmem:[%s3 + $0x1d0] sm:$0xff] %v3344
  %4249 = vst [vmem:[%s3 + $0x1d8] sm:$0xff] %v4164
  %4250 = vst [vmem:[%s3 + $0x1e0] sm:$0xff] %v3348
  %4251 = vst [vmem:[%s3 + $0x1e8] sm:$0xff] %v3350
  %4252 = vst [vmem:[%s3 + $0x1f0] sm:$0xff] %v4169
  %4253 = vst [vmem:[%s3 + $0x1f8] sm:$0xff] %v3352
  %4254 = vst [vmem:[%s3 + $0x200] sm:$0xff] %v3354
  %4255 = vst [vmem:[%s3 + $0x208] sm:$0xff] %v4172
  %4256 = vst [vmem:[%s3 + $0x210] sm:$0xff] %v3358
  %4257 = vst [vmem:[%s3 + $0x218] sm:$0xff] %v3360
  %4258 = vst [vmem:[%s3 + $0x220] sm:$0xff] %v4177
  %4259 = vst [vmem:[%s3 + $0x228] sm:$0xff] %v3362
  %4260 = vst [vmem:[%s3 + $0x230] sm:$0xff] %v3364
  %4261 = vst [vmem:[%s3 + $0x238] sm:$0xff] %v4180
  %4262 = vst [vmem:[%s3 + $0x240] sm:$0xf] %v3368
  %4263 = vst [vmem:[%s3 + $0x248] sm:$0xf] %v3370
  %4264 = vst [vmem:[%s3 + $0x250] sm:$0xf] %v4185
  // Predicated region
  $region14: #{linear_pallas.1} parent=0 // pred_check
    _
  $region15: #{linear_pallas.1} parent=0 // pred_check_branch
    %4266 = sbr.rel (0) target = $region17
  $region16: #{linear_pallas.1} parent=0 // pred_region
    _
  $region17: #{linear_pallas.1} parent=0 // pred_fallthru
    _
  // Predicated region
  $region18: #{linear_pallas.1} parent=0 // pred_check
    _
  $region19: #{linear_pallas.1} parent=0 // pred_check_branch
    %4268 = sbr.rel (0) target = $region21
  $region20: #{linear_pallas.1} parent=0 // pred_region
    _
  $region21: #{linear_pallas.1} parent=0 // pred_fallthru
    _

</llo_original>
